<compile_context>
chip_gen: v7x
topology: tpu7x:2x2x1
jax: 0.10.0
libtpu: 0.0.40
codegen_flags: <defaults>
</compile_context>

<pallas_src>
import jax
import jax.numpy as jnp
from jax.experimental import pallas as pl
from jax.experimental.pallas import tpu as pltpu

EPS = 1e-5  # nn.BatchNorm2d default eps
# (Cin, Cout, kernel, padding) for the four conv blocks of ColorModel
CONV_SPECS = ((3, 16, 3, 1), (16, 32, 3, 1), (32, 32, 3, 1), (32, 16, 1, 0))

USE_BF16 = True                                   # bf16 MXU inputs, f32 accumulate
COMPUTE_DTYPE = jnp.bfloat16 if USE_BF16 else jnp.float32
MAX_TILE_MP = 512                                 # lane tiles per grid step (multiple of 128)


# ----------------------------- Pallas kernels ------------------------------

def _conv_bn_relu6_pool_kernel(p_ref, w_ref, t_ref, o_ref):
    """Conv3x3 + BN + ReLU6 + MaxPool2x2, fused, pool-first epilogue.

    p_ref : (4, Cin*K*K, TILE)  im2col patches; leading axis = 2x2 pool slot,
                                columns = pooled-pixel raster index (B,Ho,Wo)
    w_ref : (Cout, Cin*K*K)     conv weights with BN scale pre-folded
    t_ref : (Cout, 1)           folded shift  (conv_bias - mean) * scale + beta
    o_ref : (Cout, TILE)        pooled activation
    """
    w = w_ref[...]
    z0 = jnp.dot(w, p_ref[0], preferred_element_type=jnp.float32)
    z1 = jnp.dot(w, p_ref[1], preferred_element_type=jnp.float32)
    z2 = jnp.dot(w, p_ref[2], preferred_element_type=jnp.float32)
    z3 = jnp.dot(w, p_ref[3], preferred_element_type=jnp.float32)
    m = jnp.maximum(jnp.maximum(z0, z1), jnp.maximum(z2, z3))     # MaxPool2x2 first
    o_ref[...] = jnp.clip(m + t_ref[...], 0.0, 6.0).astype(o_ref.dtype)  # shift + ReLU6


def _head_kernel(x_ref, w3_ref, t3_ref, pool_ref, w1_ref, b1_ref,
                 w2_ref, b2_ref, o_ref):
    """conv3(1x1)+BN+ReLU6 + AvgPool2d(8) + Linear(16,32) + Linear(32,5) + LogSoftmax.

    x_ref   : (32, B*64)  conv2 output, channels on sublanes, lane-dense spatial
    w3_ref  : (16, 32)    1x1 conv weight with BN scale pre-folded
    t3_ref  : (16, 1)     folded BN shift
    pool_ref: (B, B*64)   block-diagonal averaging matrix (entries 1/64)
    w1_ref  : (16, 32), b1_ref: (1, 32)
    w2_ref  : (32, 5),  b2_ref: (1, 5)
    o_ref   : (B, 5)      log-probabilities
    """
    y3 = jnp.dot(w3_ref[...], x_ref[...], preferred_element_type=jnp.float32)
    y3 = jnp.clip(y3 + t3_ref[...], 0.0, 6.0)                     # BN + ReLU6, (16, B*64)
    # AvgPool2d(8) folded into a single tiny matmul (no per-batch Python loop).
    feat = jnp.einsum("bn,cn->bc", pool_ref[...], y3,
                      preferred_element_type=jnp.float32)          # (B, 16)
    h1 = jnp.dot(feat, w1_ref[...], preferred_element_type=jnp.float32) + b1_ref[...]
    h2 = jnp.dot(h1, w2_ref[...], preferred_element_type=jnp.float32) + b2_ref[...]
    m = jnp.max(h2, axis=1, keepdims=True)
    lse = jnp.log(jnp.sum(jnp.exp(h2 - m), axis=1, keepdims=True))
    o_ref[...] = (h2 - m - lse).astype(o_ref.dtype)               # LogSoftmax(dim=1)


# --------------------------- pallas_call wrappers ---------------------------

def _pick_tile(mp):
    if mp <= MAX_TILE_MP:
        return mp
    for t in range(MAX_TILE_MP, 0, -128):
        if mp % t == 0:
            return t
    return mp                                      # fall back to a single full block


def conv_bn_relu6_pool(patches, w_scaled, shift):
    _, rows, mp = patches.shape
    cout = w_scaled.shape[0]
    tile = _pick_tile(mp)
    assert mp % tile == 0 and (tile == mp or tile % 128 == 0)
    return pl.pallas_call(
        _conv_bn_relu6_pool_kernel,
        out_shape=jax.ShapeDtypeStruct((cout, mp), COMPUTE_DTYPE),
        grid=(mp // tile,),
        in_specs=[pl.BlockSpec((4, rows, tile), lambda i: (0, 0, i)),
                  pl.BlockSpec((cout, rows), lambda i: (0, 0)),
                  pl.BlockSpec((cout, 1), lambda i: (0, 0))],
        out_specs=pl.BlockSpec((cout, tile), lambda i: (0, i)),
        compiler_params=pltpu.CompilerParams(dimension_semantics=("parallel",)),
    )(patches, w_scaled, shift)


def head(x, w3s, t3, pool_t, w1t, b1, w2t, b2):
    bsz = pool_t.shape[0]
    n_cls = w2t.shape[1]
    args = (x, w3s, t3, pool_t, w1t, b1, w2t, b2)
    in_specs = [pl.BlockSpec(a.shape, lambda i: (0, 0)) for a in args]
    return pl.pallas_call(
        _head_kernel,
        out_shape=jax.ShapeDtypeStruct((bsz, n_cls), jnp.float32),
        grid=(1,),
        in_specs=in_specs,
        out_specs=pl.BlockSpec((bsz, n_cls), lambda i: (0, 0)),
    )(*args)


# ------------------------------ layout glue ---------------------------------

def _build_patches_pooled(act, cin, B, H, W, k, pad):
    """act: (Cin, B*H*W) raster order -> (4, k*k*Cin, Mp) im2col patches with the
    2x2 pool-window slot as the leading axis (so MaxPool is an elementwise max of
    four matmul outputs) and Mp columns in (B, Ho, Wo) raster order."""
    x4 = act.reshape(cin, B, H, W)
    if pad > 0:
        x4 = jnp.pad(x4, ((0, 0), (0, 0), (pad, pad), (pad, pad)))
    taps = [x4[:, :, kh:kh + H, kw:kw + W] for kh in range(k) for kw in range(k)]
    t = jnp.stack(taps, axis=0)                               # (kk, cin, B, H, W)
    t = t.reshape(k * k, cin, B, H // 2, 2, W // 2, 2)        # (kk,cin,B,Ho,dr,Wo,dc)
    t = jnp.transpose(t, (4, 6, 0, 1, 2, 3, 5))               # (dr,dc,kk,cin,B,Ho,Wo)
    return t.reshape(4, k * k * cin, B * (H // 2) * (W // 2)).astype(COMPUTE_DTYPE)


def color_model_forward(x_nchw, p):
    B, _, H, W = x_nchw.shape
    # NCHW -> (C, B*H*W), pixels on lanes
    act = jnp.transpose(x_nchw, (1, 0, 2, 3)).reshape(3, B * H * W)
    h, w = H, W
    for i in range(3):                                        # conv blocks 0..2 (+MaxPool)
        cin, cout, k, pad = CONV_SPECS[i]
        patches = _build_patches_pooled(act, cin, B, h, w, k, pad)
        s = p[f"gamma{i}"] / jnp.sqrt(p[f"var{i}"] + EPS)
        w_scaled = (jnp.transpose(p[f"w{i}"], (0, 2, 3, 1)).reshape(cout, k * k * cin)
                    * s[:, None]).astype(COMPUTE_DTYPE)       # BN scale folded into weights
        shift = ((p[f"b{i}"] - p[f"mean{i}"]) * s + p[f"beta{i}"]).reshape(cout, 1)
        act = conv_bn_relu6_pool(patches, w_scaled, shift)    # (cout, B*Ho*Wo)
        h, w = h // 2, w // 2

    # AvgPool2d(8): keep the (single) top-left 8x8 window (matches nn.AvgPool2d(8)
    # whenever its output is 1x1, i.e. img_size 64..127).  Stays lane-dense (32, B*64).
    c2 = CONV_SPECS[2][1]
    act8 = act.reshape(c2, B, h, w)[:, :, :8, :8].reshape(c2, B * 64)

    cin3, cout3, _, _ = CONV_SPECS[3]
    s3 = p["gamma3"] / jnp.sqrt(p["var3"] + EPS)
    w3s = (p["w3"].reshape(cout3, cin3) * s3[:, None]).astype(COMPUTE_DTYPE)
    t3 = ((p["b3"] - p["mean3"]) * s3 + p["beta3"]).reshape(cout3, 1)
    pool_t = jnp.repeat(jnp.eye(B, dtype=jnp.float32), 64, axis=1) / 64.0   # (B, B*64)
    return head(act8, w3s, t3, pool_t,
                p["fc1_w"].T, p["fc1_b"].reshape(1, -1),
                p["fc2_w"].T, p["fc2_b"].reshape(1, -1))


# ---------------------- deterministic parameter setup -----------------------

def init_params(key):
    keys = iter(jax.random.split(key, 32))
    p = {}
    for i, (cin, cout, k, _) in enumerate(CONV_SPECS):
        p[f"w{i}"] = 0.1 * jax.random.normal(next(keys), (cout, cin, k, k), jnp.float32)
        p[f"b{i}"] = 0.1 * jax.random.normal(next(keys), (cout,), jnp.float32)
        p[f"gamma{i}"] = 1.0 + 0.1 * jax.random.normal(next(keys), (cout,), jnp.float32)
        p[f"beta{i}"] = 0.1 * jax.random.normal(next(keys), (cout,), jnp.float32)
        p[f"mean{i}"] = 0.1 * jax.random.normal(next(keys), (cout,), jnp.float32)
        p[f"var{i}"] = jax.random.uniform(next(keys), (cout,), jnp.float32, 0.5, 1.5)
    p["fc1_w"] = 0.1 * jax.random.normal(next(keys), (32, 16), jnp.float32)
    p["fc1_b"] = 0.1 * jax.random.normal(next(keys), (32,), jnp.float32)
    p["fc2_w"] = 0.1 * jax.random.normal(next(keys), (5, 32), jnp.float32)
    p["fc2_b"] = 0.1 * jax.random.normal(next(keys), (5,), jnp.float32)
    return p


# ------------------------- pure-JAX reference check -------------------------

def reference_forward(x, p):
    hi = jax.lax.Precision.HIGHEST
    y = x
    for i, (_, cout, k, pad) in enumerate(CONV_SPECS):
        y = jax.lax.conv_general_dilated(
            y, p[f"w{i}"], (1, 1), ((pad, pad), (pad, pad)),
            dimension_numbers=("NCHW", "OIHW", "NCHW"), precision=hi)
        y = y + p[f"b{i}"][None, :, None, None]
        y = ((y - p[f"mean{i}"][None, :, None, None])
             / jnp.sqrt(p[f"var{i}"][None, :, None, None] + EPS)
             * p[f"gamma{i}"][None, :, None, None]
             + p[f"beta{i}"][None, :, None, None])
        y = jnp.clip(y, 0.0, 6.0)
        if i < 3:
            Bq, Cq, Hq, Wq = y.shape
            y = y.reshape(Bq, Cq, Hq // 2, 2, Wq // 2, 2).max(axis=(3, 5))
    y = y[:, :, :8, :8].mean(axis=(2, 3))             # AvgPool2d(8) + Flatten
    y = jnp.dot(y, p["fc1_w"].T, precision=hi) + p["fc1_b"]
    y = jnp.dot(y, p["fc2_w"].T, precision=hi) + p["fc2_b"]
    return jax.nn.log_softmax(y, axis=1)


# ---------------------------------- main -------------------------------------

if __name__ == "__main__":
    key = jax.random.PRNGKey(0)
    kp, kx = jax.random.split(key)
    params = init_params(kp)

    B, IMG = 2, 64                       # smallest img size consistent with AvgPool2d(8)
    x = jax.random.normal(kx, (B, 3, IMG, IMG), jnp.float32)

    fwd = jax.jit(color_model_forward)
    out = jax.block_until_ready(fwd(x, params))       # (B, 5) log-probabilities

    ref = reference_forward(x, params)
    max_err = float(jnp.max(jnp.abs(out - ref)))
    # bf16 MXU inputs quantize activations/weights at ~2^-9 relative per layer; the
    # all-f32 build (USE_BF16=False) of the same kernels holds 5e-4.
    tol = 2e-2 if USE_BF16 else 5e-4
    assert out.shape == (B, 5), out.shape
    assert max_err < tol, f"mismatch vs reference: {max_err}"

    print("KERNEL_OK")
</pallas_src>

<mosaic_0001>
module attributes {stable_mosaic.version = 11 : i64} {
  func.func @_conv_bn_relu6_pool_kernel(%arg0: i32, %arg1: memref<4x27x512xbf16, #tpu.memory_space<vmem>>, %arg2: memref<16x27xbf16, #tpu.memory_space<vmem>>, %arg3: memref<16x1xf32, #tpu.memory_space<vmem>>, %arg4: memref<16x512xbf16, #tpu.memory_space<vmem>>) attributes {dimension_semantics = [#tpu.dimension_semantics<parallel>], iteration_bounds = array<i64: 4>, scalar_prefetch = 0 : i64, scratch_operands = 0 : i64, tpu.core_type = #tpu.core_type<tc>, window_params = [{transform_indices = @transform_0, window_bounds = array<i64: 4, 27, 512>}, {pipeline_mode = #tpu.pipeline_mode<synchronous>, transform_indices = @transform_1, window_bounds = array<i64: 16, 27>}, {pipeline_mode = #tpu.pipeline_mode<synchronous>, transform_indices = @transform_2, window_bounds = array<i64: 16, 1>}, {transform_indices = @transform_3, window_bounds = array<i64: 16, 512>}]} {
    %c0 = arith.constant 0 : index
    %c0_0 = arith.constant 0 : index
    %0 = vector.load %arg2[%c0, %c0_0] : memref<16x27xbf16, #tpu.memory_space<vmem>>, vector<16x27xbf16>
    %c0_1 = arith.constant 0 : index
    %c0_2 = arith.constant 0 : index
    %c0_3 = arith.constant 0 : index
    %1 = vector.load %arg1[%c0_1, %c0_2, %c0_3] : memref<4x27x512xbf16, #tpu.memory_space<vmem>>, vector<1x27x512xbf16>
    %2 = vector.shape_cast %1 : vector<1x27x512xbf16> to vector<27x512xbf16>
    %cst = arith.constant dense<0.000000e+00> : vector<16x512xf32>
    %3 = tpu.matmul %0, %2, %cst {dimension_numbers = #tpu.dot_dimension_numbers<[1], [0], [0], [1], [0, 0, 1, 1], [], []>} : vector<16x27xbf16>, vector<27x512xbf16>, vector<16x512xf32> -> vector<16x512xf32>
    %c1 = arith.constant 1 : index
    %c0_4 = arith.constant 0 : index
    %c0_5 = arith.constant 0 : index
    %4 = vector.load %arg1[%c1, %c0_4, %c0_5] : memref<4x27x512xbf16, #tpu.memory_space<vmem>>, vector<1x27x512xbf16>
    %5 = vector.shape_cast %4 : vector<1x27x512xbf16> to vector<27x512xbf16>
    %cst_6 = arith.constant dense<0.000000e+00> : vector<16x512xf32>
    %6 = tpu.matmul %0, %5, %cst_6 {dimension_numbers = #tpu.dot_dimension_numbers<[1], [0], [0], [1], [0, 0, 1, 1], [], []>} : vector<16x27xbf16>, vector<27x512xbf16>, vector<16x512xf32> -> vector<16x512xf32>
    %c2 = arith.constant 2 : index
    %c0_7 = arith.constant 0 : index
    %c0_8 = arith.constant 0 : index
    %7 = vector.load %arg1[%c2, %c0_7, %c0_8] : memref<4x27x512xbf16, #tpu.memory_space<vmem>>, vector<1x27x512xbf16>
    %8 = vector.shape_cast %7 : vector<1x27x512xbf16> to vector<27x512xbf16>
    %cst_9 = arith.constant dense<0.000000e+00> : vector<16x512xf32>
    %9 = tpu.matmul %0, %8, %cst_9 {dimension_numbers = #tpu.dot_dimension_numbers<[1], [0], [0], [1], [0, 0, 1, 1], [], []>} : vector<16x27xbf16>, vector<27x512xbf16>, vector<16x512xf32> -> vector<16x512xf32>
    %c3 = arith.constant 3 : index
    %c0_10 = arith.constant 0 : index
    %c0_11 = arith.constant 0 : index
    %10 = vector.load %arg1[%c3, %c0_10, %c0_11] : memref<4x27x512xbf16, #tpu.memory_space<vmem>>, vector<1x27x512xbf16>
    %11 = vector.shape_cast %10 : vector<1x27x512xbf16> to vector<27x512xbf16>
    %cst_12 = arith.constant dense<0.000000e+00> : vector<16x512xf32>
    %12 = tpu.matmul %0, %11, %cst_12 {dimension_numbers = #tpu.dot_dimension_numbers<[1], [0], [0], [1], [0, 0, 1, 1], [], []>} : vector<16x27xbf16>, vector<27x512xbf16>, vector<16x512xf32> -> vector<16x512xf32>
    %13 = arith.maximumf %3, %6 : vector<16x512xf32>
    %14 = arith.maximumf %9, %12 : vector<16x512xf32>
    %15 = arith.maximumf %13, %14 : vector<16x512xf32>
    %c0_13 = arith.constant 0 : index
    %c0_14 = arith.constant 0 : index
    %16 = vector.load %arg3[%c0_13, %c0_14] : memref<16x1xf32, #tpu.memory_space<vmem>>, vector<16x1xf32>
    %17 = vector.broadcast %16 : vector<16x1xf32> to vector<16x512xf32>
    %18 = arith.addf %15, %17 : vector<16x512xf32>
    %cst_15 = arith.constant 0.000000e+00 : f32
    %cst_16 = arith.constant 6.000000e+00 : f32
    %19 = vector.broadcast %cst_15 : f32 to vector<16x512xf32>
    %20 = arith.maximumf %19, %18 : vector<16x512xf32>
    %21 = vector.broadcast %cst_16 : f32 to vector<16x512xf32>
    %22 = arith.minimumf %21, %20 : vector<16x512xf32>
    %23 = arith.truncf %22 : vector<16x512xf32> to vector<16x512xbf16>
    %c0_17 = arith.constant 0 : index
    %c0_18 = arith.constant 0 : index
    %24 = vector.load %arg4[%c0_17, %c0_18] : memref<16x512xbf16, #tpu.memory_space<vmem>>, vector<16x512xbf16>
    tpu.vector_store %arg4[%c0_17, %c0_18], %23 {strides = array<i32>} : memref<16x512xbf16, #tpu.memory_space<vmem>>, vector<16x512xbf16>,
    return
  }
  func.func @transform_0(%arg0: i32) -> (i32, i32, i32) {
    %c0_i32 = arith.constant 0 : i32
    %c0_i32_0 = arith.constant 0 : i32
    %c0_i32_1 = arith.constant 0 : i32
    return %c0_i32, %c0_i32_0, %arg0 : i32, i32, i32
  }
  func.func @transform_1(%arg0: i32) -> (i32, i32) {
    %c0_i32 = arith.constant 0 : i32
    %c0_i32_0 = arith.constant 0 : i32
    %c0_i32_1 = arith.constant 0 : i32
    return %c0_i32, %c0_i32_0 : i32, i32
  }
  func.func @transform_2(%arg0: i32) -> (i32, i32) {
    %c0_i32 = arith.constant 0 : i32
    %c0_i32_0 = arith.constant 0 : i32
    %c0_i32_1 = arith.constant 0 : i32
    return %c0_i32, %c0_i32_0 : i32, i32
  }
  func.func @transform_3(%arg0: i32) -> (i32, i32) {
    %c0_i32 = arith.constant 0 : i32
    %c0_i32_0 = arith.constant 0 : i32
    return %c0_i32, %arg0 : i32, i32
  }
}

module attributes {stable_mosaic.version = 11 : i64} {
  func.func @_conv_bn_relu6_pool_kernel(%arg0: i32, %arg1: memref<4x144x512xbf16, #tpu.memory_space<vmem>>, %arg2: memref<32x144xbf16, #tpu.memory_space<vmem>>, %arg3: memref<32x1xf32, #tpu.memory_space<vmem>>, %arg4: memref<32x512xbf16, #tpu.memory_space<vmem>>) attributes {dimension_semantics = [#tpu.dimension_semantics<parallel>], iteration_bounds = array<i64: 1>, scalar_prefetch = 0 : i64, scratch_operands = 0 : i64, tpu.core_type = #tpu.core_type<tc>, window_params = [{transform_indices = @transform_0, window_bounds = array<i64: 4, 144, 512>}, {pipeline_mode = #tpu.pipeline_mode<synchronous>, transform_indices = @transform_1, window_bounds = array<i64: 32, 144>}, {pipeline_mode = #tpu.pipeline_mode<synchronous>, transform_indices = @transform_2, window_bounds = array<i64: 32, 1>}, {transform_indices = @transform_3, window_bounds = array<i64: 32, 512>}]} {
    %c0 = arith.constant 0 : index
    %c0_0 = arith.constant 0 : index
    %0 = vector.load %arg2[%c0, %c0_0] : memref<32x144xbf16, #tpu.memory_space<vmem>>, vector<32x144xbf16>
    %c0_1 = arith.constant 0 : index
    %c0_2 = arith.constant 0 : index
    %c0_3 = arith.constant 0 : index
    %1 = vector.load %arg1[%c0_1, %c0_2, %c0_3] : memref<4x144x512xbf16, #tpu.memory_space<vmem>>, vector<1x144x512xbf16>
    %2 = vector.shape_cast %1 : vector<1x144x512xbf16> to vector<144x512xbf16>
    %cst = arith.constant dense<0.000000e+00> : vector<32x512xf32>
    %3 = tpu.matmul %0, %2, %cst {dimension_numbers = #tpu.dot_dimension_numbers<[1], [0], [0], [1], [0, 0, 1, 1], [], []>} : vector<32x144xbf16>, vector<144x512xbf16>, vector<32x512xf32> -> vector<32x512xf32>
    %c1 = arith.constant 1 : index
    %c0_4 = arith.constant 0 : index
    %c0_5 = arith.constant 0 : index
    %4 = vector.load %arg1[%c1, %c0_4, %c0_5] : memref<4x144x512xbf16, #tpu.memory_space<vmem>>, vector<1x144x512xbf16>
    %5 = vector.shape_cast %4 : vector<1x144x512xbf16> to vector<144x512xbf16>
    %cst_6 = arith.constant dense<0.000000e+00> : vector<32x512xf32>
    %6 = tpu.matmul %0, %5, %cst_6 {dimension_numbers = #tpu.dot_dimension_numbers<[1], [0], [0], [1], [0, 0, 1, 1], [], []>} : vector<32x144xbf16>, vector<144x512xbf16>, vector<32x512xf32> -> vector<32x512xf32>
    %c2 = arith.constant 2 : index
    %c0_7 = arith.constant 0 : index
    %c0_8 = arith.constant 0 : index
    %7 = vector.load %arg1[%c2, %c0_7, %c0_8] : memref<4x144x512xbf16, #tpu.memory_space<vmem>>, vector<1x144x512xbf16>
    %8 = vector.shape_cast %7 : vector<1x144x512xbf16> to vector<144x512xbf16>
    %cst_9 = arith.constant dense<0.000000e+00> : vector<32x512xf32>
    %9 = tpu.matmul %0, %8, %cst_9 {dimension_numbers = #tpu.dot_dimension_numbers<[1], [0], [0], [1], [0, 0, 1, 1], [], []>} : vector<32x144xbf16>, vector<144x512xbf16>, vector<32x512xf32> -> vector<32x512xf32>
    %c3 = arith.constant 3 : index
    %c0_10 = arith.constant 0 : index
    %c0_11 = arith.constant 0 : index
    %10 = vector.load %arg1[%c3, %c0_10, %c0_11] : memref<4x144x512xbf16, #tpu.memory_space<vmem>>, vector<1x144x512xbf16>
    %11 = vector.shape_cast %10 : vector<1x144x512xbf16> to vector<144x512xbf16>
    %cst_12 = arith.constant dense<0.000000e+00> : vector<32x512xf32>
    %12 = tpu.matmul %0, %11, %cst_12 {dimension_numbers = #tpu.dot_dimension_numbers<[1], [0], [0], [1], [0, 0, 1, 1], [], []>} : vector<32x144xbf16>, vector<144x512xbf16>, vector<32x512xf32> -> vector<32x512xf32>
    %13 = arith.maximumf %3, %6 : vector<32x512xf32>
    %14 = arith.maximumf %9, %12 : vector<32x512xf32>
    %15 = arith.maximumf %13, %14 : vector<32x512xf32>
    %c0_13 = arith.constant 0 : index
    %c0_14 = arith.constant 0 : index
    %16 = vector.load %arg3[%c0_13, %c0_14] : memref<32x1xf32, #tpu.memory_space<vmem>>, vector<32x1xf32>
    %17 = vector.broadcast %16 : vector<32x1xf32> to vector<32x512xf32>
    %18 = arith.addf %15, %17 : vector<32x512xf32>
    %cst_15 = arith.constant 0.000000e+00 : f32
    %cst_16 = arith.constant 6.000000e+00 : f32
    %19 = vector.broadcast %cst_15 : f32 to vector<32x512xf32>
    %20 = arith.maximumf %19, %18 : vector<32x512xf32>
    %21 = vector.broadcast %cst_16 : f32 to vector<32x512xf32>
    %22 = arith.minimumf %21, %20 : vector<32x512xf32>
    %23 = arith.truncf %22 : vector<32x512xf32> to vector<32x512xbf16>
    %c0_17 = arith.constant 0 : index
    %c0_18 = arith.constant 0 : index
    %24 = vector.load %arg4[%c0_17, %c0_18] : memref<32x512xbf16, #tpu.memory_space<vmem>>, vector<32x512xbf16>
    tpu.vector_store %arg4[%c0_17, %c0_18], %23 {strides = array<i32>} : memref<32x512xbf16, #tpu.memory_space<vmem>>, vector<32x512xbf16>,
    return
  }
  func.func @transform_0(%arg0: i32) -> (i32, i32, i32) {
    %c0_i32 = arith.constant 0 : i32
    %c0_i32_0 = arith.constant 0 : i32
    %c0_i32_1 = arith.constant 0 : i32
    return %c0_i32, %c0_i32_0, %arg0 : i32, i32, i32
  }
  func.func @transform_1(%arg0: i32) -> (i32, i32) {
    %c0_i32 = arith.constant 0 : i32
    %c0_i32_0 = arith.constant 0 : i32
    %c0_i32_1 = arith.constant 0 : i32
    return %c0_i32, %c0_i32_0 : i32, i32
  }
  func.func @transform_2(%arg0: i32) -> (i32, i32) {
    %c0_i32 = arith.constant 0 : i32
    %c0_i32_0 = arith.constant 0 : i32
    %c0_i32_1 = arith.constant 0 : i32
    return %c0_i32, %c0_i32_0 : i32, i32
  }
  func.func @transform_3(%arg0: i32) -> (i32, i32) {
    %c0_i32 = arith.constant 0 : i32
    %c0_i32_0 = arith.constant 0 : i32
    return %c0_i32, %arg0 : i32, i32
  }
}

module attributes {stable_mosaic.version = 11 : i64} {
  func.func @_conv_bn_relu6_pool_kernel(%arg0: i32, %arg1: memref<4x288x128xbf16, #tpu.memory_space<vmem>>, %arg2: memref<32x288xbf16, #tpu.memory_space<vmem>>, %arg3: memref<32x1xf32, #tpu.memory_space<vmem>>, %arg4: memref<32x128xbf16, #tpu.memory_space<vmem>>) attributes {dimension_semantics = [#tpu.dimension_semantics<parallel>], iteration_bounds = array<i64: 1>, scalar_prefetch = 0 : i64, scratch_operands = 0 : i64, tpu.core_type = #tpu.core_type<tc>, window_params = [{transform_indices = @transform_0, window_bounds = array<i64: 4, 288, 128>}, {pipeline_mode = #tpu.pipeline_mode<synchronous>, transform_indices = @transform_1, window_bounds = array<i64: 32, 288>}, {pipeline_mode = #tpu.pipeline_mode<synchronous>, transform_indices = @transform_2, window_bounds = array<i64: 32, 1>}, {transform_indices = @transform_3, window_bounds = array<i64: 32, 128>}]} {
    %c0 = arith.constant 0 : index
    %c0_0 = arith.constant 0 : index
    %0 = vector.load %arg2[%c0, %c0_0] : memref<32x288xbf16, #tpu.memory_space<vmem>>, vector<32x288xbf16>
    %c0_1 = arith.constant 0 : index
    %c0_2 = arith.constant 0 : index
    %c0_3 = arith.constant 0 : index
    %1 = vector.load %arg1[%c0_1, %c0_2, %c0_3] : memref<4x288x128xbf16, #tpu.memory_space<vmem>>, vector<1x288x128xbf16>
    %2 = vector.shape_cast %1 : vector<1x288x128xbf16> to vector<288x128xbf16>
    %cst = arith.constant dense<0.000000e+00> : vector<32x128xf32>
    %3 = tpu.matmul %0, %2, %cst {dimension_numbers = #tpu.dot_dimension_numbers<[1], [0], [0], [1], [0, 0, 1, 1], [], []>} : vector<32x288xbf16>, vector<288x128xbf16>, vector<32x128xf32> -> vector<32x128xf32>
    %c1 = arith.constant 1 : index
    %c0_4 = arith.constant 0 : index
    %c0_5 = arith.constant 0 : index
    %4 = vector.load %arg1[%c1, %c0_4, %c0_5] : memref<4x288x128xbf16, #tpu.memory_space<vmem>>, vector<1x288x128xbf16>
    %5 = vector.shape_cast %4 : vector<1x288x128xbf16> to vector<288x128xbf16>
    %cst_6 = arith.constant dense<0.000000e+00> : vector<32x128xf32>
    %6 = tpu.matmul %0, %5, %cst_6 {dimension_numbers = #tpu.dot_dimension_numbers<[1], [0], [0], [1], [0, 0, 1, 1], [], []>} : vector<32x288xbf16>, vector<288x128xbf16>, vector<32x128xf32> -> vector<32x128xf32>
    %c2 = arith.constant 2 : index
    %c0_7 = arith.constant 0 : index
    %c0_8 = arith.constant 0 : index
    %7 = vector.load %arg1[%c2, %c0_7, %c0_8] : memref<4x288x128xbf16, #tpu.memory_space<vmem>>, vector<1x288x128xbf16>
    %8 = vector.shape_cast %7 : vector<1x288x128xbf16> to vector<288x128xbf16>
    %cst_9 = arith.constant dense<0.000000e+00> : vector<32x128xf32>
    %9 = tpu.matmul %0, %8, %cst_9 {dimension_numbers = #tpu.dot_dimension_numbers<[1], [0], [0], [1], [0, 0, 1, 1], [], []>} : vector<32x288xbf16>, vector<288x128xbf16>, vector<32x128xf32> -> vector<32x128xf32>
    %c3 = arith.constant 3 : index
    %c0_10 = arith.constant 0 : index
    %c0_11 = arith.constant 0 : index
    %10 = vector.load %arg1[%c3, %c0_10, %c0_11] : memref<4x288x128xbf16, #tpu.memory_space<vmem>>, vector<1x288x128xbf16>
    %11 = vector.shape_cast %10 : vector<1x288x128xbf16> to vector<288x128xbf16>
    %cst_12 = arith.constant dense<0.000000e+00> : vector<32x128xf32>
    %12 = tpu.matmul %0, %11, %cst_12 {dimension_numbers = #tpu.dot_dimension_numbers<[1], [0], [0], [1], [0, 0, 1, 1], [], []>} : vector<32x288xbf16>, vector<288x128xbf16>, vector<32x128xf32> -> vector<32x128xf32>
    %13 = arith.maximumf %3, %6 : vector<32x128xf32>
    %14 = arith.maximumf %9, %12 : vector<32x128xf32>
    %15 = arith.maximumf %13, %14 : vector<32x128xf32>
    %c0_13 = arith.constant 0 : index
    %c0_14 = arith.constant 0 : index
    %16 = vector.load %arg3[%c0_13, %c0_14] : memref<32x1xf32, #tpu.memory_space<vmem>>, vector<32x1xf32>
    %17 = vector.broadcast %16 : vector<32x1xf32> to vector<32x128xf32>
    %18 = arith.addf %15, %17 : vector<32x128xf32>
    %cst_15 = arith.constant 0.000000e+00 : f32
    %cst_16 = arith.constant 6.000000e+00 : f32
    %19 = vector.broadcast %cst_15 : f32 to vector<32x128xf32>
    %20 = arith.maximumf %19, %18 : vector<32x128xf32>
    %21 = vector.broadcast %cst_16 : f32 to vector<32x128xf32>
    %22 = arith.minimumf %21, %20 : vector<32x128xf32>
    %23 = arith.truncf %22 : vector<32x128xf32> to vector<32x128xbf16>
    %c0_17 = arith.constant 0 : index
    %c0_18 = arith.constant 0 : index
    %24 = vector.load %arg4[%c0_17, %c0_18] : memref<32x128xbf16, #tpu.memory_space<vmem>>, vector<32x128xbf16>
    tpu.vector_store %arg4[%c0_17, %c0_18], %23 {strides = array<i32>} : memref<32x128xbf16, #tpu.memory_space<vmem>>, vector<32x128xbf16>,
    return
  }
  func.func @transform_0(%arg0: i32) -> (i32, i32, i32) {
    %c0_i32 = arith.constant 0 : i32
    %c0_i32_0 = arith.constant 0 : i32
    %c0_i32_1 = arith.constant 0 : i32
    return %c0_i32, %c0_i32_0, %arg0 : i32, i32, i32
  }
  func.func @transform_1(%arg0: i32) -> (i32, i32) {
    %c0_i32 = arith.constant 0 : i32
    %c0_i32_0 = arith.constant 0 : i32
    %c0_i32_1 = arith.constant 0 : i32
    return %c0_i32, %c0_i32_0 : i32, i32
  }
  func.func @transform_2(%arg0: i32) -> (i32, i32) {
    %c0_i32 = arith.constant 0 : i32
    %c0_i32_0 = arith.constant 0 : i32
    %c0_i32_1 = arith.constant 0 : i32
    return %c0_i32, %c0_i32_0 : i32, i32
  }
  func.func @transform_3(%arg0: i32) -> (i32, i32) {
    %c0_i32 = arith.constant 0 : i32
    %c0_i32_0 = arith.constant 0 : i32
    return %c0_i32, %arg0 : i32, i32
  }
}

module attributes {stable_mosaic.version = 11 : i64} {
  func.func @_head_kernel(%arg0: i32, %arg1: memref<32x128xbf16, #tpu.memory_space<vmem>>, %arg2: memref<16x32xbf16, #tpu.memory_space<vmem>>, %arg3: memref<16x1xf32, #tpu.memory_space<vmem>>, %arg4: memref<2x128xf32, #tpu.memory_space<vmem>>, %arg5: memref<16x32xf32, #tpu.memory_space<vmem>>, %arg6: memref<1x32xf32, #tpu.memory_space<vmem>>, %arg7: memref<32x5xf32, #tpu.memory_space<vmem>>, %arg8: memref<1x5xf32, #tpu.memory_space<vmem>>, %arg9: memref<2x5xf32, #tpu.memory_space<vmem>>) attributes {dimension_semantics = [#tpu.dimension_semantics<arbitrary>], iteration_bounds = array<i64: 1>, scalar_prefetch = 0 : i64, scratch_operands = 0 : i64, tpu.core_type = #tpu.core_type<tc>, window_params = [{pipeline_mode = #tpu.pipeline_mode<synchronous>, transform_indices = @transform_0, window_bounds = array<i64: 32, 128>}, {pipeline_mode = #tpu.pipeline_mode<synchronous>, transform_indices = @transform_1, window_bounds = array<i64: 16, 32>}, {pipeline_mode = #tpu.pipeline_mode<synchronous>, transform_indices = @transform_2, window_bounds = array<i64: 16, 1>}, {pipeline_mode = #tpu.pipeline_mode<synchronous>, transform_indices = @transform_3, window_bounds = array<i64: 2, 128>}, {pipeline_mode = #tpu.pipeline_mode<synchronous>, transform_indices = @transform_4, window_bounds = array<i64: 16, 32>}, {pipeline_mode = #tpu.pipeline_mode<synchronous>, transform_indices = @transform_5, window_bounds = array<i64: 1, 32>}, {pipeline_mode = #tpu.pipeline_mode<synchronous>, transform_indices = @transform_6, window_bounds = array<i64: 32, 5>}, {pipeline_mode = #tpu.pipeline_mode<synchronous>, transform_indices = @transform_7, window_bounds = array<i64: 1, 5>}, {pipeline_mode = #tpu.pipeline_mode<synchronous>, transform_indices = @transform_8, window_bounds = array<i64: 2, 5>}]} {
    %c0 = arith.constant 0 : index
    %c0_0 = arith.constant 0 : index
    %0 = vector.load %arg2[%c0, %c0_0] : memref<16x32xbf16, #tpu.memory_space<vmem>>, vector<16x32xbf16>
    %c0_1 = arith.constant 0 : index
    %c0_2 = arith.constant 0 : index
    %1 = vector.load %arg1[%c0_1, %c0_2] : memref<32x128xbf16, #tpu.memory_space<vmem>>, vector<32x128xbf16>
    %cst = arith.constant dense<0.000000e+00> : vector<16x128xf32>
    %2 = tpu.matmul %0, %1, %cst {dimension_numbers = #tpu.dot_dimension_numbers<[1], [0], [0], [1], [0, 0, 1, 1], [], []>} : vector<16x32xbf16>, vector<32x128xbf16>, vector<16x128xf32> -> vector<16x128xf32>
    %c0_3 = arith.constant 0 : index
    %c0_4 = arith.constant 0 : index
    %3 = vector.load %arg3[%c0_3, %c0_4] : memref<16x1xf32, #tpu.memory_space<vmem>>, vector<16x1xf32>
    %4 = vector.broadcast %3 : vector<16x1xf32> to vector<16x128xf32>
    %5 = arith.addf %2, %4 : vector<16x128xf32>
    %cst_5 = arith.constant 0.000000e+00 : f32
    %cst_6 = arith.constant 6.000000e+00 : f32
    %6 = vector.broadcast %cst_5 : f32 to vector<16x128xf32>
    %7 = arith.maximumf %6, %5 : vector<16x128xf32>
    %8 = vector.broadcast %cst_6 : f32 to vector<16x128xf32>
    %9 = arith.minimumf %8, %7 : vector<16x128xf32>
    %c0_7 = arith.constant 0 : index
    %c0_8 = arith.constant 0 : index
    %10 = vector.load %arg4[%c0_7, %c0_8] : memref<2x128xf32, #tpu.memory_space<vmem>>, vector<2x128xf32>
    "tpu.trace_start"() <{level = 10 : i32, message = "bn,cn->bc"}> : () -> ()
    %cst_9 = arith.constant dense<0.000000e+00> : vector<2x16xf32>
    %11 = tpu.matmul %10, %9, %cst_9 {dimension_numbers = #tpu.dot_dimension_numbers<[1], [1], [0], [0], [0, 0, 1, 0], [], []>} : vector<2x128xf32>, vector<16x128xf32>, vector<2x16xf32> -> vector<2x16xf32>
    "tpu.trace_stop"() : () -> ()
    %c0_10 = arith.constant 0 : index
    %c0_11 = arith.constant 0 : index
    %12 = vector.load %arg5[%c0_10, %c0_11] : memref<16x32xf32, #tpu.memory_space<vmem>>, vector<16x32xf32>
    %cst_12 = arith.constant dense<0.000000e+00> : vector<2x32xf32>
    %13 = tpu.matmul %11, %12, %cst_12 {dimension_numbers = #tpu.dot_dimension_numbers<[1], [0], [0], [1], [0, 0, 1, 1], [], []>} : vector<2x16xf32>, vector<16x32xf32>, vector<2x32xf32> -> vector<2x32xf32>
    %c0_13 = arith.constant 0 : index
    %c0_14 = arith.constant 0 : index
    %14 = vector.load %arg6[%c0_13, %c0_14] : memref<1x32xf32, #tpu.memory_space<vmem>>, vector<1x32xf32>
    %15 = vector.broadcast %14 : vector<1x32xf32> to vector<2x32xf32>
    %16 = arith.addf %13, %15 : vector<2x32xf32>
    %c0_15 = arith.constant 0 : index
    %c0_16 = arith.constant 0 : index
    %17 = vector.load %arg7[%c0_15, %c0_16] : memref<32x5xf32, #tpu.memory_space<vmem>>, vector<32x5xf32>
    %cst_17 = arith.constant dense<0.000000e+00> : vector<2x5xf32>
    %18 = tpu.matmul %16, %17, %cst_17 {dimension_numbers = #tpu.dot_dimension_numbers<[1], [0], [0], [1], [0, 0, 1, 1], [], []>} : vector<2x32xf32>, vector<32x5xf32>, vector<2x5xf32> -> vector<2x5xf32>
    %c0_18 = arith.constant 0 : index
    %c0_19 = arith.constant 0 : index
    %19 = vector.load %arg8[%c0_18, %c0_19] : memref<1x5xf32, #tpu.memory_space<vmem>>, vector<1x5xf32>
    %20 = vector.broadcast %19 : vector<1x5xf32> to vector<2x5xf32>
    %21 = arith.addf %18, %20 : vector<2x5xf32>
    %cst_20 = arith.constant dense<0xFF800000> : vector<2xf32>
    %22 = vector.multi_reduction <maximumf>, %21, %cst_20 [1] : vector<2x5xf32> to vector<2xf32>
    %23 = vector.shape_cast %22 : vector<2xf32> to vector<2x1xf32>
    %24 = vector.broadcast %23 : vector<2x1xf32> to vector<2x5xf32>
    %25 = arith.subf %21, %24 : vector<2x5xf32>
    %26 = math.exp %25 : vector<2x5xf32>
    %cst_21 = arith.constant dense<0.000000e+00> : vector<2xf32>
    %27 = vector.multi_reduction <add>, %26, %cst_21 [1] : vector<2x5xf32> to vector<2xf32>
    %28 = vector.shape_cast %27 : vector<2xf32> to vector<2x1xf32>
    %29 = math.log %28 : vector<2x1xf32>
    %30 = vector.broadcast %23 : vector<2x1xf32> to vector<2x5xf32>
    %31 = arith.subf %21, %30 : vector<2x5xf32>
    %32 = vector.broadcast %29 : vector<2x1xf32> to vector<2x5xf32>
    %33 = arith.subf %31, %32 : vector<2x5xf32>
    %c0_22 = arith.constant 0 : index
    %c0_23 = arith.constant 0 : index
    %34 = vector.load %arg9[%c0_22, %c0_23] : memref<2x5xf32, #tpu.memory_space<vmem>>, vector<2x5xf32>
    tpu.vector_store %arg9[%c0_22, %c0_23], %33 {strides = array<i32>} : memref<2x5xf32, #tpu.memory_space<vmem>>, vector<2x5xf32>,
    return
  }
  func.func @transform_0(%arg0: i32) -> (i32, i32) {
    %c0_i32 = arith.constant 0 : i32
    %c0_i32_0 = arith.constant 0 : i32
    %c0_i32_1 = arith.constant 0 : i32
    return %c0_i32, %c0_i32_0 : i32, i32
  }
  func.func @transform_1(%arg0: i32) -> (i32, i32) {
    %c0_i32 = arith.constant 0 : i32
    %c0_i32_0 = arith.constant 0 : i32
    %c0_i32_1 = arith.constant 0 : i32
    return %c0_i32, %c0_i32_0 : i32, i32
  }
  func.func @transform_2(%arg0: i32) -> (i32, i32) {
    %c0_i32 = arith.constant 0 : i32
    %c0_i32_0 = arith.constant 0 : i32
    %c0_i32_1 = arith.constant 0 : i32
    return %c0_i32, %c0_i32_0 : i32, i32
  }
  func.func @transform_3(%arg0: i32) -> (i32, i32) {
    %c0_i32 = arith.constant 0 : i32
    %c0_i32_0 = arith.constant 0 : i32
    %c0_i32_1 = arith.constant 0 : i32
    return %c0_i32, %c0_i32_0 : i32, i32
  }
  func.func @transform_4(%arg0: i32) -> (i32, i32) {
    %c0_i32 = arith.constant 0 : i32
    %c0_i32_0 = arith.constant 0 : i32
    %c0_i32_1 = arith.constant 0 : i32
    return %c0_i32, %c0_i32_0 : i32, i32
  }
  func.func @transform_5(%arg0: i32) -> (i32, i32) {
    %c0_i32 = arith.constant 0 : i32
    %c0_i32_0 = arith.constant 0 : i32
    %c0_i32_1 = arith.constant 0 : i32
    return %c0_i32, %c0_i32_0 : i32, i32
  }
  func.func @transform_6(%arg0: i32) -> (i32, i32) {
    %c0_i32 = arith.constant 0 : i32
    %c0_i32_0 = arith.constant 0 : i32
    %c0_i32_1 = arith.constant 0 : i32
    return %c0_i32, %c0_i32_0 : i32, i32
  }
  func.func @transform_7(%arg0: i32) -> (i32, i32) {
    %c0_i32 = arith.constant 0 : i32
    %c0_i32_0 = arith.constant 0 : i32
    %c0_i32_1 = arith.constant 0 : i32
    return %c0_i32, %c0_i32_0 : i32, i32
  }
  func.func @transform_8(%arg0: i32) -> (i32, i32) {
    %c0_i32 = arith.constant 0 : i32
    %c0_i32_0 = arith.constant 0 : i32
    %c0_i32_1 = arith.constant 0 : i32
    return %c0_i32, %c0_i32_0 : i32, i32
  }
}

</mosaic_0001>

<llo_original>
// kernel: color_model_forward.4
$region0: #{color_model_forward.4}
  #allocation0 [shape = 'u32[]', space=smem, size = 0x4, offset = 0x4, fixed_abs, tag = 'smem constant byte address 0x4 - core index']
  #allocation1 [shape = 'u32[144,128]{1,0:T(1,128)}', space=vmem, size = 0x12000, scoped, tag = 'internal scratch']
  %s0 = inlined_call_operand.vmem [shape: bf16[4,27,2048], index: 0, kind: input, shape index: {}]
  %s1 = inlined_call_operand.vmem [shape: bf16[16,27], index: 1, kind: input, shape index: {}]
  %s2 = inlined_call_operand.vmem [shape: f32[16,1], index: 2, kind: input, shape index: {}]
  %s3 = inlined_call_operand.vmem [shape: bf16[16,2048], index: 3, kind: output, shape index: {}]
  %s4 = sld [smem:[#allocation0]]
  $region87: #{color_model_forward.4} parent=0
    _
  %s6 = ssub.s32 1, %s4
  %s7 = scalar_select 0, %s6, %s4
  $region1: #{color_model_forward.4} parent=0
    #allocation2 [shape = 'u8[262144]{0}', space=vmem, size = 0x40000, scoped, tag = 'input window, operand 0']
    #allocation3 [shape = 'u8[32768]{0}', space=vmem, size = 0x8000, scoped, tag = 'output window, operand 0']
    loop: start=0, step=1, limit=6
    $region2: #{color_model_forward.4} parent=1 // loop_pre_header
      _
    $region3: #{color_model_forward.4} parent=1 // loop_header
      %s9 = sphi 0, %s13
      %p10 = scmp.ge.s32.totalorder %s9, 6
      %s19 = sphi 0, %s21
      %s22 = sphi 0, %s19
      %s23 = sphi 0, %s22
      %s39 = sphi 0, %s23
      %s43 = sphi 0, %s43
      %s45 = sphi 0, %s43
      %s46 = sphi 0, %s45
      %s60 = sphi 0, %s46
      %s64 = sphi 0, %s64
      %s66 = sphi 0, %s64
      %s67 = sphi 0, %s66
      %s81 = sphi 0, %s67
      %s87 = sphi 0, %s89
      %s90 = sphi 0, %s87
      %s91 = sphi 0, %s90
      %s107 = sphi 0, %s91
    $region4: #{color_model_forward.4} parent=1 // loop_header_branch
      %12 = sbr.rel (%p10) target = $region8
    $region5: #{color_model_forward.4} parent=1 // loop_body
      %s14 = ssub.s32 %s9, 1
      %s15 = ssub.s32 %s9, 2
      %s16 = sadd.s32 %s9, 1
      %s17 = ssub.s32 %s9, %s16
      %p18 = scmp.eq.s32.totalorder %s17, 0
      %s20 = sadd.s32 %s19, 1
      %s21 = scalar_select %p18, %s19, %s20
      %p24 = pneg %p18
      %p25 = scmp.eq.s32.totalorder %s9, 3
      %p26 = por %p24, %p25
      %p27 = scmp.ne.s32.totalorder %s19, %s22
      %p28 = scmp.eq.s32.totalorder %s9, 0
      %p29 = por %p27, %p28
      %p30 = scmp.ne.s32.totalorder %s19, %s22
      %p31 = scmp.eq.s32.totalorder %s14, 3
      %p32 = por %p30, %p31
      %p33 = scmp.ne.s32.totalorder %s22, %s23
      %p34 = scmp.eq.s32.totalorder %s14, 0
      %p35 = por %p33, %p34
      %p36 = scmp.ne.s32.totalorder %s22, %s23
      %p37 = scmp.eq.s32.totalorder %s15, 3
      %p38 = por %p36, %p37
      %p40 = scmp.ne.s32.totalorder %s23, %s39
      %p41 = scmp.eq.s32.totalorder %s15, 0
      %p42 = por %p40, %p41
      %s44 = sadd.s32 %s43, 1
      %p47 = scmp.eq.s32.totalorder %s9, 3
      %p48 = scmp.ne.s32.totalorder %s43, %s45
      %p49 = scmp.eq.s32.totalorder %s9, 0
      %p50 = por %p48, %p49
      %p51 = scmp.ne.s32.totalorder %s43, %s45
      %p52 = scmp.eq.s32.totalorder %s14, 3
      %p53 = por %p51, %p52
      %p54 = scmp.ne.s32.totalorder %s45, %s46
      %p55 = scmp.eq.s32.totalorder %s14, 0
      %p56 = por %p54, %p55
      %p57 = scmp.ne.s32.totalorder %s45, %s46
      %p58 = scmp.eq.s32.totalorder %s15, 3
      %p59 = por %p57, %p58
      %p61 = scmp.ne.s32.totalorder %s46, %s60
      %p62 = scmp.eq.s32.totalorder %s15, 0
      %p63 = por %p61, %p62
      %s65 = sadd.s32 %s64, 1
      %p68 = scmp.eq.s32.totalorder %s9, 3
      %p69 = scmp.ne.s32.totalorder %s64, %s66
      %p70 = scmp.eq.s32.totalorder %s9, 0
      %p71 = por %p69, %p70
      %p72 = scmp.ne.s32.totalorder %s64, %s66
      %p73 = scmp.eq.s32.totalorder %s14, 3
      %p74 = por %p72, %p73
      %p75 = scmp.ne.s32.totalorder %s66, %s67
      %p76 = scmp.eq.s32.totalorder %s14, 0
      %p77 = por %p75, %p76
      %p78 = scmp.ne.s32.totalorder %s66, %s67
      %p79 = scmp.eq.s32.totalorder %s15, 3
      %p80 = por %p78, %p79
      %p82 = scmp.ne.s32.totalorder %s67, %s81
      %p83 = scmp.eq.s32.totalorder %s15, 0
      %p84 = por %p82, %p83
      %s85 = ssub.s32 %s9, %s16
      %p86 = scmp.eq.s32.totalorder %s85, 0
      %s88 = sadd.s32 %s87, 1
      %s89 = scalar_select %p86, %s87, %s88
      %p92 = pneg %p86
      %p93 = scmp.eq.s32.totalorder %s9, 3
      %p94 = por %p92, %p93
      %p95 = scmp.ne.s32.totalorder %s87, %s90
      %p96 = scmp.eq.s32.totalorder %s9, 0
      %p97 = por %p95, %p96
      %p98 = scmp.ne.s32.totalorder %s87, %s90
      %p99 = scmp.eq.s32.totalorder %s14, 3
      %p100 = por %p98, %p99
      %p101 = scmp.ne.s32.totalorder %s90, %s91
      %p102 = scmp.eq.s32.totalorder %s14, 0
      %p103 = por %p101, %p102
      %p104 = scmp.ne.s32.totalorder %s90, %s91
      %p105 = scmp.eq.s32.totalorder %s15, 3
      %p106 = por %p104, %p105
      %p108 = scmp.ne.s32.totalorder %s91, %s107
      %p109 = scmp.eq.s32.totalorder %s15, 0
      %p110 = por %p108, %p109
      %p111 = scmp.le.s32.totalorder 1, %s9
      %p112 = scmp.lt.s32.totalorder %s9, 5
      %p113 = pnand %p111, %p112
      %p114 = pneg %p113
      // Predicated region
      $region9: #{color_model_forward.4} parent=5 // pred_check
        _
      $region10: #{color_model_forward.4} parent=5 // pred_check_branch
        %116 = sbr.rel (%p113) target = $region12
      $region11: #{color_model_forward.4} parent=5 // pred_region
        %s117 = ssub.s32 %s9, 1
        // Predicated region
        $region13: #{color_model_forward.4} parent=11 // pred_check
          %p118 = pneg %p56
        $region14: #{color_model_forward.4} parent=11 // pred_check_branch
          %120 = sbr.rel (%p118) target = $region16
        $region15: #{color_model_forward.4} parent=11 // pred_region
          _
        $region16: #{color_model_forward.4} parent=11 // pred_fallthru
          _
        // Predicated region
        $region17: #{color_model_forward.4} parent=11 // pred_check
          %p121 = pneg %p77
        $region18: #{color_model_forward.4} parent=11 // pred_check_branch
          %123 = sbr.rel (%p121) target = $region20
        $region19: #{color_model_forward.4} parent=11 // pred_region
          _
        $region20: #{color_model_forward.4} parent=11 // pred_fallthru
          _
      $region12: #{color_model_forward.4} parent=5 // pred_fallthru
        _
      %p124 = scmp.lt.s32.totalorder %s9, 4
      // Predicated region
      $region21: #{color_model_forward.4} parent=5 // pred_check
        %p125 = pneg %p124
      $region22: #{color_model_forward.4} parent=5 // pred_check_branch
        %127 = sbr.rel (%p125) target = $region24
      $region23: #{color_model_forward.4} parent=5 // pred_region
        // Predicated region
        $region25: #{color_model_forward.4} parent=23 // pred_check
          %p128 = pneg %p29
        $region26: #{color_model_forward.4} parent=23 // pred_check_branch
          %130 = sbr.rel (%p128) target = $region28
        $region27: #{color_model_forward.4} parent=23 // pred_region
          %s131 = sand.u32 %s19, 1
          %s132 = sand.u32 %s19, 1
          %s133 = smul.addr %s132, 256
          %s134 = scalar_lea.vmem [#allocation2], %s133
          %s135 = smul.u32 4, %s9
          %s136 = smul.addr %s135, 4
          %s137 = scalar_lea.vmem %s0, %s136
          // Predicated region
          $region29: #{color_model_forward.4} parent=27 // pred_check
            _
          $region30: #{color_model_forward.4} parent=27 // pred_check_branch
            %139 = sbr.rel (0) target = $region32
          $region31: #{color_model_forward.4} parent=27 // pred_region
            // Predicated region
            $region33: #{color_model_forward.4} parent=31 // pred_check
              _
            $region34: #{color_model_forward.4} parent=31 // pred_check_branch
              %141 = sbr.rel (0) target = $region36
            $region35: #{color_model_forward.4} parent=31 // pred_region
              loop: start=0, step=1, limit=1
              $region37: #{color_model_forward.4} parent=35 // loop_pre_header
                _
              $region38: #{color_model_forward.4} parent=35 // loop_header
                %s143 = sphi 0, %s147
                %p144 = scmp.ge.s32.totalorder %s143, 1
                %s148 = sphi %s137, %s137
                %s149 = sphi %s134, %s134
              $region39: #{color_model_forward.4} parent=35 // loop_header_branch
                %146 = sbr.rel (%p144) target = $region43
              $region40: #{color_model_forward.4} parent=35 // loop_body
                %v150 = vld [vmem:[%s148] sm:$0xff]
                %151 = vst [vmem:[%s149] sm:$0xff] %v150
                %v152 = vld [vmem:[%s148 + $0x8] sm:$0xff]
                %153 = vst [vmem:[%s149 + $0x8] sm:$0xff] %v152
                %v154 = vld [vmem:[%s148 + $0x40] sm:$0xff]
                %155 = vst [vmem:[%s149 + $0x10] sm:$0xff] %v154
                %v156 = vld [vmem:[%s148 + $0x48] sm:$0xff]
                %157 = vst [vmem:[%s149 + $0x18] sm:$0xff] %v156
                %v158 = vld [vmem:[%s148 + $0x80] sm:$0xff]
                %159 = vst [vmem:[%s149 + $0x20] sm:$0xff] %v158
                %v160 = vld [vmem:[%s148 + $0x88] sm:$0xff]
                %161 = vst [vmem:[%s149 + $0x28] sm:$0xff] %v160
                %v162 = vld [vmem:[%s148 + $0xc0] sm:$0xff]
                %163 = vst [vmem:[%s149 + $0x30] sm:$0xff] %v162
                %v164 = vld [vmem:[%s148 + $0xc8] sm:$0xff]
                %165 = vst [vmem:[%s149 + $0x38] sm:$0xff] %v164
                %v166 = vld [vmem:[%s148 + $0x100] sm:$0xff]
                %167 = vst [vmem:[%s149 + $0x40] sm:$0xff] %v166
                %v168 = vld [vmem:[%s148 + $0x108] sm:$0xff]
                %169 = vst [vmem:[%s149 + $0x48] sm:$0xff] %v168
                %v170 = vld [vmem:[%s148 + $0x140] sm:$0xff]
                %171 = vst [vmem:[%s149 + $0x50] sm:$0xff] %v170
                %v172 = vld [vmem:[%s148 + $0x148] sm:$0xff]
                %173 = vst [vmem:[%s149 + $0x58] sm:$0xff] %v172
                %v174 = vld [vmem:[%s148 + $0x180] sm:$0xff]
                %175 = vst [vmem:[%s149 + $0x60] sm:$0xff] %v174
                %v176 = vld [vmem:[%s148 + $0x188] sm:$0xff]
                %177 = vst [vmem:[%s149 + $0x68] sm:$0xff] %v176
                %v178 = vld [vmem:[%s148 + $0x1c0] sm:$0xff]
                %179 = vst [vmem:[%s149 + $0x70] sm:$0xff] %v178
                %v180 = vld [vmem:[%s148 + $0x1c8] sm:$0xff]
                %181 = vst [vmem:[%s149 + $0x78] sm:$0xff] %v180
                %v182 = vld [vmem:[%s148 + $0x200] sm:$0xff]
                %183 = vst [vmem:[%s149 + $0x80] sm:$0xff] %v182
                %v184 = vld [vmem:[%s148 + $0x208] sm:$0xff]
                %185 = vst [vmem:[%s149 + $0x88] sm:$0xff] %v184
                %v186 = vld [vmem:[%s148 + $0x240] sm:$0xff]
                %187 = vst [vmem:[%s149 + $0x90] sm:$0xff] %v186
                %v188 = vld [vmem:[%s148 + $0x248] sm:$0xff]
                %189 = vst [vmem:[%s149 + $0x98] sm:$0xff] %v188
                %v190 = vld [vmem:[%s148 + $0x280] sm:$0xff]
                %191 = vst [vmem:[%s149 + $0xa0] sm:$0xff] %v190
                %v192 = vld [vmem:[%s148 + $0x288] sm:$0xff]
                %193 = vst [vmem:[%s149 + $0xa8] sm:$0xff] %v192
                %v194 = vld [vmem:[%s148 + $0x2c0] sm:$0xff]
                %195 = vst [vmem:[%s149 + $0xb0] sm:$0xff] %v194
                %v196 = vld [vmem:[%s148 + $0x2c8] sm:$0xff]
                %197 = vst [vmem:[%s149 + $0xb8] sm:$0xff] %v196
                %v198 = vld [vmem:[%s148 + $0x300] sm:$0xff]
                %199 = vst [vmem:[%s149 + $0xc0] sm:$0xff] %v198
                %v200 = vld [vmem:[%s148 + $0x308] sm:$0xff]
                %201 = vst [vmem:[%s149 + $0xc8] sm:$0xff] %v200
                %v202 = vld [vmem:[%s148 + $0x340] sm:$0xff]
                %203 = vst [vmem:[%s149 + $0xd0] sm:$0xff] %v202
                %v204 = vld [vmem:[%s148 + $0x348] sm:$0xff]
                %205 = vst [vmem:[%s149 + $0xd8] sm:$0xff] %v204
                %v206 = vld [vmem:[%s148 + $0x380] sm:$0xff]
                %207 = vst [vmem:[%s149 + $0xe0] sm:$0xff] %v206
                %v208 = vld [vmem:[%s148 + $0x388] sm:$0xff]
                %209 = vst [vmem:[%s149 + $0xe8] sm:$0xff] %v208
                %v210 = vld [vmem:[%s148 + $0x3c0] sm:$0xff]
                %211 = vst [vmem:[%s149 + $0xf0] sm:$0xff] %v210
                %v212 = vld [vmem:[%s148 + $0x3c8] sm:$0xff]
                %213 = vst [vmem:[%s149 + $0xf8] sm:$0xff] %v212
              $region41: #{color_model_forward.4} parent=35 // loop_footer
                %s147 = sadd.s32 1, %s143
              $region42: #{color_model_forward.4} parent=35 // loop_footer_branch
                %142 = sbr.rel target = $region38
              $region43: #{color_model_forward.4} parent=35 // loop_exit
                _
            $region36: #{color_model_forward.4} parent=31 // pred_fallthru
              _
            // Predicated region
            $region44: #{color_model_forward.4} parent=31 // pred_check
              _
            $region45: #{color_model_forward.4} parent=31 // pred_check_branch
              %215 = sbr.rel target = $region47
            $region46: #{color_model_forward.4} parent=31 // pred_region
              _
            $region47: #{color_model_forward.4} parent=31 // pred_fallthru
              _
          $region32: #{color_model_forward.4} parent=27 // pred_fallthru
            _
          %216 = vnop
        $region28: #{color_model_forward.4} parent=23 // pred_fallthru
          _
      $region24: #{color_model_forward.4} parent=5 // pred_fallthru
        _
      %p217 = scmp.le.s32.totalorder 1, %s9
      %p218 = scmp.lt.s32.totalorder %s9, 5
      %p219 = pnand %p217, %p218
      %p220 = pneg %p219
      // Predicated region
      $region48: #{color_model_forward.4} parent=5 // pred_check
        _
      $region49: #{color_model_forward.4} parent=5 // pred_check_branch
        %222 = sbr.rel (%p219) target = $region51
      $region50: #{color_model_forward.4} parent=5 // pred_region
        %s223 = ssub.s32 %s9, 1
        %s224 = sand.u32 %s22, 1
        %s225 = sand.u32 %s22, 1
        %s226 = smul.addr %s225, 256
        %s227 = scalar_lea.vmem [#allocation2], %s226
        // Predicated region
        $region52: #{color_model_forward.4} parent=50 // pred_check
          %p228 = pneg %p35
        $region53: #{color_model_forward.4} parent=50 // pred_check_branch
          %230 = sbr.rel (%p228) target = $region55
        $region54: #{color_model_forward.4} parent=50 // pred_region
          _
        $region55: #{color_model_forward.4} parent=50 // pred_fallthru
          _
        %s231 = sand.u32 %s22, 1
        %s232 = sand.u32 %s22, 1
        %s233 = smul.addr %s232, 256
        %s234 = scalar_lea.vmem [#allocation2], %s233
        %p235 = pneg %p35
        %p236 = pneg %p32
        %p237 = pneg %p56
        %p238 = pneg %p53
        %p239 = pneg %p77
        %p240 = pneg %p74
        %p241 = pneg %p103
        %p242 = pneg %p100
        %s243 = sand.u32 %s90, 1
        %s244 = sand.u32 %s90, 1
        %s245 = smul.addr %s244, 32
        %s246 = scalar_lea.vmem [#allocation3], %s245
        %s247 = smul.u32 4, %s14
        %s248 = smul.u32 4, %s14
        %v250 = vld [vmem:[%s1] sm:$0xf]
        %v251 = vld [vmem:[%s1 + $0x4] sm:$0xf]
        %v252 = vld [vmem:[%s227] sm:$0xff]
        %v253 = vld [vmem:[%s227 + $0x8] sm:$0xff]
        %v254 = vld [vmem:[%s227 + $0x10] sm:$0xff]
        %v255 = vld [vmem:[%s227 + $0x18] sm:$0xff]
        %v256 = vld [vmem:[%s227 + $0x20] sm:$0xff]
        %v257 = vld [vmem:[%s227 + $0x28] sm:$0xff]
        %v258 = vld [vmem:[%s227 + $0x30] sm:$0x33]
        %v259 = vld [vmem:[%s227 + $0x38] sm:$0x33]
        %v262 = vunpack.c.l.b16 %v250
        %v263 = vunpack.c.l.b16 %v251
        %v264 = vpack.c.b16 %v263, %v262
        %v273 = vunpack.c.l.b16 %v252
        %v274 = vunpack.c.h.b16 %v252
        %v275 = vunpack.c.l.b16 %v253
        %v276 = vunpack.c.h.b16 %v253
        %v277 = vunpack.c.l.b16 %v254
        %v278 = vunpack.c.h.b16 %v254
        %v279 = vunpack.c.l.b16 %v255
        %v280 = vunpack.c.h.b16 %v255
        %v281 = vunpack.c.l.b16 %v256
        %v282 = vunpack.c.h.b16 %v256
        %v283 = vunpack.c.l.b16 %v257
        %v284 = vunpack.c.h.b16 %v257
        %v285 = vunpack.c.l.b16 %v258
        %v286 = vunpack.c.h.b16 %v258
        %v287 = vunpack.c.l.b16 %v259
        %v288 = vunpack.c.h.b16 %v259
        %v289 = vpack.c.b16 %v277, %v273
        %v290 = vpack.c.b16 %v278, %v274
        %v291 = vpack.c.b16 %v279, %v275
        %v292 = vpack.c.b16 %v280, %v276
        %v293 = vpack.c.b16 %v285, %v281
        %v294 = vpack.c.b16 %v286, %v282
        %v295 = vpack.c.b16 %v287, %v283
        %v296 = vpack.c.b16 %v288, %v284
        %vm301 = vcmask 220160
        %v303 = vsel %vm301, %v264, 0
        %vm305 = vcmask 1044480
        %vm306 = vcmask 1045504
        %v307 = vsel %vm305, 4294967295, 65535
        %v308 = vsel %vm306, %v307, 0
        %v310 = vand.u32 %v293, %v308
        %v313 = vand.u32 %v294, %v308
        %v316 = vand.u32 %v295, %v308
        %v319 = vand.u32 %v296, %v308
        %321 = vmatprep.subr.bf16.mxu0 %v290
        %322 = vmatpush1.bf16.msra.mxu0 %v289
        %323 = vmatprep.subr.bf16.mxu0 %v313
        %324 = vmatpush1.bf16.msra.mxu0 %v310
        %325 = vmatprep.subr.bf16.mxu0 0
        %326 = vmatpush1.bf16.msra.mxu0 0
        %327 = vmatprep.subr.bf16.mxu0 0
        %328 = vmatpush1.bf16.msra.mxu0 0
        %329 = vmatprep.subr.bf16.mxu0 0
        %330 = vmatpush1.bf16.msra.mxu0 0
        %331 = vmatprep.subr.bf16.mxu0 0
        %332 = vmatpush1.bf16.msra.mxu0 0
        %333 = vmatprep.subr.bf16.mxu0 0
        %334 = vmatpush1.bf16.msra.mxu0 0
        %335 = vmatprep.subr.bf16.mxu0 0
        %336 = vmatpush1.bf16.msra.mxu0 0
        %337 = vmatprep.subr.bf16.mxu0 0
        %338 = vmatpush1.bf16.msra.mxu0 0
        %339 = vmatprep.subr.bf16.mxu0 0
        %340 = vmatpush1.bf16.msra.mxu0 0
        %341 = vmatprep.subr.bf16.mxu0 0
        %342 = vmatpush1.bf16.msra.mxu0 0
        %343 = vmatprep.subr.bf16.mxu0 0
        %344 = vmatpush1.bf16.msra.mxu0 0
        %345 = vmatprep.subr.bf16.mxu0 0
        %346 = vmatpush1.bf16.msra.mxu0 0
        %347 = vmatprep.subr.bf16.mxu0 0
        %348 = vmatpush1.bf16.msra.mxu0 0
        %349 = vmatprep.subr.bf16.mxu0 0
        %350 = vmatpush1.bf16.msra.mxu0 0
        %351 = vmatprep.subr.bf16.mxu0 0
        %352 = vmatpush1.bf16.msra.mxu0 0
        %353 = vmatprep.mubr.bf16.mxu0 0
        %354 = vmatmul.mubr.bf16.gmra.mrb[0].mxu0 %v303
        %v355 = vpop.f32.mrb[0].mxu0
        %v356 = vadd.f32 0.0, %v355
        %v357 = vpop.f32.mrb[0].mxu0
        %v358 = vadd.f32 0.0, %v357
        %v359 = vpop.f32.mrb[0].mxu0
        %v360 = vadd.f32 0.0, %v359
        %v361 = vpop.f32.mrb[0].mxu0
        %v362 = vadd.f32 0.0, %v361
        %363 = vdwg.mxu0
        %364 = vmatprep.subr.bf16.mxu0 %v292
        %365 = vmatpush1.bf16.msra.mxu0 %v291
        %366 = vmatprep.subr.bf16.mxu0 %v319
        %367 = vmatpush1.bf16.msra.mxu0 %v316
        %368 = vmatprep.subr.bf16.mxu0 0
        %369 = vmatpush1.bf16.msra.mxu0 0
        %370 = vmatprep.subr.bf16.mxu0 0
        %371 = vmatpush1.bf16.msra.mxu0 0
        %372 = vmatprep.subr.bf16.mxu0 0
        %373 = vmatpush1.bf16.msra.mxu0 0
        %374 = vmatprep.subr.bf16.mxu0 0
        %375 = vmatpush1.bf16.msra.mxu0 0
        %376 = vmatprep.subr.bf16.mxu0 0
        %377 = vmatpush1.bf16.msra.mxu0 0
        %378 = vmatprep.subr.bf16.mxu0 0
        %379 = vmatpush1.bf16.msra.mxu0 0
        %380 = vmatprep.subr.bf16.mxu0 0
        %381 = vmatpush1.bf16.msra.mxu0 0
        %382 = vmatprep.subr.bf16.mxu0 0
        %383 = vmatpush1.bf16.msra.mxu0 0
        %384 = vmatprep.subr.bf16.mxu0 0
        %385 = vmatpush1.bf16.msra.mxu0 0
        %386 = vmatprep.subr.bf16.mxu0 0
        %387 = vmatpush1.bf16.msra.mxu0 0
        %388 = vmatprep.subr.bf16.mxu0 0
        %389 = vmatpush1.bf16.msra.mxu0 0
        %390 = vmatprep.subr.bf16.mxu0 0
        %391 = vmatpush1.bf16.msra.mxu0 0
        %392 = vmatprep.subr.bf16.mxu0 0
        %393 = vmatpush1.bf16.msra.mxu0 0
        %394 = vmatprep.subr.bf16.mxu0 0
        %395 = vmatpush1.bf16.msra.mxu0 0
        %396 = vmatprep.mubr.bf16.mxu0 0
        %397 = vmatmul.mubr.bf16.gmra.mrb[0].mxu0 %v303
        %v398 = vpop.f32.mrb[0].mxu0
        %v399 = vadd.f32 0.0, %v398
        %v400 = vpop.f32.mrb[0].mxu0
        %v401 = vadd.f32 0.0, %v400
        %v402 = vpop.f32.mrb[0].mxu0
        %v403 = vadd.f32 0.0, %v402
        %v404 = vpop.f32.mrb[0].mxu0
        %v405 = vadd.f32 0.0, %v404
        %406 = vdwg.mxu0
        %s407 = scalar_lea.vmem %s227, 64 [#allocation2]
        %v408 = vld [vmem:[%s407] sm:$0xff]
        %v409 = vld [vmem:[%s407 + $0x8] sm:$0xff]
        %v410 = vld [vmem:[%s407 + $0x10] sm:$0xff]
        %v411 = vld [vmem:[%s407 + $0x18] sm:$0xff]
        %v412 = vld [vmem:[%s407 + $0x20] sm:$0xff]
        %v413 = vld [vmem:[%s407 + $0x28] sm:$0xff]
        %v414 = vld [vmem:[%s407 + $0x30] sm:$0x33]
        %v415 = vld [vmem:[%s407 + $0x38] sm:$0x33]
        %v424 = vunpack.c.l.b16 %v408
        %v425 = vunpack.c.h.b16 %v408
        %v426 = vunpack.c.l.b16 %v409
        %v427 = vunpack.c.h.b16 %v409
        %v428 = vunpack.c.l.b16 %v410
        %v429 = vunpack.c.h.b16 %v410
        %v430 = vunpack.c.l.b16 %v411
        %v431 = vunpack.c.h.b16 %v411
        %v432 = vunpack.c.l.b16 %v412
        %v433 = vunpack.c.h.b16 %v412
        %v434 = vunpack.c.l.b16 %v413
        %v435 = vunpack.c.h.b16 %v413
        %v436 = vunpack.c.l.b16 %v414
        %v437 = vunpack.c.h.b16 %v414
        %v438 = vunpack.c.l.b16 %v415
        %v439 = vunpack.c.h.b16 %v415
        %v440 = vpack.c.b16 %v428, %v424
        %v441 = vpack.c.b16 %v429, %v425
        %v442 = vpack.c.b16 %v430, %v426
        %v443 = vpack.c.b16 %v431, %v427
        %v444 = vpack.c.b16 %v436, %v432
        %v445 = vpack.c.b16 %v437, %v433
        %v446 = vpack.c.b16 %v438, %v434
        %v447 = vpack.c.b16 %v439, %v435
        %v453 = vand.u32 %v444, %v308
        %v456 = vand.u32 %v445, %v308
        %v459 = vand.u32 %v446, %v308
        %v462 = vand.u32 %v447, %v308
        %464 = vmatprep.subr.bf16.mxu0 %v441
        %465 = vmatpush1.bf16.msra.mxu0 %v440
        %466 = vmatprep.subr.bf16.mxu0 %v456
        %467 = vmatpush1.bf16.msra.mxu0 %v453
        %468 = vmatprep.subr.bf16.mxu0 0
        %469 = vmatpush1.bf16.msra.mxu0 0
        %470 = vmatprep.subr.bf16.mxu0 0
        %471 = vmatpush1.bf16.msra.mxu0 0
        %472 = vmatprep.subr.bf16.mxu0 0
        %473 = vmatpush1.bf16.msra.mxu0 0
        %474 = vmatprep.subr.bf16.mxu0 0
        %475 = vmatpush1.bf16.msra.mxu0 0
        %476 = vmatprep.subr.bf16.mxu0 0
        %477 = vmatpush1.bf16.msra.mxu0 0
        %478 = vmatprep.subr.bf16.mxu0 0
        %479 = vmatpush1.bf16.msra.mxu0 0
        %480 = vmatprep.subr.bf16.mxu0 0
        %481 = vmatpush1.bf16.msra.mxu0 0
        %482 = vmatprep.subr.bf16.mxu0 0
        %483 = vmatpush1.bf16.msra.mxu0 0
        %484 = vmatprep.subr.bf16.mxu0 0
        %485 = vmatpush1.bf16.msra.mxu0 0
        %486 = vmatprep.subr.bf16.mxu0 0
        %487 = vmatpush1.bf16.msra.mxu0 0
        %488 = vmatprep.subr.bf16.mxu0 0
        %489 = vmatpush1.bf16.msra.mxu0 0
        %490 = vmatprep.subr.bf16.mxu0 0
        %491 = vmatpush1.bf16.msra.mxu0 0
        %492 = vmatprep.subr.bf16.mxu0 0
        %493 = vmatpush1.bf16.msra.mxu0 0
        %494 = vmatprep.subr.bf16.mxu0 0
        %495 = vmatpush1.bf16.msra.mxu0 0
        %496 = vmatprep.mubr.bf16.mxu0 0
        %497 = vmatmul.mubr.bf16.gmra.mrb[0].mxu0 %v303
        %v498 = vpop.f32.mrb[0].mxu0
        %v499 = vadd.f32 0.0, %v498
        %v500 = vpop.f32.mrb[0].mxu0
        %v501 = vadd.f32 0.0, %v500
        %v502 = vpop.f32.mrb[0].mxu0
        %v503 = vadd.f32 0.0, %v502
        %v504 = vpop.f32.mrb[0].mxu0
        %v505 = vadd.f32 0.0, %v504
        %506 = vdwg.mxu0
        %507 = vmatprep.subr.bf16.mxu0 %v443
        %508 = vmatpush1.bf16.msra.mxu0 %v442
        %509 = vmatprep.subr.bf16.mxu0 %v462
        %510 = vmatpush1.bf16.msra.mxu0 %v459
        %511 = vmatprep.subr.bf16.mxu0 0
        %512 = vmatpush1.bf16.msra.mxu0 0
        %513 = vmatprep.subr.bf16.mxu0 0
        %514 = vmatpush1.bf16.msra.mxu0 0
        %515 = vmatprep.subr.bf16.mxu0 0
        %516 = vmatpush1.bf16.msra.mxu0 0
        %517 = vmatprep.subr.bf16.mxu0 0
        %518 = vmatpush1.bf16.msra.mxu0 0
        %519 = vmatprep.subr.bf16.mxu0 0
        %520 = vmatpush1.bf16.msra.mxu0 0
        %521 = vmatprep.subr.bf16.mxu0 0
        %522 = vmatpush1.bf16.msra.mxu0 0
        %523 = vmatprep.subr.bf16.mxu0 0
        %524 = vmatpush1.bf16.msra.mxu0 0
        %525 = vmatprep.subr.bf16.mxu0 0
        %526 = vmatpush1.bf16.msra.mxu0 0
        %527 = vmatprep.subr.bf16.mxu0 0
        %528 = vmatpush1.bf16.msra.mxu0 0
        %529 = vmatprep.subr.bf16.mxu0 0
        %530 = vmatpush1.bf16.msra.mxu0 0
        %531 = vmatprep.subr.bf16.mxu0 0
        %532 = vmatpush1.bf16.msra.mxu0 0
        %533 = vmatprep.subr.bf16.mxu0 0
        %534 = vmatpush1.bf16.msra.mxu0 0
        %535 = vmatprep.subr.bf16.mxu0 0
        %536 = vmatpush1.bf16.msra.mxu0 0
        %537 = vmatprep.subr.bf16.mxu0 0
        %538 = vmatpush1.bf16.msra.mxu0 0
        %539 = vmatprep.mubr.bf16.mxu0 0
        %540 = vmatmul.mubr.bf16.gmra.mrb[0].mxu0 %v303
        %v541 = vpop.f32.mrb[0].mxu0
        %v542 = vadd.f32 0.0, %v541
        %v543 = vpop.f32.mrb[0].mxu0
        %v544 = vadd.f32 0.0, %v543
        %v545 = vpop.f32.mrb[0].mxu0
        %v546 = vadd.f32 0.0, %v545
        %v547 = vpop.f32.mrb[0].mxu0
        %v548 = vadd.f32 0.0, %v547
        %549 = vdwg.mxu0
        %s550 = scalar_lea.vmem %s227, 128 [#allocation2]
        %v551 = vld [vmem:[%s550] sm:$0xff]
        %v552 = vld [vmem:[%s550 + $0x8] sm:$0xff]
        %v553 = vld [vmem:[%s550 + $0x10] sm:$0xff]
        %v554 = vld [vmem:[%s550 + $0x18] sm:$0xff]
        %v555 = vld [vmem:[%s550 + $0x20] sm:$0xff]
        %v556 = vld [vmem:[%s550 + $0x28] sm:$0xff]
        %v557 = vld [vmem:[%s550 + $0x30] sm:$0x33]
        %v558 = vld [vmem:[%s550 + $0x38] sm:$0x33]
        %v567 = vunpack.c.l.b16 %v551
        %v568 = vunpack.c.h.b16 %v551
        %v569 = vunpack.c.l.b16 %v552
        %v570 = vunpack.c.h.b16 %v552
        %v571 = vunpack.c.l.b16 %v553
        %v572 = vunpack.c.h.b16 %v553
        %v573 = vunpack.c.l.b16 %v554
        %v574 = vunpack.c.h.b16 %v554
        %v575 = vunpack.c.l.b16 %v555
        %v576 = vunpack.c.h.b16 %v555
        %v577 = vunpack.c.l.b16 %v556
        %v578 = vunpack.c.h.b16 %v556
        %v579 = vunpack.c.l.b16 %v557
        %v580 = vunpack.c.h.b16 %v557
        %v581 = vunpack.c.l.b16 %v558
        %v582 = vunpack.c.h.b16 %v558
        %v583 = vpack.c.b16 %v571, %v567
        %v584 = vpack.c.b16 %v572, %v568
        %v585 = vpack.c.b16 %v573, %v569
        %v586 = vpack.c.b16 %v574, %v570
        %v587 = vpack.c.b16 %v579, %v575
        %v588 = vpack.c.b16 %v580, %v576
        %v589 = vpack.c.b16 %v581, %v577
        %v590 = vpack.c.b16 %v582, %v578
        %v596 = vand.u32 %v587, %v308
        %v599 = vand.u32 %v588, %v308
        %v602 = vand.u32 %v589, %v308
        %v605 = vand.u32 %v590, %v308
        %607 = vmatprep.subr.bf16.mxu0 %v584
        %608 = vmatpush1.bf16.msra.mxu0 %v583
        %609 = vmatprep.subr.bf16.mxu0 %v599
        %610 = vmatpush1.bf16.msra.mxu0 %v596
        %611 = vmatprep.subr.bf16.mxu0 0
        %612 = vmatpush1.bf16.msra.mxu0 0
        %613 = vmatprep.subr.bf16.mxu0 0
        %614 = vmatpush1.bf16.msra.mxu0 0
        %615 = vmatprep.subr.bf16.mxu0 0
        %616 = vmatpush1.bf16.msra.mxu0 0
        %617 = vmatprep.subr.bf16.mxu0 0
        %618 = vmatpush1.bf16.msra.mxu0 0
        %619 = vmatprep.subr.bf16.mxu0 0
        %620 = vmatpush1.bf16.msra.mxu0 0
        %621 = vmatprep.subr.bf16.mxu0 0
        %622 = vmatpush1.bf16.msra.mxu0 0
        %623 = vmatprep.subr.bf16.mxu0 0
        %624 = vmatpush1.bf16.msra.mxu0 0
        %625 = vmatprep.subr.bf16.mxu0 0
        %626 = vmatpush1.bf16.msra.mxu0 0
        %627 = vmatprep.subr.bf16.mxu0 0
        %628 = vmatpush1.bf16.msra.mxu0 0
        %629 = vmatprep.subr.bf16.mxu0 0
        %630 = vmatpush1.bf16.msra.mxu0 0
        %631 = vmatprep.subr.bf16.mxu0 0
        %632 = vmatpush1.bf16.msra.mxu0 0
        %633 = vmatprep.subr.bf16.mxu0 0
        %634 = vmatpush1.bf16.msra.mxu0 0
        %635 = vmatprep.subr.bf16.mxu0 0
        %636 = vmatpush1.bf16.msra.mxu0 0
        %637 = vmatprep.subr.bf16.mxu0 0
        %638 = vmatpush1.bf16.msra.mxu0 0
        %639 = vmatprep.mubr.bf16.mxu0 0
        %640 = vmatmul.mubr.bf16.gmra.mrb[0].mxu0 %v303
        %v641 = vpop.f32.mrb[0].mxu0
        %v642 = vadd.f32 0.0, %v641
        %v643 = vpop.f32.mrb[0].mxu0
        %v644 = vadd.f32 0.0, %v643
        %v645 = vpop.f32.mrb[0].mxu0
        %v646 = vadd.f32 0.0, %v645
        %v647 = vpop.f32.mrb[0].mxu0
        %v648 = vadd.f32 0.0, %v647
        %649 = vdwg.mxu0
        %650 = vmatprep.subr.bf16.mxu0 %v586
        %651 = vmatpush1.bf16.msra.mxu0 %v585
        %652 = vmatprep.subr.bf16.mxu0 %v605
        %653 = vmatpush1.bf16.msra.mxu0 %v602
        %654 = vmatprep.subr.bf16.mxu0 0
        %655 = vmatpush1.bf16.msra.mxu0 0
        %656 = vmatprep.subr.bf16.mxu0 0
        %657 = vmatpush1.bf16.msra.mxu0 0
        %658 = vmatprep.subr.bf16.mxu0 0
        %659 = vmatpush1.bf16.msra.mxu0 0
        %660 = vmatprep.subr.bf16.mxu0 0
        %661 = vmatpush1.bf16.msra.mxu0 0
        %662 = vmatprep.subr.bf16.mxu0 0
        %663 = vmatpush1.bf16.msra.mxu0 0
        %664 = vmatprep.subr.bf16.mxu0 0
        %665 = vmatpush1.bf16.msra.mxu0 0
        %666 = vmatprep.subr.bf16.mxu0 0
        %667 = vmatpush1.bf16.msra.mxu0 0
        %668 = vmatprep.subr.bf16.mxu0 0
        %669 = vmatpush1.bf16.msra.mxu0 0
        %670 = vmatprep.subr.bf16.mxu0 0
        %671 = vmatpush1.bf16.msra.mxu0 0
        %672 = vmatprep.subr.bf16.mxu0 0
        %673 = vmatpush1.bf16.msra.mxu0 0
        %674 = vmatprep.subr.bf16.mxu0 0
        %675 = vmatpush1.bf16.msra.mxu0 0
        %676 = vmatprep.subr.bf16.mxu0 0
        %677 = vmatpush1.bf16.msra.mxu0 0
        %678 = vmatprep.subr.bf16.mxu0 0
        %679 = vmatpush1.bf16.msra.mxu0 0
        %680 = vmatprep.subr.bf16.mxu0 0
        %681 = vmatpush1.bf16.msra.mxu0 0
        %682 = vmatprep.mubr.bf16.mxu0 0
        %683 = vmatmul.mubr.bf16.gmra.mrb[0].mxu0 %v303
        %v684 = vpop.f32.mrb[0].mxu0
        %v685 = vadd.f32 0.0, %v684
        %v686 = vpop.f32.mrb[0].mxu0
        %v687 = vadd.f32 0.0, %v686
        %v688 = vpop.f32.mrb[0].mxu0
        %v689 = vadd.f32 0.0, %v688
        %v690 = vpop.f32.mrb[0].mxu0
        %v691 = vadd.f32 0.0, %v690
        %692 = vdwg.mxu0
        %s693 = scalar_lea.vmem %s227, 192 [#allocation2]
        %v694 = vld [vmem:[%s693] sm:$0xff]
        %v695 = vld [vmem:[%s693 + $0x8] sm:$0xff]
        %v696 = vld [vmem:[%s693 + $0x10] sm:$0xff]
        %v697 = vld [vmem:[%s693 + $0x18] sm:$0xff]
        %v698 = vld [vmem:[%s693 + $0x20] sm:$0xff]
        %v699 = vld [vmem:[%s693 + $0x28] sm:$0xff]
        %v700 = vld [vmem:[%s693 + $0x30] sm:$0x33]
        %v701 = vld [vmem:[%s693 + $0x38] sm:$0x33]
        %v710 = vunpack.c.l.b16 %v694
        %v711 = vunpack.c.h.b16 %v694
        %v712 = vunpack.c.l.b16 %v695
        %v713 = vunpack.c.h.b16 %v695
        %v714 = vunpack.c.l.b16 %v696
        %v715 = vunpack.c.h.b16 %v696
        %v716 = vunpack.c.l.b16 %v697
        %v717 = vunpack.c.h.b16 %v697
        %v718 = vunpack.c.l.b16 %v698
        %v719 = vunpack.c.h.b16 %v698
        %v720 = vunpack.c.l.b16 %v699
        %v721 = vunpack.c.h.b16 %v699
        %v722 = vunpack.c.l.b16 %v700
        %v723 = vunpack.c.h.b16 %v700
        %v724 = vunpack.c.l.b16 %v701
        %v725 = vunpack.c.h.b16 %v701
        %v726 = vpack.c.b16 %v714, %v710
        %v727 = vpack.c.b16 %v715, %v711
        %v728 = vpack.c.b16 %v716, %v712
        %v729 = vpack.c.b16 %v717, %v713
        %v730 = vpack.c.b16 %v722, %v718
        %v731 = vpack.c.b16 %v723, %v719
        %v732 = vpack.c.b16 %v724, %v720
        %v733 = vpack.c.b16 %v725, %v721
        %v739 = vand.u32 %v730, %v308
        %v742 = vand.u32 %v731, %v308
        %v745 = vand.u32 %v732, %v308
        %v748 = vand.u32 %v733, %v308
        %750 = vmatprep.subr.bf16.mxu0 %v727
        %751 = vmatpush1.bf16.msra.mxu0 %v726
        %752 = vmatprep.subr.bf16.mxu0 %v742
        %753 = vmatpush1.bf16.msra.mxu0 %v739
        %754 = vmatprep.subr.bf16.mxu0 0
        %755 = vmatpush1.bf16.msra.mxu0 0
        %756 = vmatprep.subr.bf16.mxu0 0
        %757 = vmatpush1.bf16.msra.mxu0 0
        %758 = vmatprep.subr.bf16.mxu0 0
        %759 = vmatpush1.bf16.msra.mxu0 0
        %760 = vmatprep.subr.bf16.mxu0 0
        %761 = vmatpush1.bf16.msra.mxu0 0
        %762 = vmatprep.subr.bf16.mxu0 0
        %763 = vmatpush1.bf16.msra.mxu0 0
        %764 = vmatprep.subr.bf16.mxu0 0
        %765 = vmatpush1.bf16.msra.mxu0 0
        %766 = vmatprep.subr.bf16.mxu0 0
        %767 = vmatpush1.bf16.msra.mxu0 0
        %768 = vmatprep.subr.bf16.mxu0 0
        %769 = vmatpush1.bf16.msra.mxu0 0
        %770 = vmatprep.subr.bf16.mxu0 0
        %771 = vmatpush1.bf16.msra.mxu0 0
        %772 = vmatprep.subr.bf16.mxu0 0
        %773 = vmatpush1.bf16.msra.mxu0 0
        %774 = vmatprep.subr.bf16.mxu0 0
        %775 = vmatpush1.bf16.msra.mxu0 0
        %776 = vmatprep.subr.bf16.mxu0 0
        %777 = vmatpush1.bf16.msra.mxu0 0
        %778 = vmatprep.subr.bf16.mxu0 0
        %779 = vmatpush1.bf16.msra.mxu0 0
        %780 = vmatprep.subr.bf16.mxu0 0
        %781 = vmatpush1.bf16.msra.mxu0 0
        %782 = vmatprep.mubr.bf16.mxu0 0
        %783 = vmatmul.mubr.bf16.gmra.mrb[0].mxu0 %v303
        %v784 = vpop.f32.mrb[0].mxu0
        %v785 = vadd.f32 0.0, %v784
        %v786 = vpop.f32.mrb[0].mxu0
        %v787 = vadd.f32 0.0, %v786
        %v788 = vpop.f32.mrb[0].mxu0
        %v789 = vadd.f32 0.0, %v788
        %v790 = vpop.f32.mrb[0].mxu0
        %v791 = vadd.f32 0.0, %v790
        %792 = vdwg.mxu0
        %793 = vmatprep.subr.bf16.mxu0 %v729
        %794 = vmatpush1.bf16.msra.mxu0 %v728
        %795 = vmatprep.subr.bf16.mxu0 %v748
        %796 = vmatpush1.bf16.msra.mxu0 %v745
        %797 = vmatprep.subr.bf16.mxu0 0
        %798 = vmatpush1.bf16.msra.mxu0 0
        %799 = vmatprep.subr.bf16.mxu0 0
        %800 = vmatpush1.bf16.msra.mxu0 0
        %801 = vmatprep.subr.bf16.mxu0 0
        %802 = vmatpush1.bf16.msra.mxu0 0
        %803 = vmatprep.subr.bf16.mxu0 0
        %804 = vmatpush1.bf16.msra.mxu0 0
        %805 = vmatprep.subr.bf16.mxu0 0
        %806 = vmatpush1.bf16.msra.mxu0 0
        %807 = vmatprep.subr.bf16.mxu0 0
        %808 = vmatpush1.bf16.msra.mxu0 0
        %809 = vmatprep.subr.bf16.mxu0 0
        %810 = vmatpush1.bf16.msra.mxu0 0
        %811 = vmatprep.subr.bf16.mxu0 0
        %812 = vmatpush1.bf16.msra.mxu0 0
        %813 = vmatprep.subr.bf16.mxu0 0
        %814 = vmatpush1.bf16.msra.mxu0 0
        %815 = vmatprep.subr.bf16.mxu0 0
        %816 = vmatpush1.bf16.msra.mxu0 0
        %817 = vmatprep.subr.bf16.mxu0 0
        %818 = vmatpush1.bf16.msra.mxu0 0
        %819 = vmatprep.subr.bf16.mxu0 0
        %820 = vmatpush1.bf16.msra.mxu0 0
        %821 = vmatprep.subr.bf16.mxu0 0
        %822 = vmatpush1.bf16.msra.mxu0 0
        %823 = vmatprep.subr.bf16.mxu0 0
        %824 = vmatpush1.bf16.msra.mxu0 0
        %825 = vmatprep.mubr.bf16.mxu0 0
        %826 = vmatmul.mubr.bf16.gmra.mrb[0].mxu0 %v303
        %v827 = vpop.f32.mrb[0].mxu0
        %v828 = vadd.f32 0.0, %v827
        %v829 = vpop.f32.mrb[0].mxu0
        %v830 = vadd.f32 0.0, %v829
        %v831 = vpop.f32.mrb[0].mxu0
        %v832 = vadd.f32 0.0, %v831
        %v833 = vpop.f32.mrb[0].mxu0
        %v834 = vadd.f32 0.0, %v833
        %835 = vdwg.mxu0
        %v836 = vmax.f32 %v356, %v499
        %v837 = vmax.f32 %v358, %v501
        %v838 = vmax.f32 %v399, %v542
        %v839 = vmax.f32 %v401, %v544
        %v840 = vmax.f32 %v360, %v503
        %v841 = vmax.f32 %v362, %v505
        %v842 = vmax.f32 %v403, %v546
        %v843 = vmax.f32 %v405, %v548
        %v844 = vmax.f32 %v642, %v785
        %v845 = vmax.f32 %v644, %v787
        %v846 = vmax.f32 %v685, %v828
        %v847 = vmax.f32 %v687, %v830
        %v848 = vmax.f32 %v646, %v789
        %v849 = vmax.f32 %v648, %v791
        %v850 = vmax.f32 %v689, %v832
        %v851 = vmax.f32 %v691, %v834
        %v852 = vmax.f32 %v836, %v844
        %v853 = vmax.f32 %v837, %v845
        %v854 = vmax.f32 %v838, %v846
        %v855 = vmax.f32 %v839, %v847
        %v856 = vmax.f32 %v840, %v848
        %v857 = vmax.f32 %v841, %v849
        %v858 = vmax.f32 %v842, %v850
        %v859 = vmax.f32 %v843, %v851
        %v860 = vld [vmem:[%s2] sm:$0xff]
        %v861 = vld [vmem:[%s2 + $0x8] sm:$0xff]
        %863 = vset.pattern.permute.xlu0 0
        %864 = vperm.xlu0 %863, %v860
        %v865 = vpop.permute.xlu0 %864
        %868 = vset.pattern.permute.xlu0 0
        %869 = vperm.xlu0 %868, %v861
        %v870 = vpop.permute.xlu0 %869
        %v872 = vadd.f32 %v852, %v865
        %v873 = vadd.f32 %v853, %v865
        %v874 = vadd.f32 %v854, %v865
        %v875 = vadd.f32 %v855, %v865
        %v876 = vadd.f32 %v856, %v870
        %v877 = vadd.f32 %v857, %v870
        %v878 = vadd.f32 %v858, %v870
        %v879 = vadd.f32 %v859, %v870
        %v880 = vmax.f32 %v872, 0.0
        %v881 = vmax.f32 %v873, 0.0
        %v882 = vmax.f32 %v874, 0.0
        %v883 = vmax.f32 %v875, 0.0
        %v884 = vmax.f32 %v876, 0.0
        %v885 = vmax.f32 %v877, 0.0
        %v886 = vmax.f32 %v878, 0.0
        %v887 = vmax.f32 %v879, 0.0
        %v888 = vmin.f32 %v880, 6.0
        %v889 = vmin.f32 %v881, 6.0
        %v890 = vmin.f32 %v882, 6.0
        %v891 = vmin.f32 %v883, 6.0
        %v892 = vmin.f32 %v884, 6.0
        %v893 = vmin.f32 %v885, 6.0
        %v894 = vmin.f32 %v886, 6.0
        %v895 = vmin.f32 %v887, 6.0
        %v896 = vpack.c.bf16 %v892, %v888
        %v897 = vpack.c.bf16 %v893, %v889
        %v898 = vpack.c.bf16 %v894, %v890
        %v899 = vpack.c.bf16 %v895, %v891
        %v904 = vunpack.c.l.b16 %v896
        %v905 = vunpack.c.l.b16 %v897
        %v906 = vunpack.c.l.b16 %v898
        %v907 = vunpack.c.l.b16 %v899
        %v908 = vunpack.c.h.b16 %v896
        %v909 = vunpack.c.h.b16 %v897
        %v910 = vunpack.c.h.b16 %v898
        %v911 = vunpack.c.h.b16 %v899
        %v912 = vpack.c.b16 %v905, %v904
        %v913 = vpack.c.b16 %v907, %v906
        %v914 = vpack.c.b16 %v909, %v908
        %v915 = vpack.c.b16 %v911, %v910
        %920 = vst [vmem:[%s246] sm:$0xff] %v912
        %921 = vst [vmem:[%s246 + $0x8] sm:$0xff] %v913
        %922 = vst [vmem:[%s246 + $0x10] sm:$0xff] %v914
        %923 = vst [vmem:[%s246 + $0x18] sm:$0xff] %v915
        %s924 = sand.u32 %s90, 1
        %s925 = sand.u32 %s90, 1
        %s926 = smul.addr %s925, 32
        %s927 = scalar_lea.vmem [#allocation3], %s926
        // Predicated region
        $region56: #{color_model_forward.4} parent=50 // pred_check
          %p928 = pneg %p100
        $region57: #{color_model_forward.4} parent=50 // pred_check_branch
          %930 = sbr.rel (%p928) target = $region59
        $region58: #{color_model_forward.4} parent=50 // pred_region
          %s931 = smul.u32 4, %s14
          %s932 = smul.addr %s931, 4
          %s933 = scalar_lea.vmem %s3, %s932
          // Predicated region
          $region60: #{color_model_forward.4} parent=58 // pred_check
            _
          $region61: #{color_model_forward.4} parent=58 // pred_check_branch
            %935 = sbr.rel (0) target = $region63
          $region62: #{color_model_forward.4} parent=58 // pred_region
            // Predicated region
            $region64: #{color_model_forward.4} parent=62 // pred_check
              _
            $region65: #{color_model_forward.4} parent=62 // pred_check_branch
              %937 = sbr.rel (0) target = $region67
            $region66: #{color_model_forward.4} parent=62 // pred_region
              loop: start=0, step=1, limit=1
              $region68: #{color_model_forward.4} parent=66 // loop_pre_header
                _
              $region69: #{color_model_forward.4} parent=66 // loop_header
                %s939 = sphi 0, %s943
                %p940 = scmp.ge.s32.totalorder %s939, 1
                %s944 = sphi %s927, %s927
                %s945 = sphi %s933, %s933
              $region70: #{color_model_forward.4} parent=66 // loop_header_branch
                %942 = sbr.rel (%p940) target = $region74
              $region71: #{color_model_forward.4} parent=66 // loop_body
                %v946 = vld [vmem:[%s944] sm:$0xff]
                %947 = vst [vmem:[%s945] sm:$0xff] %v946
                %v948 = vld [vmem:[%s944 + $0x8] sm:$0xff]
                %949 = vst [vmem:[%s945 + $0x8] sm:$0xff] %v948
                %v950 = vld [vmem:[%s944 + $0x10] sm:$0xff]
                %951 = vst [vmem:[%s945 + $0x40] sm:$0xff] %v950
                %v952 = vld [vmem:[%s944 + $0x18] sm:$0xff]
                %953 = vst [vmem:[%s945 + $0x48] sm:$0xff] %v952
              $region72: #{color_model_forward.4} parent=66 // loop_footer
                %s943 = sadd.s32 1, %s939
              $region73: #{color_model_forward.4} parent=66 // loop_footer_branch
                %938 = sbr.rel target = $region69
              $region74: #{color_model_forward.4} parent=66 // loop_exit
                _
            $region67: #{color_model_forward.4} parent=62 // pred_fallthru
              _
            // Predicated region
            $region75: #{color_model_forward.4} parent=62 // pred_check
              _
            $region76: #{color_model_forward.4} parent=62 // pred_check_branch
              %955 = sbr.rel target = $region78
            $region77: #{color_model_forward.4} parent=62 // pred_region
              _
            $region78: #{color_model_forward.4} parent=62 // pred_fallthru
              _
          $region63: #{color_model_forward.4} parent=58 // pred_fallthru
            _
          %956 = vnop
        $region59: #{color_model_forward.4} parent=50 // pred_fallthru
          _
      $region51: #{color_model_forward.4} parent=5 // pred_fallthru
        _
      %p957 = scmp.le.s32.totalorder 2, %s9
      // Predicated region
      $region79: #{color_model_forward.4} parent=5 // pred_check
        %p958 = pneg %p957
      $region80: #{color_model_forward.4} parent=5 // pred_check_branch
        %960 = sbr.rel (%p958) target = $region82
      $region81: #{color_model_forward.4} parent=5 // pred_region
        %s961 = ssub.s32 %s9, 2
        // Predicated region
        $region83: #{color_model_forward.4} parent=81 // pred_check
          %p962 = pneg %p106
        $region84: #{color_model_forward.4} parent=81 // pred_check_branch
          %964 = sbr.rel (%p962) target = $region86
        $region85: #{color_model_forward.4} parent=81 // pred_region
          %s965 = sand.u32 %s91, 1
          %s966 = sand.u32 %s91, 1
          %s967 = smul.addr %s966, 32
          %s968 = scalar_lea.vmem [#allocation3], %s967
        $region86: #{color_model_forward.4} parent=81 // pred_fallthru
          _
      $region82: #{color_model_forward.4} parent=5 // pred_fallthru
        _
    $region6: #{color_model_forward.4} parent=1 // loop_footer
      %s13 = sadd.s32 1, %s9
    $region7: #{color_model_forward.4} parent=1 // loop_footer_branch
      %8 = sbr.rel target = $region3
    $region8: #{color_model_forward.4} parent=1 // loop_exit
      _

// kernel: color_model_forward.5
$region0: #{color_model_forward.5}
  #allocation0 [shape = 'u32[]', space=smem, size = 0x4, offset = 0x4, fixed_abs, tag = 'smem constant byte address 0x4 - core index']
  #allocation1 [shape = 'u32[144,128]{1,0:T(1,128)}', space=vmem, size = 0x12000, scoped, tag = 'internal scratch']
  %s0 = inlined_call_operand.vmem [shape: bf16[4,144,512], index: 0, kind: input, shape index: {}]
  %s1 = inlined_call_operand.vmem [shape: bf16[32,144], index: 1, kind: input, shape index: {}]
  %s2 = inlined_call_operand.vmem [shape: f32[32,1], index: 2, kind: input, shape index: {}]
  %s3 = inlined_call_operand.vmem [shape: bf16[32,512], index: 3, kind: output, shape index: {}]
  %s4 = sld [smem:[#allocation0]]
  $region22: #{color_model_forward.5} parent=0
    _
  %s6 = ssub.s32 1, %s4
  %s7 = scalar_select 0, %s6, %s4
  // Predicated region
  $region2: #{color_model_forward.5} parent=0 // pred_check
    _
  $region3: #{color_model_forward.5} parent=0 // pred_check_branch
    %9 = sbr.rel (0) target = $region5
  $region4: #{color_model_forward.5} parent=0 // pred_region
    _
  $region5: #{color_model_forward.5} parent=0 // pred_fallthru
    _
  // Predicated region
  $region6: #{color_model_forward.5} parent=0 // pred_check
    _
  $region7: #{color_model_forward.5} parent=0 // pred_check_branch
    %11 = sbr.rel (0) target = $region9
  $region8: #{color_model_forward.5} parent=0 // pred_region
    _
  $region9: #{color_model_forward.5} parent=0 // pred_fallthru
    _
  // Predicated region
  $region10: #{color_model_forward.5} parent=0 // pred_check
    _
  $region11: #{color_model_forward.5} parent=0 // pred_check_branch
    %13 = sbr.rel (0) target = $region13
  $region12: #{color_model_forward.5} parent=0 // pred_region
    _
  $region13: #{color_model_forward.5} parent=0 // pred_fallthru
    _
  %v15 = vld [vmem:[%s1] sm:$0xff]
  %v16 = vld [vmem:[%s1 + $0x8] sm:$0xff]
  %v17 = vld [vmem:[%s1 + $0x10] sm:$0xff]
  %v18 = vld [vmem:[%s1 + $0x18] sm:$0xff]
  %v19 = vld [vmem:[%s0] sm:$0xff]
  %v20 = vld [vmem:[%s0 + $0x8] sm:$0xff]
  %v21 = vld [vmem:[%s0 + $0x10] sm:$0xff]
  %v22 = vld [vmem:[%s0 + $0x18] sm:$0xff]
  %v23 = vld [vmem:[%s0 + $0x20] sm:$0xff]
  %v24 = vld [vmem:[%s0 + $0x28] sm:$0xff]
  %v25 = vld [vmem:[%s0 + $0x30] sm:$0xff]
  %v26 = vld [vmem:[%s0 + $0x38] sm:$0xff]
  %v27 = vld [vmem:[%s0 + $0x40] sm:$0xff]
  %v28 = vld [vmem:[%s0 + $0x48] sm:$0xff]
  %v29 = vld [vmem:[%s0 + $0x50] sm:$0xff]
  %v30 = vld [vmem:[%s0 + $0x58] sm:$0xff]
  %v31 = vld [vmem:[%s0 + $0x60] sm:$0xff]
  %v32 = vld [vmem:[%s0 + $0x68] sm:$0xff]
  %v33 = vld [vmem:[%s0 + $0x70] sm:$0xff]
  %v34 = vld [vmem:[%s0 + $0x78] sm:$0xff]
  %v35 = vld [vmem:[%s0 + $0x80] sm:$0xff]
  %v36 = vld [vmem:[%s0 + $0x88] sm:$0xff]
  %v37 = vld [vmem:[%s0 + $0x90] sm:$0xff]
  %v38 = vld [vmem:[%s0 + $0x98] sm:$0xff]
  %v39 = vld [vmem:[%s0 + $0xa0] sm:$0xff]
  %v40 = vld [vmem:[%s0 + $0xa8] sm:$0xff]
  %v41 = vld [vmem:[%s0 + $0xb0] sm:$0xff]
  %v42 = vld [vmem:[%s0 + $0xb8] sm:$0xff]
  %v43 = vld [vmem:[%s0 + $0xc0] sm:$0xff]
  %v44 = vld [vmem:[%s0 + $0xc8] sm:$0xff]
  %v45 = vld [vmem:[%s0 + $0xd0] sm:$0xff]
  %v46 = vld [vmem:[%s0 + $0xd8] sm:$0xff]
  %v47 = vld [vmem:[%s0 + $0xe0] sm:$0xff]
  %v48 = vld [vmem:[%s0 + $0xe8] sm:$0xff]
  %v49 = vld [vmem:[%s0 + $0xf0] sm:$0xff]
  %v50 = vld [vmem:[%s0 + $0xf8] sm:$0xff]
  %v51 = vld [vmem:[%s0 + $0x100] sm:$0xff]
  %v52 = vld [vmem:[%s0 + $0x108] sm:$0xff]
  %v53 = vld [vmem:[%s0 + $0x110] sm:$0xff]
  %v54 = vld [vmem:[%s0 + $0x118] sm:$0xff]
  %v59 = vunpack.c.l.b16 %v15
  %v60 = vunpack.c.h.b16 %v15
  %v61 = vunpack.c.l.b16 %v16
  %v62 = vunpack.c.h.b16 %v16
  %v63 = vunpack.c.l.b16 %v17
  %v64 = vunpack.c.h.b16 %v17
  %v65 = vunpack.c.l.b16 %v18
  %v66 = vunpack.c.h.b16 %v18
  %v67 = vpack.c.b16 %v61, %v59
  %v68 = vpack.c.b16 %v62, %v60
  %v69 = vpack.c.b16 %v65, %v63
  %v70 = vpack.c.b16 %v66, %v64
  %v109 = vunpack.c.l.b16 %v19
  %v110 = vunpack.c.h.b16 %v19
  %v111 = vunpack.c.l.b16 %v20
  %v112 = vunpack.c.h.b16 %v20
  %v113 = vunpack.c.l.b16 %v21
  %v114 = vunpack.c.h.b16 %v21
  %v115 = vunpack.c.l.b16 %v22
  %v116 = vunpack.c.h.b16 %v22
  %v117 = vunpack.c.l.b16 %v23
  %v118 = vunpack.c.h.b16 %v23
  %v119 = vunpack.c.l.b16 %v24
  %v120 = vunpack.c.h.b16 %v24
  %v121 = vunpack.c.l.b16 %v25
  %v122 = vunpack.c.h.b16 %v25
  %v123 = vunpack.c.l.b16 %v26
  %v124 = vunpack.c.h.b16 %v26
  %v125 = vunpack.c.l.b16 %v27
  %v126 = vunpack.c.h.b16 %v27
  %v127 = vunpack.c.l.b16 %v28
  %v128 = vunpack.c.h.b16 %v28
  %v129 = vunpack.c.l.b16 %v29
  %v130 = vunpack.c.h.b16 %v29
  %v131 = vunpack.c.l.b16 %v30
  %v132 = vunpack.c.h.b16 %v30
  %v133 = vunpack.c.l.b16 %v31
  %v134 = vunpack.c.h.b16 %v31
  %v135 = vunpack.c.l.b16 %v32
  %v136 = vunpack.c.h.b16 %v32
  %v137 = vunpack.c.l.b16 %v33
  %v138 = vunpack.c.h.b16 %v33
  %v139 = vunpack.c.l.b16 %v34
  %v140 = vunpack.c.h.b16 %v34
  %v141 = vunpack.c.l.b16 %v35
  %v142 = vunpack.c.h.b16 %v35
  %v143 = vunpack.c.l.b16 %v36
  %v144 = vunpack.c.h.b16 %v36
  %v145 = vunpack.c.l.b16 %v37
  %v146 = vunpack.c.h.b16 %v37
  %v147 = vunpack.c.l.b16 %v38
  %v148 = vunpack.c.h.b16 %v38
  %v149 = vunpack.c.l.b16 %v39
  %v150 = vunpack.c.h.b16 %v39
  %v151 = vunpack.c.l.b16 %v40
  %v152 = vunpack.c.h.b16 %v40
  %v153 = vunpack.c.l.b16 %v41
  %v154 = vunpack.c.h.b16 %v41
  %v155 = vunpack.c.l.b16 %v42
  %v156 = vunpack.c.h.b16 %v42
  %v157 = vunpack.c.l.b16 %v43
  %v158 = vunpack.c.h.b16 %v43
  %v159 = vunpack.c.l.b16 %v44
  %v160 = vunpack.c.h.b16 %v44
  %v161 = vunpack.c.l.b16 %v45
  %v162 = vunpack.c.h.b16 %v45
  %v163 = vunpack.c.l.b16 %v46
  %v164 = vunpack.c.h.b16 %v46
  %v165 = vunpack.c.l.b16 %v47
  %v166 = vunpack.c.h.b16 %v47
  %v167 = vunpack.c.l.b16 %v48
  %v168 = vunpack.c.h.b16 %v48
  %v169 = vunpack.c.l.b16 %v49
  %v170 = vunpack.c.h.b16 %v49
  %v171 = vunpack.c.l.b16 %v50
  %v172 = vunpack.c.h.b16 %v50
  %v173 = vunpack.c.l.b16 %v51
  %v174 = vunpack.c.h.b16 %v51
  %v175 = vunpack.c.l.b16 %v52
  %v176 = vunpack.c.h.b16 %v52
  %v177 = vunpack.c.l.b16 %v53
  %v178 = vunpack.c.h.b16 %v53
  %v179 = vunpack.c.l.b16 %v54
  %v180 = vunpack.c.h.b16 %v54
  %v181 = vpack.c.b16 %v113, %v109
  %v182 = vpack.c.b16 %v114, %v110
  %v183 = vpack.c.b16 %v115, %v111
  %v184 = vpack.c.b16 %v116, %v112
  %v185 = vpack.c.b16 %v121, %v117
  %v186 = vpack.c.b16 %v122, %v118
  %v187 = vpack.c.b16 %v123, %v119
  %v188 = vpack.c.b16 %v124, %v120
  %v189 = vpack.c.b16 %v129, %v125
  %v190 = vpack.c.b16 %v130, %v126
  %v191 = vpack.c.b16 %v131, %v127
  %v192 = vpack.c.b16 %v132, %v128
  %v193 = vpack.c.b16 %v137, %v133
  %v194 = vpack.c.b16 %v138, %v134
  %v195 = vpack.c.b16 %v139, %v135
  %v196 = vpack.c.b16 %v140, %v136
  %v197 = vpack.c.b16 %v145, %v141
  %v198 = vpack.c.b16 %v146, %v142
  %v199 = vpack.c.b16 %v147, %v143
  %v200 = vpack.c.b16 %v148, %v144
  %v201 = vpack.c.b16 %v153, %v149
  %v202 = vpack.c.b16 %v154, %v150
  %v203 = vpack.c.b16 %v155, %v151
  %v204 = vpack.c.b16 %v156, %v152
  %v205 = vpack.c.b16 %v161, %v157
  %v206 = vpack.c.b16 %v162, %v158
  %v207 = vpack.c.b16 %v163, %v159
  %v208 = vpack.c.b16 %v164, %v160
  %v209 = vpack.c.b16 %v169, %v165
  %v210 = vpack.c.b16 %v170, %v166
  %v211 = vpack.c.b16 %v171, %v167
  %v212 = vpack.c.b16 %v172, %v168
  %v213 = vpack.c.b16 %v177, %v173
  %v214 = vpack.c.b16 %v178, %v174
  %v215 = vpack.c.b16 %v179, %v175
  %v216 = vpack.c.b16 %v180, %v176
  %vm253 = vcmask 130048
  %v255 = vsel %vm253, %v68, 0
  %v258 = vsel %vm253, %v70, 0
  %260 = vmatprep.subr.bf16.mxu0 %v182
  %261 = vmatpush1.bf16.msra.mxu0 %v181
  %262 = vmatprep.subr.bf16.mxu0 %v186
  %263 = vmatpush1.bf16.msra.mxu0 %v185
  %264 = vmatprep.subr.bf16.mxu0 %v190
  %265 = vmatpush1.bf16.msra.mxu0 %v189
  %266 = vmatprep.subr.bf16.mxu0 %v194
  %267 = vmatpush1.bf16.msra.mxu0 %v193
  %268 = vmatprep.subr.bf16.mxu0 %v198
  %269 = vmatpush1.bf16.msra.mxu0 %v197
  %270 = vmatprep.subr.bf16.mxu0 %v202
  %271 = vmatpush1.bf16.msra.mxu0 %v201
  %272 = vmatprep.subr.bf16.mxu0 %v206
  %273 = vmatpush1.bf16.msra.mxu0 %v205
  %274 = vmatprep.subr.bf16.mxu0 %v210
  %275 = vmatpush1.bf16.msra.mxu0 %v209
  %276 = vmatprep.subr.bf16.mxu0 %v214
  %277 = vmatpush1.bf16.msra.mxu0 %v213
  %278 = vmatprep.subr.bf16.mxu0 0
  %279 = vmatpush1.bf16.msra.mxu0 0
  %280 = vmatprep.subr.bf16.mxu0 0
  %281 = vmatpush1.bf16.msra.mxu0 0
  %282 = vmatprep.subr.bf16.mxu0 0
  %283 = vmatpush1.bf16.msra.mxu0 0
  %284 = vmatprep.subr.bf16.mxu0 0
  %285 = vmatpush1.bf16.msra.mxu0 0
  %286 = vmatprep.subr.bf16.mxu0 0
  %287 = vmatpush1.bf16.msra.mxu0 0
  %288 = vmatprep.subr.bf16.mxu0 0
  %289 = vmatpush1.bf16.msra.mxu0 0
  %290 = vmatprep.subr.bf16.mxu0 0
  %291 = vmatpush1.bf16.msra.mxu0 0
  %292 = vmatprep.mubr.bf16.mxu0 %v255
  %293 = vmatmul.mubr.bf16.gmra.mrb[0].mxu0 %v67
  %v294 = vpop.f32.mrb[0].mxu0
  %v295 = vadd.f32 0.0, %v294
  %v296 = vpop.f32.mrb[0].mxu0
  %v297 = vadd.f32 0.0, %v296
  %v298 = vpop.f32.mrb[0].mxu0
  %v299 = vadd.f32 0.0, %v298
  %v300 = vpop.f32.mrb[0].mxu0
  %v301 = vadd.f32 0.0, %v300
  %302 = vmatprep.mubr.bf16.mxu0 %v258
  %303 = vmatmul.mubr.bf16.gmra.mrb[0].mxu0 %v69
  %v304 = vpop.f32.mrb[0].mxu0
  %v305 = vadd.f32 0.0, %v304
  %v306 = vpop.f32.mrb[0].mxu0
  %v307 = vadd.f32 0.0, %v306
  %v308 = vpop.f32.mrb[0].mxu0
  %v309 = vadd.f32 0.0, %v308
  %v310 = vpop.f32.mrb[0].mxu0
  %v311 = vadd.f32 0.0, %v310
  %312 = vdwg.mxu0
  %313 = vmatprep.subr.bf16.mxu0 %v184
  %314 = vmatpush1.bf16.msra.mxu0 %v183
  %315 = vmatprep.subr.bf16.mxu0 %v188
  %316 = vmatpush1.bf16.msra.mxu0 %v187
  %317 = vmatprep.subr.bf16.mxu0 %v192
  %318 = vmatpush1.bf16.msra.mxu0 %v191
  %319 = vmatprep.subr.bf16.mxu0 %v196
  %320 = vmatpush1.bf16.msra.mxu0 %v195
  %321 = vmatprep.subr.bf16.mxu0 %v200
  %322 = vmatpush1.bf16.msra.mxu0 %v199
  %323 = vmatprep.subr.bf16.mxu0 %v204
  %324 = vmatpush1.bf16.msra.mxu0 %v203
  %325 = vmatprep.subr.bf16.mxu0 %v208
  %326 = vmatpush1.bf16.msra.mxu0 %v207
  %327 = vmatprep.subr.bf16.mxu0 %v212
  %328 = vmatpush1.bf16.msra.mxu0 %v211
  %329 = vmatprep.subr.bf16.mxu0 %v216
  %330 = vmatpush1.bf16.msra.mxu0 %v215
  %331 = vmatprep.subr.bf16.mxu0 0
  %332 = vmatpush1.bf16.msra.mxu0 0
  %333 = vmatprep.subr.bf16.mxu0 0
  %334 = vmatpush1.bf16.msra.mxu0 0
  %335 = vmatprep.subr.bf16.mxu0 0
  %336 = vmatpush1.bf16.msra.mxu0 0
  %337 = vmatprep.subr.bf16.mxu0 0
  %338 = vmatpush1.bf16.msra.mxu0 0
  %339 = vmatprep.subr.bf16.mxu0 0
  %340 = vmatpush1.bf16.msra.mxu0 0
  %341 = vmatprep.subr.bf16.mxu0 0
  %342 = vmatpush1.bf16.msra.mxu0 0
  %343 = vmatprep.subr.bf16.mxu0 0
  %344 = vmatpush1.bf16.msra.mxu0 0
  %345 = vmatprep.mubr.bf16.mxu0 %v255
  %346 = vmatmul.mubr.bf16.gmra.mrb[0].mxu0 %v67
  %v347 = vpop.f32.mrb[0].mxu0
  %v348 = vadd.f32 0.0, %v347
  %v349 = vpop.f32.mrb[0].mxu0
  %v350 = vadd.f32 0.0, %v349
  %v351 = vpop.f32.mrb[0].mxu0
  %v352 = vadd.f32 0.0, %v351
  %v353 = vpop.f32.mrb[0].mxu0
  %v354 = vadd.f32 0.0, %v353
  %355 = vmatprep.mubr.bf16.mxu0 %v258
  %356 = vmatmul.mubr.bf16.gmra.mrb[0].mxu0 %v69
  %v357 = vpop.f32.mrb[0].mxu0
  %v358 = vadd.f32 0.0, %v357
  %v359 = vpop.f32.mrb[0].mxu0
  %v360 = vadd.f32 0.0, %v359
  %v361 = vpop.f32.mrb[0].mxu0
  %v362 = vadd.f32 0.0, %v361
  %v363 = vpop.f32.mrb[0].mxu0
  %v364 = vadd.f32 0.0, %v363
  %365 = vdwg.mxu0
  %s366 = scalar_lea.vmem %s0, 288
  %v367 = vld [vmem:[%s366] sm:$0xff]
  %v368 = vld [vmem:[%s366 + $0x8] sm:$0xff]
  %v369 = vld [vmem:[%s366 + $0x10] sm:$0xff]
  %v370 = vld [vmem:[%s366 + $0x18] sm:$0xff]
  %v371 = vld [vmem:[%s366 + $0x20] sm:$0xff]
  %v372 = vld [vmem:[%s366 + $0x28] sm:$0xff]
  %v373 = vld [vmem:[%s366 + $0x30] sm:$0xff]
  %v374 = vld [vmem:[%s366 + $0x38] sm:$0xff]
  %v375 = vld [vmem:[%s366 + $0x40] sm:$0xff]
  %v376 = vld [vmem:[%s366 + $0x48] sm:$0xff]
  %v377 = vld [vmem:[%s366 + $0x50] sm:$0xff]
  %v378 = vld [vmem:[%s366 + $0x58] sm:$0xff]
  %v379 = vld [vmem:[%s366 + $0x60] sm:$0xff]
  %v380 = vld [vmem:[%s366 + $0x68] sm:$0xff]
  %v381 = vld [vmem:[%s366 + $0x70] sm:$0xff]
  %v382 = vld [vmem:[%s366 + $0x78] sm:$0xff]
  %v383 = vld [vmem:[%s366 + $0x80] sm:$0xff]
  %v384 = vld [vmem:[%s366 + $0x88] sm:$0xff]
  %v385 = vld [vmem:[%s366 + $0x90] sm:$0xff]
  %v386 = vld [vmem:[%s366 + $0x98] sm:$0xff]
  %v387 = vld [vmem:[%s366 + $0xa0] sm:$0xff]
  %v388 = vld [vmem:[%s366 + $0xa8] sm:$0xff]
  %v389 = vld [vmem:[%s366 + $0xb0] sm:$0xff]
  %v390 = vld [vmem:[%s366 + $0xb8] sm:$0xff]
  %v391 = vld [vmem:[%s366 + $0xc0] sm:$0xff]
  %v392 = vld [vmem:[%s366 + $0xc8] sm:$0xff]
  %v393 = vld [vmem:[%s366 + $0xd0] sm:$0xff]
  %v394 = vld [vmem:[%s366 + $0xd8] sm:$0xff]
  %v395 = vld [vmem:[%s366 + $0xe0] sm:$0xff]
  %v396 = vld [vmem:[%s366 + $0xe8] sm:$0xff]
  %v397 = vld [vmem:[%s366 + $0xf0] sm:$0xff]
  %v398 = vld [vmem:[%s366 + $0xf8] sm:$0xff]
  %v399 = vld [vmem:[%s366 + $0x100] sm:$0xff]
  %v400 = vld [vmem:[%s366 + $0x108] sm:$0xff]
  %v401 = vld [vmem:[%s366 + $0x110] sm:$0xff]
  %v402 = vld [vmem:[%s366 + $0x118] sm:$0xff]
  %v439 = vunpack.c.l.b16 %v367
  %v440 = vunpack.c.h.b16 %v367
  %v441 = vunpack.c.l.b16 %v368
  %v442 = vunpack.c.h.b16 %v368
  %v443 = vunpack.c.l.b16 %v369
  %v444 = vunpack.c.h.b16 %v369
  %v445 = vunpack.c.l.b16 %v370
  %v446 = vunpack.c.h.b16 %v370
  %v447 = vunpack.c.l.b16 %v371
  %v448 = vunpack.c.h.b16 %v371
  %v449 = vunpack.c.l.b16 %v372
  %v450 = vunpack.c.h.b16 %v372
  %v451 = vunpack.c.l.b16 %v373
  %v452 = vunpack.c.h.b16 %v373
  %v453 = vunpack.c.l.b16 %v374
  %v454 = vunpack.c.h.b16 %v374
  %v455 = vunpack.c.l.b16 %v375
  %v456 = vunpack.c.h.b16 %v375
  %v457 = vunpack.c.l.b16 %v376
  %v458 = vunpack.c.h.b16 %v376
  %v459 = vunpack.c.l.b16 %v377
  %v460 = vunpack.c.h.b16 %v377
  %v461 = vunpack.c.l.b16 %v378
  %v462 = vunpack.c.h.b16 %v378
  %v463 = vunpack.c.l.b16 %v379
  %v464 = vunpack.c.h.b16 %v379
  %v465 = vunpack.c.l.b16 %v380
  %v466 = vunpack.c.h.b16 %v380
  %v467 = vunpack.c.l.b16 %v381
  %v468 = vunpack.c.h.b16 %v381
  %v469 = vunpack.c.l.b16 %v382
  %v470 = vunpack.c.h.b16 %v382
  %v471 = vunpack.c.l.b16 %v383
  %v472 = vunpack.c.h.b16 %v383
  %v473 = vunpack.c.l.b16 %v384
  %v474 = vunpack.c.h.b16 %v384
  %v475 = vunpack.c.l.b16 %v385
  %v476 = vunpack.c.h.b16 %v385
  %v477 = vunpack.c.l.b16 %v386
  %v478 = vunpack.c.h.b16 %v386
  %v479 = vunpack.c.l.b16 %v387
  %v480 = vunpack.c.h.b16 %v387
  %v481 = vunpack.c.l.b16 %v388
  %v482 = vunpack.c.h.b16 %v388
  %v483 = vunpack.c.l.b16 %v389
  %v484 = vunpack.c.h.b16 %v389
  %v485 = vunpack.c.l.b16 %v390
  %v486 = vunpack.c.h.b16 %v390
  %v487 = vunpack.c.l.b16 %v391
  %v488 = vunpack.c.h.b16 %v391
  %v489 = vunpack.c.l.b16 %v392
  %v490 = vunpack.c.h.b16 %v392
  %v491 = vunpack.c.l.b16 %v393
  %v492 = vunpack.c.h.b16 %v393
  %v493 = vunpack.c.l.b16 %v394
  %v494 = vunpack.c.h.b16 %v394
  %v495 = vunpack.c.l.b16 %v395
  %v496 = vunpack.c.h.b16 %v395
  %v497 = vunpack.c.l.b16 %v396
  %v498 = vunpack.c.h.b16 %v396
  %v499 = vunpack.c.l.b16 %v397
  %v500 = vunpack.c.h.b16 %v397
  %v501 = vunpack.c.l.b16 %v398
  %v502 = vunpack.c.h.b16 %v398
  %v503 = vunpack.c.l.b16 %v399
  %v504 = vunpack.c.h.b16 %v399
  %v505 = vunpack.c.l.b16 %v400
  %v506 = vunpack.c.h.b16 %v400
  %v507 = vunpack.c.l.b16 %v401
  %v508 = vunpack.c.h.b16 %v401
  %v509 = vunpack.c.l.b16 %v402
  %v510 = vunpack.c.h.b16 %v402
  %v511 = vpack.c.b16 %v443, %v439
  %v512 = vpack.c.b16 %v444, %v440
  %v513 = vpack.c.b16 %v445, %v441
  %v514 = vpack.c.b16 %v446, %v442
  %v515 = vpack.c.b16 %v451, %v447
  %v516 = vpack.c.b16 %v452, %v448
  %v517 = vpack.c.b16 %v453, %v449
  %v518 = vpack.c.b16 %v454, %v450
  %v519 = vpack.c.b16 %v459, %v455
  %v520 = vpack.c.b16 %v460, %v456
  %v521 = vpack.c.b16 %v461, %v457
  %v522 = vpack.c.b16 %v462, %v458
  %v523 = vpack.c.b16 %v467, %v463
  %v524 = vpack.c.b16 %v468, %v464
  %v525 = vpack.c.b16 %v469, %v465
  %v526 = vpack.c.b16 %v470, %v466
  %v527 = vpack.c.b16 %v475, %v471
  %v528 = vpack.c.b16 %v476, %v472
  %v529 = vpack.c.b16 %v477, %v473
  %v530 = vpack.c.b16 %v478, %v474
  %v531 = vpack.c.b16 %v483, %v479
  %v532 = vpack.c.b16 %v484, %v480
  %v533 = vpack.c.b16 %v485, %v481
  %v534 = vpack.c.b16 %v486, %v482
  %v535 = vpack.c.b16 %v491, %v487
  %v536 = vpack.c.b16 %v492, %v488
  %v537 = vpack.c.b16 %v493, %v489
  %v538 = vpack.c.b16 %v494, %v490
  %v539 = vpack.c.b16 %v499, %v495
  %v540 = vpack.c.b16 %v500, %v496
  %v541 = vpack.c.b16 %v501, %v497
  %v542 = vpack.c.b16 %v502, %v498
  %v543 = vpack.c.b16 %v507, %v503
  %v544 = vpack.c.b16 %v508, %v504
  %v545 = vpack.c.b16 %v509, %v505
  %v546 = vpack.c.b16 %v510, %v506
  %583 = vmatprep.subr.bf16.mxu0 %v512
  %584 = vmatpush1.bf16.msra.mxu0 %v511
  %585 = vmatprep.subr.bf16.mxu0 %v516
  %586 = vmatpush1.bf16.msra.mxu0 %v515
  %587 = vmatprep.subr.bf16.mxu0 %v520
  %588 = vmatpush1.bf16.msra.mxu0 %v519
  %589 = vmatprep.subr.bf16.mxu0 %v524
  %590 = vmatpush1.bf16.msra.mxu0 %v523
  %591 = vmatprep.subr.bf16.mxu0 %v528
  %592 = vmatpush1.bf16.msra.mxu0 %v527
  %593 = vmatprep.subr.bf16.mxu0 %v532
  %594 = vmatpush1.bf16.msra.mxu0 %v531
  %595 = vmatprep.subr.bf16.mxu0 %v536
  %596 = vmatpush1.bf16.msra.mxu0 %v535
  %597 = vmatprep.subr.bf16.mxu0 %v540
  %598 = vmatpush1.bf16.msra.mxu0 %v539
  %599 = vmatprep.subr.bf16.mxu0 %v544
  %600 = vmatpush1.bf16.msra.mxu0 %v543
  %601 = vmatprep.subr.bf16.mxu0 0
  %602 = vmatpush1.bf16.msra.mxu0 0
  %603 = vmatprep.subr.bf16.mxu0 0
  %604 = vmatpush1.bf16.msra.mxu0 0
  %605 = vmatprep.subr.bf16.mxu0 0
  %606 = vmatpush1.bf16.msra.mxu0 0
  %607 = vmatprep.subr.bf16.mxu0 0
  %608 = vmatpush1.bf16.msra.mxu0 0
  %609 = vmatprep.subr.bf16.mxu0 0
  %610 = vmatpush1.bf16.msra.mxu0 0
  %611 = vmatprep.subr.bf16.mxu0 0
  %612 = vmatpush1.bf16.msra.mxu0 0
  %613 = vmatprep.subr.bf16.mxu0 0
  %614 = vmatpush1.bf16.msra.mxu0 0
  %615 = vmatprep.mubr.bf16.mxu0 %v255
  %616 = vmatmul.mubr.bf16.gmra.mrb[0].mxu0 %v67
  %v617 = vpop.f32.mrb[0].mxu0
  %v618 = vadd.f32 0.0, %v617
  %v619 = vpop.f32.mrb[0].mxu0
  %v620 = vadd.f32 0.0, %v619
  %v621 = vpop.f32.mrb[0].mxu0
  %v622 = vadd.f32 0.0, %v621
  %v623 = vpop.f32.mrb[0].mxu0
  %v624 = vadd.f32 0.0, %v623
  %625 = vmatprep.mubr.bf16.mxu0 %v258
  %626 = vmatmul.mubr.bf16.gmra.mrb[0].mxu0 %v69
  %v627 = vpop.f32.mrb[0].mxu0
  %v628 = vadd.f32 0.0, %v627
  %v629 = vpop.f32.mrb[0].mxu0
  %v630 = vadd.f32 0.0, %v629
  %v631 = vpop.f32.mrb[0].mxu0
  %v632 = vadd.f32 0.0, %v631
  %v633 = vpop.f32.mrb[0].mxu0
  %v634 = vadd.f32 0.0, %v633
  %635 = vdwg.mxu0
  %636 = vmatprep.subr.bf16.mxu0 %v514
  %637 = vmatpush1.bf16.msra.mxu0 %v513
  %638 = vmatprep.subr.bf16.mxu0 %v518
  %639 = vmatpush1.bf16.msra.mxu0 %v517
  %640 = vmatprep.subr.bf16.mxu0 %v522
  %641 = vmatpush1.bf16.msra.mxu0 %v521
  %642 = vmatprep.subr.bf16.mxu0 %v526
  %643 = vmatpush1.bf16.msra.mxu0 %v525
  %644 = vmatprep.subr.bf16.mxu0 %v530
  %645 = vmatpush1.bf16.msra.mxu0 %v529
  %646 = vmatprep.subr.bf16.mxu0 %v534
  %647 = vmatpush1.bf16.msra.mxu0 %v533
  %648 = vmatprep.subr.bf16.mxu0 %v538
  %649 = vmatpush1.bf16.msra.mxu0 %v537
  %650 = vmatprep.subr.bf16.mxu0 %v542
  %651 = vmatpush1.bf16.msra.mxu0 %v541
  %652 = vmatprep.subr.bf16.mxu0 %v546
  %653 = vmatpush1.bf16.msra.mxu0 %v545
  %654 = vmatprep.subr.bf16.mxu0 0
  %655 = vmatpush1.bf16.msra.mxu0 0
  %656 = vmatprep.subr.bf16.mxu0 0
  %657 = vmatpush1.bf16.msra.mxu0 0
  %658 = vmatprep.subr.bf16.mxu0 0
  %659 = vmatpush1.bf16.msra.mxu0 0
  %660 = vmatprep.subr.bf16.mxu0 0
  %661 = vmatpush1.bf16.msra.mxu0 0
  %662 = vmatprep.subr.bf16.mxu0 0
  %663 = vmatpush1.bf16.msra.mxu0 0
  %664 = vmatprep.subr.bf16.mxu0 0
  %665 = vmatpush1.bf16.msra.mxu0 0
  %666 = vmatprep.subr.bf16.mxu0 0
  %667 = vmatpush1.bf16.msra.mxu0 0
  %668 = vmatprep.mubr.bf16.mxu0 %v255
  %669 = vmatmul.mubr.bf16.gmra.mrb[0].mxu0 %v67
  %v670 = vpop.f32.mrb[0].mxu0
  %v671 = vadd.f32 0.0, %v670
  %v672 = vpop.f32.mrb[0].mxu0
  %v673 = vadd.f32 0.0, %v672
  %v674 = vpop.f32.mrb[0].mxu0
  %v675 = vadd.f32 0.0, %v674
  %v676 = vpop.f32.mrb[0].mxu0
  %v677 = vadd.f32 0.0, %v676
  %678 = vmatprep.mubr.bf16.mxu0 %v258
  %679 = vmatmul.mubr.bf16.gmra.mrb[0].mxu0 %v69
  %v680 = vpop.f32.mrb[0].mxu0
  %v681 = vadd.f32 0.0, %v680
  %v682 = vpop.f32.mrb[0].mxu0
  %v683 = vadd.f32 0.0, %v682
  %v684 = vpop.f32.mrb[0].mxu0
  %v685 = vadd.f32 0.0, %v684
  %v686 = vpop.f32.mrb[0].mxu0
  %v687 = vadd.f32 0.0, %v686
  %688 = vdwg.mxu0
  %s689 = scalar_lea.vmem %s0, 576
  %v690 = vld [vmem:[%s689] sm:$0xff]
  %v691 = vld [vmem:[%s689 + $0x8] sm:$0xff]
  %v692 = vld [vmem:[%s689 + $0x10] sm:$0xff]
  %v693 = vld [vmem:[%s689 + $0x18] sm:$0xff]
  %v694 = vld [vmem:[%s689 + $0x20] sm:$0xff]
  %v695 = vld [vmem:[%s689 + $0x28] sm:$0xff]
  %v696 = vld [vmem:[%s689 + $0x30] sm:$0xff]
  %v697 = vld [vmem:[%s689 + $0x38] sm:$0xff]
  %v698 = vld [vmem:[%s689 + $0x40] sm:$0xff]
  %v699 = vld [vmem:[%s689 + $0x48] sm:$0xff]
  %v700 = vld [vmem:[%s689 + $0x50] sm:$0xff]
  %v701 = vld [vmem:[%s689 + $0x58] sm:$0xff]
  %v702 = vld [vmem:[%s689 + $0x60] sm:$0xff]
  %v703 = vld [vmem:[%s689 + $0x68] sm:$0xff]
  %v704 = vld [vmem:[%s689 + $0x70] sm:$0xff]
  %v705 = vld [vmem:[%s689 + $0x78] sm:$0xff]
  %v706 = vld [vmem:[%s689 + $0x80] sm:$0xff]
  %v707 = vld [vmem:[%s689 + $0x88] sm:$0xff]
  %v708 = vld [vmem:[%s689 + $0x90] sm:$0xff]
  %v709 = vld [vmem:[%s689 + $0x98] sm:$0xff]
  %v710 = vld [vmem:[%s689 + $0xa0] sm:$0xff]
  %v711 = vld [vmem:[%s689 + $0xa8] sm:$0xff]
  %v712 = vld [vmem:[%s689 + $0xb0] sm:$0xff]
  %v713 = vld [vmem:[%s689 + $0xb8] sm:$0xff]
  %v714 = vld [vmem:[%s689 + $0xc0] sm:$0xff]
  %v715 = vld [vmem:[%s689 + $0xc8] sm:$0xff]
  %v716 = vld [vmem:[%s689 + $0xd0] sm:$0xff]
  %v717 = vld [vmem:[%s689 + $0xd8] sm:$0xff]
  %v718 = vld [vmem:[%s689 + $0xe0] sm:$0xff]
  %v719 = vld [vmem:[%s689 + $0xe8] sm:$0xff]
  %v720 = vld [vmem:[%s689 + $0xf0] sm:$0xff]
  %v721 = vld [vmem:[%s689 + $0xf8] sm:$0xff]
  %v722 = vld [vmem:[%s689 + $0x100] sm:$0xff]
  %v723 = vld [vmem:[%s689 + $0x108] sm:$0xff]
  %v724 = vld [vmem:[%s689 + $0x110] sm:$0xff]
  %v725 = vld [vmem:[%s689 + $0x118] sm:$0xff]
  %v762 = vunpack.c.l.b16 %v690
  %v763 = vunpack.c.h.b16 %v690
  %v764 = vunpack.c.l.b16 %v691
  %v765 = vunpack.c.h.b16 %v691
  %v766 = vunpack.c.l.b16 %v692
  %v767 = vunpack.c.h.b16 %v692
  %v768 = vunpack.c.l.b16 %v693
  %v769 = vunpack.c.h.b16 %v693
  %v770 = vunpack.c.l.b16 %v694
  %v771 = vunpack.c.h.b16 %v694
  %v772 = vunpack.c.l.b16 %v695
  %v773 = vunpack.c.h.b16 %v695
  %v774 = vunpack.c.l.b16 %v696
  %v775 = vunpack.c.h.b16 %v696
  %v776 = vunpack.c.l.b16 %v697
  %v777 = vunpack.c.h.b16 %v697
  %v778 = vunpack.c.l.b16 %v698
  %v779 = vunpack.c.h.b16 %v698
  %v780 = vunpack.c.l.b16 %v699
  %v781 = vunpack.c.h.b16 %v699
  %v782 = vunpack.c.l.b16 %v700
  %v783 = vunpack.c.h.b16 %v700
  %v784 = vunpack.c.l.b16 %v701
  %v785 = vunpack.c.h.b16 %v701
  %v786 = vunpack.c.l.b16 %v702
  %v787 = vunpack.c.h.b16 %v702
  %v788 = vunpack.c.l.b16 %v703
  %v789 = vunpack.c.h.b16 %v703
  %v790 = vunpack.c.l.b16 %v704
  %v791 = vunpack.c.h.b16 %v704
  %v792 = vunpack.c.l.b16 %v705
  %v793 = vunpack.c.h.b16 %v705
  %v794 = vunpack.c.l.b16 %v706
  %v795 = vunpack.c.h.b16 %v706
  %v796 = vunpack.c.l.b16 %v707
  %v797 = vunpack.c.h.b16 %v707
  %v798 = vunpack.c.l.b16 %v708
  %v799 = vunpack.c.h.b16 %v708
  %v800 = vunpack.c.l.b16 %v709
  %v801 = vunpack.c.h.b16 %v709
  %v802 = vunpack.c.l.b16 %v710
  %v803 = vunpack.c.h.b16 %v710
  %v804 = vunpack.c.l.b16 %v711
  %v805 = vunpack.c.h.b16 %v711
  %v806 = vunpack.c.l.b16 %v712
  %v807 = vunpack.c.h.b16 %v712
  %v808 = vunpack.c.l.b16 %v713
  %v809 = vunpack.c.h.b16 %v713
  %v810 = vunpack.c.l.b16 %v714
  %v811 = vunpack.c.h.b16 %v714
  %v812 = vunpack.c.l.b16 %v715
  %v813 = vunpack.c.h.b16 %v715
  %v814 = vunpack.c.l.b16 %v716
  %v815 = vunpack.c.h.b16 %v716
  %v816 = vunpack.c.l.b16 %v717
  %v817 = vunpack.c.h.b16 %v717
  %v818 = vunpack.c.l.b16 %v718
  %v819 = vunpack.c.h.b16 %v718
  %v820 = vunpack.c.l.b16 %v719
  %v821 = vunpack.c.h.b16 %v719
  %v822 = vunpack.c.l.b16 %v720
  %v823 = vunpack.c.h.b16 %v720
  %v824 = vunpack.c.l.b16 %v721
  %v825 = vunpack.c.h.b16 %v721
  %v826 = vunpack.c.l.b16 %v722
  %v827 = vunpack.c.h.b16 %v722
  %v828 = vunpack.c.l.b16 %v723
  %v829 = vunpack.c.h.b16 %v723
  %v830 = vunpack.c.l.b16 %v724
  %v831 = vunpack.c.h.b16 %v724
  %v832 = vunpack.c.l.b16 %v725
  %v833 = vunpack.c.h.b16 %v725
  %v834 = vpack.c.b16 %v766, %v762
  %v835 = vpack.c.b16 %v767, %v763
  %v836 = vpack.c.b16 %v768, %v764
  %v837 = vpack.c.b16 %v769, %v765
  %v838 = vpack.c.b16 %v774, %v770
  %v839 = vpack.c.b16 %v775, %v771
  %v840 = vpack.c.b16 %v776, %v772
  %v841 = vpack.c.b16 %v777, %v773
  %v842 = vpack.c.b16 %v782, %v778
  %v843 = vpack.c.b16 %v783, %v779
  %v844 = vpack.c.b16 %v784, %v780
  %v845 = vpack.c.b16 %v785, %v781
  %v846 = vpack.c.b16 %v790, %v786
  %v847 = vpack.c.b16 %v791, %v787
  %v848 = vpack.c.b16 %v792, %v788
  %v849 = vpack.c.b16 %v793, %v789
  %v850 = vpack.c.b16 %v798, %v794
  %v851 = vpack.c.b16 %v799, %v795
  %v852 = vpack.c.b16 %v800, %v796
  %v853 = vpack.c.b16 %v801, %v797
  %v854 = vpack.c.b16 %v806, %v802
  %v855 = vpack.c.b16 %v807, %v803
  %v856 = vpack.c.b16 %v808, %v804
  %v857 = vpack.c.b16 %v809, %v805
  %v858 = vpack.c.b16 %v814, %v810
  %v859 = vpack.c.b16 %v815, %v811
  %v860 = vpack.c.b16 %v816, %v812
  %v861 = vpack.c.b16 %v817, %v813
  %v862 = vpack.c.b16 %v822, %v818
  %v863 = vpack.c.b16 %v823, %v819
  %v864 = vpack.c.b16 %v824, %v820
  %v865 = vpack.c.b16 %v825, %v821
  %v866 = vpack.c.b16 %v830, %v826
  %v867 = vpack.c.b16 %v831, %v827
  %v868 = vpack.c.b16 %v832, %v828
  %v869 = vpack.c.b16 %v833, %v829
  %906 = vmatprep.subr.bf16.mxu0 %v835
  %907 = vmatpush1.bf16.msra.mxu0 %v834
  %908 = vmatprep.subr.bf16.mxu0 %v839
  %909 = vmatpush1.bf16.msra.mxu0 %v838
  %910 = vmatprep.subr.bf16.mxu0 %v843
  %911 = vmatpush1.bf16.msra.mxu0 %v842
  %912 = vmatprep.subr.bf16.mxu0 %v847
  %913 = vmatpush1.bf16.msra.mxu0 %v846
  %914 = vmatprep.subr.bf16.mxu0 %v851
  %915 = vmatpush1.bf16.msra.mxu0 %v850
  %916 = vmatprep.subr.bf16.mxu0 %v855
  %917 = vmatpush1.bf16.msra.mxu0 %v854
  %918 = vmatprep.subr.bf16.mxu0 %v859
  %919 = vmatpush1.bf16.msra.mxu0 %v858
  %920 = vmatprep.subr.bf16.mxu0 %v863
  %921 = vmatpush1.bf16.msra.mxu0 %v862
  %922 = vmatprep.subr.bf16.mxu0 %v867
  %923 = vmatpush1.bf16.msra.mxu0 %v866
  %924 = vmatprep.subr.bf16.mxu0 0
  %925 = vmatpush1.bf16.msra.mxu0 0
  %926 = vmatprep.subr.bf16.mxu0 0
  %927 = vmatpush1.bf16.msra.mxu0 0
  %928 = vmatprep.subr.bf16.mxu0 0
  %929 = vmatpush1.bf16.msra.mxu0 0
  %930 = vmatprep.subr.bf16.mxu0 0
  %931 = vmatpush1.bf16.msra.mxu0 0
  %932 = vmatprep.subr.bf16.mxu0 0
  %933 = vmatpush1.bf16.msra.mxu0 0
  %934 = vmatprep.subr.bf16.mxu0 0
  %935 = vmatpush1.bf16.msra.mxu0 0
  %936 = vmatprep.subr.bf16.mxu0 0
  %937 = vmatpush1.bf16.msra.mxu0 0
  %938 = vmatprep.mubr.bf16.mxu0 %v255
  %939 = vmatmul.mubr.bf16.gmra.mrb[0].mxu0 %v67
  %v940 = vpop.f32.mrb[0].mxu0
  %v941 = vadd.f32 0.0, %v940
  %v942 = vpop.f32.mrb[0].mxu0
  %v943 = vadd.f32 0.0, %v942
  %v944 = vpop.f32.mrb[0].mxu0
  %v945 = vadd.f32 0.0, %v944
  %v946 = vpop.f32.mrb[0].mxu0
  %v947 = vadd.f32 0.0, %v946
  %948 = vmatprep.mubr.bf16.mxu0 %v258
  %949 = vmatmul.mubr.bf16.gmra.mrb[0].mxu0 %v69
  %v950 = vpop.f32.mrb[0].mxu0
  %v951 = vadd.f32 0.0, %v950
  %v952 = vpop.f32.mrb[0].mxu0
  %v953 = vadd.f32 0.0, %v952
  %v954 = vpop.f32.mrb[0].mxu0
  %v955 = vadd.f32 0.0, %v954
  %v956 = vpop.f32.mrb[0].mxu0
  %v957 = vadd.f32 0.0, %v956
  %958 = vdwg.mxu0
  %959 = vmatprep.subr.bf16.mxu0 %v837
  %960 = vmatpush1.bf16.msra.mxu0 %v836
  %961 = vmatprep.subr.bf16.mxu0 %v841
  %962 = vmatpush1.bf16.msra.mxu0 %v840
  %963 = vmatprep.subr.bf16.mxu0 %v845
  %964 = vmatpush1.bf16.msra.mxu0 %v844
  %965 = vmatprep.subr.bf16.mxu0 %v849
  %966 = vmatpush1.bf16.msra.mxu0 %v848
  %967 = vmatprep.subr.bf16.mxu0 %v853
  %968 = vmatpush1.bf16.msra.mxu0 %v852
  %969 = vmatprep.subr.bf16.mxu0 %v857
  %970 = vmatpush1.bf16.msra.mxu0 %v856
  %971 = vmatprep.subr.bf16.mxu0 %v861
  %972 = vmatpush1.bf16.msra.mxu0 %v860
  %973 = vmatprep.subr.bf16.mxu0 %v865
  %974 = vmatpush1.bf16.msra.mxu0 %v864
  %975 = vmatprep.subr.bf16.mxu0 %v869
  %976 = vmatpush1.bf16.msra.mxu0 %v868
  %977 = vmatprep.subr.bf16.mxu0 0
  %978 = vmatpush1.bf16.msra.mxu0 0
  %979 = vmatprep.subr.bf16.mxu0 0
  %980 = vmatpush1.bf16.msra.mxu0 0
  %981 = vmatprep.subr.bf16.mxu0 0
  %982 = vmatpush1.bf16.msra.mxu0 0
  %983 = vmatprep.subr.bf16.mxu0 0
  %984 = vmatpush1.bf16.msra.mxu0 0
  %985 = vmatprep.subr.bf16.mxu0 0
  %986 = vmatpush1.bf16.msra.mxu0 0
  %987 = vmatprep.subr.bf16.mxu0 0
  %988 = vmatpush1.bf16.msra.mxu0 0
  %989 = vmatprep.subr.bf16.mxu0 0
  %990 = vmatpush1.bf16.msra.mxu0 0
  %991 = vmatprep.mubr.bf16.mxu0 %v255
  %992 = vmatmul.mubr.bf16.gmra.mrb[0].mxu0 %v67
  %v993 = vpop.f32.mrb[0].mxu0
  %v994 = vadd.f32 0.0, %v993
  %v995 = vpop.f32.mrb[0].mxu0
  %v996 = vadd.f32 0.0, %v995
  %v997 = vpop.f32.mrb[0].mxu0
  %v998 = vadd.f32 0.0, %v997
  %v999 = vpop.f32.mrb[0].mxu0
  %v1000 = vadd.f32 0.0, %v999
  %1001 = vmatprep.mubr.bf16.mxu0 %v258
  %1002 = vmatmul.mubr.bf16.gmra.mrb[0].mxu0 %v69
  %v1003 = vpop.f32.mrb[0].mxu0
  %v1004 = vadd.f32 0.0, %v1003
  %v1005 = vpop.f32.mrb[0].mxu0
  %v1006 = vadd.f32 0.0, %v1005
  %v1007 = vpop.f32.mrb[0].mxu0
  %v1008 = vadd.f32 0.0, %v1007
  %v1009 = vpop.f32.mrb[0].mxu0
  %v1010 = vadd.f32 0.0, %v1009
  %1011 = vdwg.mxu0
  %s1012 = scalar_lea.vmem %s0, 864
  %v1013 = vld [vmem:[%s1012] sm:$0xff]
  %v1014 = vld [vmem:[%s1012 + $0x8] sm:$0xff]
  %v1015 = vld [vmem:[%s1012 + $0x10] sm:$0xff]
  %v1016 = vld [vmem:[%s1012 + $0x18] sm:$0xff]
  %v1017 = vld [vmem:[%s1012 + $0x20] sm:$0xff]
  %v1018 = vld [vmem:[%s1012 + $0x28] sm:$0xff]
  %v1019 = vld [vmem:[%s1012 + $0x30] sm:$0xff]
  %v1020 = vld [vmem:[%s1012 + $0x38] sm:$0xff]
  %v1021 = vld [vmem:[%s1012 + $0x40] sm:$0xff]
  %v1022 = vld [vmem:[%s1012 + $0x48] sm:$0xff]
  %v1023 = vld [vmem:[%s1012 + $0x50] sm:$0xff]
  %v1024 = vld [vmem:[%s1012 + $0x58] sm:$0xff]
  %v1025 = vld [vmem:[%s1012 + $0x60] sm:$0xff]
  %v1026 = vld [vmem:[%s1012 + $0x68] sm:$0xff]
  %v1027 = vld [vmem:[%s1012 + $0x70] sm:$0xff]
  %v1028 = vld [vmem:[%s1012 + $0x78] sm:$0xff]
  %v1029 = vld [vmem:[%s1012 + $0x80] sm:$0xff]
  %v1030 = vld [vmem:[%s1012 + $0x88] sm:$0xff]
  %v1031 = vld [vmem:[%s1012 + $0x90] sm:$0xff]
  %v1032 = vld [vmem:[%s1012 + $0x98] sm:$0xff]
  %v1033 = vld [vmem:[%s1012 + $0xa0] sm:$0xff]
  %v1034 = vld [vmem:[%s1012 + $0xa8] sm:$0xff]
  %v1035 = vld [vmem:[%s1012 + $0xb0] sm:$0xff]
  %v1036 = vld [vmem:[%s1012 + $0xb8] sm:$0xff]
  %v1037 = vld [vmem:[%s1012 + $0xc0] sm:$0xff]
  %v1038 = vld [vmem:[%s1012 + $0xc8] sm:$0xff]
  %v1039 = vld [vmem:[%s1012 + $0xd0] sm:$0xff]
  %v1040 = vld [vmem:[%s1012 + $0xd8] sm:$0xff]
  %v1041 = vld [vmem:[%s1012 + $0xe0] sm:$0xff]
  %v1042 = vld [vmem:[%s1012 + $0xe8] sm:$0xff]
  %v1043 = vld [vmem:[%s1012 + $0xf0] sm:$0xff]
  %v1044 = vld [vmem:[%s1012 + $0xf8] sm:$0xff]
  %v1045 = vld [vmem:[%s1012 + $0x100] sm:$0xff]
  %v1046 = vld [vmem:[%s1012 + $0x108] sm:$0xff]
  %v1047 = vld [vmem:[%s1012 + $0x110] sm:$0xff]
  %v1048 = vld [vmem:[%s1012 + $0x118] sm:$0xff]
  %v1085 = vunpack.c.l.b16 %v1013
  %v1086 = vunpack.c.h.b16 %v1013
  %v1087 = vunpack.c.l.b16 %v1014
  %v1088 = vunpack.c.h.b16 %v1014
  %v1089 = vunpack.c.l.b16 %v1015
  %v1090 = vunpack.c.h.b16 %v1015
  %v1091 = vunpack.c.l.b16 %v1016
  %v1092 = vunpack.c.h.b16 %v1016
  %v1093 = vunpack.c.l.b16 %v1017
  %v1094 = vunpack.c.h.b16 %v1017
  %v1095 = vunpack.c.l.b16 %v1018
  %v1096 = vunpack.c.h.b16 %v1018
  %v1097 = vunpack.c.l.b16 %v1019
  %v1098 = vunpack.c.h.b16 %v1019
  %v1099 = vunpack.c.l.b16 %v1020
  %v1100 = vunpack.c.h.b16 %v1020
  %v1101 = vunpack.c.l.b16 %v1021
  %v1102 = vunpack.c.h.b16 %v1021
  %v1103 = vunpack.c.l.b16 %v1022
  %v1104 = vunpack.c.h.b16 %v1022
  %v1105 = vunpack.c.l.b16 %v1023
  %v1106 = vunpack.c.h.b16 %v1023
  %v1107 = vunpack.c.l.b16 %v1024
  %v1108 = vunpack.c.h.b16 %v1024
  %v1109 = vunpack.c.l.b16 %v1025
  %v1110 = vunpack.c.h.b16 %v1025
  %v1111 = vunpack.c.l.b16 %v1026
  %v1112 = vunpack.c.h.b16 %v1026
  %v1113 = vunpack.c.l.b16 %v1027
  %v1114 = vunpack.c.h.b16 %v1027
  %v1115 = vunpack.c.l.b16 %v1028
  %v1116 = vunpack.c.h.b16 %v1028
  %v1117 = vunpack.c.l.b16 %v1029
  %v1118 = vunpack.c.h.b16 %v1029
  %v1119 = vunpack.c.l.b16 %v1030
  %v1120 = vunpack.c.h.b16 %v1030
  %v1121 = vunpack.c.l.b16 %v1031
  %v1122 = vunpack.c.h.b16 %v1031
  %v1123 = vunpack.c.l.b16 %v1032
  %v1124 = vunpack.c.h.b16 %v1032
  %v1125 = vunpack.c.l.b16 %v1033
  %v1126 = vunpack.c.h.b16 %v1033
  %v1127 = vunpack.c.l.b16 %v1034
  %v1128 = vunpack.c.h.b16 %v1034
  %v1129 = vunpack.c.l.b16 %v1035
  %v1130 = vunpack.c.h.b16 %v1035
  %v1131 = vunpack.c.l.b16 %v1036
  %v1132 = vunpack.c.h.b16 %v1036
  %v1133 = vunpack.c.l.b16 %v1037
  %v1134 = vunpack.c.h.b16 %v1037
  %v1135 = vunpack.c.l.b16 %v1038
  %v1136 = vunpack.c.h.b16 %v1038
  %v1137 = vunpack.c.l.b16 %v1039
  %v1138 = vunpack.c.h.b16 %v1039
  %v1139 = vunpack.c.l.b16 %v1040
  %v1140 = vunpack.c.h.b16 %v1040
  %v1141 = vunpack.c.l.b16 %v1041
  %v1142 = vunpack.c.h.b16 %v1041
  %v1143 = vunpack.c.l.b16 %v1042
  %v1144 = vunpack.c.h.b16 %v1042
  %v1145 = vunpack.c.l.b16 %v1043
  %v1146 = vunpack.c.h.b16 %v1043
  %v1147 = vunpack.c.l.b16 %v1044
  %v1148 = vunpack.c.h.b16 %v1044
  %v1149 = vunpack.c.l.b16 %v1045
  %v1150 = vunpack.c.h.b16 %v1045
  %v1151 = vunpack.c.l.b16 %v1046
  %v1152 = vunpack.c.h.b16 %v1046
  %v1153 = vunpack.c.l.b16 %v1047
  %v1154 = vunpack.c.h.b16 %v1047
  %v1155 = vunpack.c.l.b16 %v1048
  %v1156 = vunpack.c.h.b16 %v1048
  %v1157 = vpack.c.b16 %v1089, %v1085
  %v1158 = vpack.c.b16 %v1090, %v1086
  %v1159 = vpack.c.b16 %v1091, %v1087
  %v1160 = vpack.c.b16 %v1092, %v1088
  %v1161 = vpack.c.b16 %v1097, %v1093
  %v1162 = vpack.c.b16 %v1098, %v1094
  %v1163 = vpack.c.b16 %v1099, %v1095
  %v1164 = vpack.c.b16 %v1100, %v1096
  %v1165 = vpack.c.b16 %v1105, %v1101
  %v1166 = vpack.c.b16 %v1106, %v1102
  %v1167 = vpack.c.b16 %v1107, %v1103
  %v1168 = vpack.c.b16 %v1108, %v1104
  %v1169 = vpack.c.b16 %v1113, %v1109
  %v1170 = vpack.c.b16 %v1114, %v1110
  %v1171 = vpack.c.b16 %v1115, %v1111
  %v1172 = vpack.c.b16 %v1116, %v1112
  %v1173 = vpack.c.b16 %v1121, %v1117
  %v1174 = vpack.c.b16 %v1122, %v1118
  %v1175 = vpack.c.b16 %v1123, %v1119
  %v1176 = vpack.c.b16 %v1124, %v1120
  %v1177 = vpack.c.b16 %v1129, %v1125
  %v1178 = vpack.c.b16 %v1130, %v1126
  %v1179 = vpack.c.b16 %v1131, %v1127
  %v1180 = vpack.c.b16 %v1132, %v1128
  %v1181 = vpack.c.b16 %v1137, %v1133
  %v1182 = vpack.c.b16 %v1138, %v1134
  %v1183 = vpack.c.b16 %v1139, %v1135
  %v1184 = vpack.c.b16 %v1140, %v1136
  %v1185 = vpack.c.b16 %v1145, %v1141
  %v1186 = vpack.c.b16 %v1146, %v1142
  %v1187 = vpack.c.b16 %v1147, %v1143
  %v1188 = vpack.c.b16 %v1148, %v1144
  %v1189 = vpack.c.b16 %v1153, %v1149
  %v1190 = vpack.c.b16 %v1154, %v1150
  %v1191 = vpack.c.b16 %v1155, %v1151
  %v1192 = vpack.c.b16 %v1156, %v1152
  %1229 = vmatprep.subr.bf16.mxu0 %v1158
  %1230 = vmatpush1.bf16.msra.mxu0 %v1157
  %1231 = vmatprep.subr.bf16.mxu0 %v1162
  %1232 = vmatpush1.bf16.msra.mxu0 %v1161
  %1233 = vmatprep.subr.bf16.mxu0 %v1166
  %1234 = vmatpush1.bf16.msra.mxu0 %v1165
  %1235 = vmatprep.subr.bf16.mxu0 %v1170
  %1236 = vmatpush1.bf16.msra.mxu0 %v1169
  %1237 = vmatprep.subr.bf16.mxu0 %v1174
  %1238 = vmatpush1.bf16.msra.mxu0 %v1173
  %1239 = vmatprep.subr.bf16.mxu0 %v1178
  %1240 = vmatpush1.bf16.msra.mxu0 %v1177
  %1241 = vmatprep.subr.bf16.mxu0 %v1182
  %1242 = vmatpush1.bf16.msra.mxu0 %v1181
  %1243 = vmatprep.subr.bf16.mxu0 %v1186
  %1244 = vmatpush1.bf16.msra.mxu0 %v1185
  %1245 = vmatprep.subr.bf16.mxu0 %v1190
  %1246 = vmatpush1.bf16.msra.mxu0 %v1189
  %1247 = vmatprep.subr.bf16.mxu0 0
  %1248 = vmatpush1.bf16.msra.mxu0 0
  %1249 = vmatprep.subr.bf16.mxu0 0
  %1250 = vmatpush1.bf16.msra.mxu0 0
  %1251 = vmatprep.subr.bf16.mxu0 0
  %1252 = vmatpush1.bf16.msra.mxu0 0
  %1253 = vmatprep.subr.bf16.mxu0 0
  %1254 = vmatpush1.bf16.msra.mxu0 0
  %1255 = vmatprep.subr.bf16.mxu0 0
  %1256 = vmatpush1.bf16.msra.mxu0 0
  %1257 = vmatprep.subr.bf16.mxu0 0
  %1258 = vmatpush1.bf16.msra.mxu0 0
  %1259 = vmatprep.subr.bf16.mxu0 0
  %1260 = vmatpush1.bf16.msra.mxu0 0
  %1261 = vmatprep.mubr.bf16.mxu0 %v255
  %1262 = vmatmul.mubr.bf16.gmra.mrb[0].mxu0 %v67
  %v1263 = vpop.f32.mrb[0].mxu0
  %v1264 = vadd.f32 0.0, %v1263
  %v1265 = vpop.f32.mrb[0].mxu0
  %v1266 = vadd.f32 0.0, %v1265
  %v1267 = vpop.f32.mrb[0].mxu0
  %v1268 = vadd.f32 0.0, %v1267
  %v1269 = vpop.f32.mrb[0].mxu0
  %v1270 = vadd.f32 0.0, %v1269
  %1271 = vmatprep.mubr.bf16.mxu0 %v258
  %1272 = vmatmul.mubr.bf16.gmra.mrb[0].mxu0 %v69
  %v1273 = vpop.f32.mrb[0].mxu0
  %v1274 = vadd.f32 0.0, %v1273
  %v1275 = vpop.f32.mrb[0].mxu0
  %v1276 = vadd.f32 0.0, %v1275
  %v1277 = vpop.f32.mrb[0].mxu0
  %v1278 = vadd.f32 0.0, %v1277
  %v1279 = vpop.f32.mrb[0].mxu0
  %v1280 = vadd.f32 0.0, %v1279
  %1281 = vdwg.mxu0
  %1282 = vmatprep.subr.bf16.mxu0 %v1160
  %1283 = vmatpush1.bf16.msra.mxu0 %v1159
  %1284 = vmatprep.subr.bf16.mxu0 %v1164
  %1285 = vmatpush1.bf16.msra.mxu0 %v1163
  %1286 = vmatprep.subr.bf16.mxu0 %v1168
  %1287 = vmatpush1.bf16.msra.mxu0 %v1167
  %1288 = vmatprep.subr.bf16.mxu0 %v1172
  %1289 = vmatpush1.bf16.msra.mxu0 %v1171
  %1290 = vmatprep.subr.bf16.mxu0 %v1176
  %1291 = vmatpush1.bf16.msra.mxu0 %v1175
  %1292 = vmatprep.subr.bf16.mxu0 %v1180
  %1293 = vmatpush1.bf16.msra.mxu0 %v1179
  %1294 = vmatprep.subr.bf16.mxu0 %v1184
  %1295 = vmatpush1.bf16.msra.mxu0 %v1183
  %1296 = vmatprep.subr.bf16.mxu0 %v1188
  %1297 = vmatpush1.bf16.msra.mxu0 %v1187
  %1298 = vmatprep.subr.bf16.mxu0 %v1192
  %1299 = vmatpush1.bf16.msra.mxu0 %v1191
  %1300 = vmatprep.subr.bf16.mxu0 0
  %1301 = vmatpush1.bf16.msra.mxu0 0
  %1302 = vmatprep.subr.bf16.mxu0 0
  %1303 = vmatpush1.bf16.msra.mxu0 0
  %1304 = vmatprep.subr.bf16.mxu0 0
  %1305 = vmatpush1.bf16.msra.mxu0 0
  %1306 = vmatprep.subr.bf16.mxu0 0
  %1307 = vmatpush1.bf16.msra.mxu0 0
  %1308 = vmatprep.subr.bf16.mxu0 0
  %1309 = vmatpush1.bf16.msra.mxu0 0
  %1310 = vmatprep.subr.bf16.mxu0 0
  %1311 = vmatpush1.bf16.msra.mxu0 0
  %1312 = vmatprep.subr.bf16.mxu0 0
  %1313 = vmatpush1.bf16.msra.mxu0 0
  %1314 = vmatprep.mubr.bf16.mxu0 %v255
  %1315 = vmatmul.mubr.bf16.gmra.mrb[0].mxu0 %v67
  %v1316 = vpop.f32.mrb[0].mxu0
  %v1317 = vadd.f32 0.0, %v1316
  %v1318 = vpop.f32.mrb[0].mxu0
  %v1319 = vadd.f32 0.0, %v1318
  %v1320 = vpop.f32.mrb[0].mxu0
  %v1321 = vadd.f32 0.0, %v1320
  %v1322 = vpop.f32.mrb[0].mxu0
  %v1323 = vadd.f32 0.0, %v1322
  %1324 = vmatprep.mubr.bf16.mxu0 %v258
  %1325 = vmatmul.mubr.bf16.gmra.mrb[0].mxu0 %v69
  %v1326 = vpop.f32.mrb[0].mxu0
  %v1327 = vadd.f32 0.0, %v1326
  %v1328 = vpop.f32.mrb[0].mxu0
  %v1329 = vadd.f32 0.0, %v1328
  %v1330 = vpop.f32.mrb[0].mxu0
  %v1331 = vadd.f32 0.0, %v1330
  %v1332 = vpop.f32.mrb[0].mxu0
  %v1333 = vadd.f32 0.0, %v1332
  %1334 = vdwg.mxu0
  %v1335 = vmax.f32 %v295, %v618
  %v1336 = vmax.f32 %v297, %v620
  %v1337 = vmax.f32 %v348, %v671
  %v1338 = vmax.f32 %v350, %v673
  %v1339 = vmax.f32 %v299, %v622
  %v1340 = vmax.f32 %v301, %v624
  %v1341 = vmax.f32 %v352, %v675
  %v1342 = vmax.f32 %v354, %v677
  %v1343 = vmax.f32 %v305, %v628
  %v1344 = vmax.f32 %v307, %v630
  %v1345 = vmax.f32 %v358, %v681
  %v1346 = vmax.f32 %v360, %v683
  %v1347 = vmax.f32 %v309, %v632
  %v1348 = vmax.f32 %v311, %v634
  %v1349 = vmax.f32 %v362, %v685
  %v1350 = vmax.f32 %v364, %v687
  %v1351 = vmax.f32 %v941, %v1264
  %v1352 = vmax.f32 %v943, %v1266
  %v1353 = vmax.f32 %v994, %v1317
  %v1354 = vmax.f32 %v996, %v1319
  %v1355 = vmax.f32 %v945, %v1268
  %v1356 = vmax.f32 %v947, %v1270
  %v1357 = vmax.f32 %v998, %v1321
  %v1358 = vmax.f32 %v1000, %v1323
  %v1359 = vmax.f32 %v951, %v1274
  %v1360 = vmax.f32 %v953, %v1276
  %v1361 = vmax.f32 %v1004, %v1327
  %v1362 = vmax.f32 %v1006, %v1329
  %v1363 = vmax.f32 %v955, %v1278
  %v1364 = vmax.f32 %v957, %v1280
  %v1365 = vmax.f32 %v1008, %v1331
  %v1366 = vmax.f32 %v1010, %v1333
  %v1367 = vmax.f32 %v1335, %v1351
  %v1368 = vmax.f32 %v1336, %v1352
  %v1369 = vmax.f32 %v1337, %v1353
  %v1370 = vmax.f32 %v1338, %v1354
  %v1371 = vmax.f32 %v1339, %v1355
  %v1372 = vmax.f32 %v1340, %v1356
  %v1373 = vmax.f32 %v1341, %v1357
  %v1374 = vmax.f32 %v1342, %v1358
  %v1375 = vmax.f32 %v1343, %v1359
  %v1376 = vmax.f32 %v1344, %v1360
  %v1377 = vmax.f32 %v1345, %v1361
  %v1378 = vmax.f32 %v1346, %v1362
  %v1379 = vmax.f32 %v1347, %v1363
  %v1380 = vmax.f32 %v1348, %v1364
  %v1381 = vmax.f32 %v1349, %v1365
  %v1382 = vmax.f32 %v1350, %v1366
  %v1383 = vld [vmem:[%s2] sm:$0xff]
  %v1384 = vld [vmem:[%s2 + $0x8] sm:$0xff]
  %v1385 = vld [vmem:[%s2 + $0x10] sm:$0xff]
  %v1386 = vld [vmem:[%s2 + $0x18] sm:$0xff]
  %1388 = vset.pattern.permute.xlu0 0
  %1389 = vperm.xlu0 %1388, %v1383
  %v1390 = vpop.permute.xlu0 %1389
  %1393 = vset.pattern.permute.xlu0 0
  %1394 = vperm.xlu0 %1393, %v1384
  %v1395 = vpop.permute.xlu0 %1394
  %1398 = vset.pattern.permute.xlu0 0
  %1399 = vperm.xlu0 %1398, %v1385
  %v1400 = vpop.permute.xlu0 %1399
  %1403 = vset.pattern.permute.xlu0 0
  %1404 = vperm.xlu0 %1403, %v1386
  %v1405 = vpop.permute.xlu0 %1404
  %v1407 = vadd.f32 %v1367, %v1390
  %v1408 = vadd.f32 %v1368, %v1390
  %v1409 = vadd.f32 %v1369, %v1390
  %v1410 = vadd.f32 %v1370, %v1390
  %v1411 = vadd.f32 %v1371, %v1395
  %v1412 = vadd.f32 %v1372, %v1395
  %v1413 = vadd.f32 %v1373, %v1395
  %v1414 = vadd.f32 %v1374, %v1395
  %v1415 = vadd.f32 %v1375, %v1400
  %v1416 = vadd.f32 %v1376, %v1400
  %v1417 = vadd.f32 %v1377, %v1400
  %v1418 = vadd.f32 %v1378, %v1400
  %v1419 = vadd.f32 %v1379, %v1405
  %v1420 = vadd.f32 %v1380, %v1405
  %v1421 = vadd.f32 %v1381, %v1405
  %v1422 = vadd.f32 %v1382, %v1405
  %v1423 = vmax.f32 %v1407, 0.0
  %v1424 = vmax.f32 %v1408, 0.0
  %v1425 = vmax.f32 %v1409, 0.0
  %v1426 = vmax.f32 %v1410, 0.0
  %v1427 = vmax.f32 %v1411, 0.0
  %v1428 = vmax.f32 %v1412, 0.0
  %v1429 = vmax.f32 %v1413, 0.0
  %v1430 = vmax.f32 %v1414, 0.0
  %v1431 = vmax.f32 %v1415, 0.0
  %v1432 = vmax.f32 %v1416, 0.0
  %v1433 = vmax.f32 %v1417, 0.0
  %v1434 = vmax.f32 %v1418, 0.0
  %v1435 = vmax.f32 %v1419, 0.0
  %v1436 = vmax.f32 %v1420, 0.0
  %v1437 = vmax.f32 %v1421, 0.0
  %v1438 = vmax.f32 %v1422, 0.0
  %v1439 = vmin.f32 %v1423, 6.0
  %v1440 = vmin.f32 %v1424, 6.0
  %v1441 = vmin.f32 %v1425, 6.0
  %v1442 = vmin.f32 %v1426, 6.0
  %v1443 = vmin.f32 %v1427, 6.0
  %v1444 = vmin.f32 %v1428, 6.0
  %v1445 = vmin.f32 %v1429, 6.0
  %v1446 = vmin.f32 %v1430, 6.0
  %v1447 = vmin.f32 %v1431, 6.0
  %v1448 = vmin.f32 %v1432, 6.0
  %v1449 = vmin.f32 %v1433, 6.0
  %v1450 = vmin.f32 %v1434, 6.0
  %v1451 = vmin.f32 %v1435, 6.0
  %v1452 = vmin.f32 %v1436, 6.0
  %v1453 = vmin.f32 %v1437, 6.0
  %v1454 = vmin.f32 %v1438, 6.0
  %v1455 = vpack.c.bf16 %v1443, %v1439
  %v1456 = vpack.c.bf16 %v1444, %v1440
  %v1457 = vpack.c.bf16 %v1445, %v1441
  %v1458 = vpack.c.bf16 %v1446, %v1442
  %v1459 = vpack.c.bf16 %v1451, %v1447
  %v1460 = vpack.c.bf16 %v1452, %v1448
  %v1461 = vpack.c.bf16 %v1453, %v1449
  %v1462 = vpack.c.bf16 %v1454, %v1450
  %v1471 = vunpack.c.l.b16 %v1455
  %v1472 = vunpack.c.l.b16 %v1456
  %v1473 = vunpack.c.l.b16 %v1457
  %v1474 = vunpack.c.l.b16 %v1458
  %v1475 = vunpack.c.h.b16 %v1455
  %v1476 = vunpack.c.h.b16 %v1456
  %v1477 = vunpack.c.h.b16 %v1457
  %v1478 = vunpack.c.h.b16 %v1458
  %v1479 = vunpack.c.l.b16 %v1459
  %v1480 = vunpack.c.l.b16 %v1460
  %v1481 = vunpack.c.l.b16 %v1461
  %v1482 = vunpack.c.l.b16 %v1462
  %v1483 = vunpack.c.h.b16 %v1459
  %v1484 = vunpack.c.h.b16 %v1460
  %v1485 = vunpack.c.h.b16 %v1461
  %v1486 = vunpack.c.h.b16 %v1462
  %v1487 = vpack.c.b16 %v1472, %v1471
  %v1488 = vpack.c.b16 %v1474, %v1473
  %v1489 = vpack.c.b16 %v1476, %v1475
  %v1490 = vpack.c.b16 %v1478, %v1477
  %v1491 = vpack.c.b16 %v1480, %v1479
  %v1492 = vpack.c.b16 %v1482, %v1481
  %v1493 = vpack.c.b16 %v1484, %v1483
  %v1494 = vpack.c.b16 %v1486, %v1485
  %1503 = vst [vmem:[%s3] sm:$0xff] %v1487
  %1504 = vst [vmem:[%s3 + $0x8] sm:$0xff] %v1488
  %1505 = vst [vmem:[%s3 + $0x10] sm:$0xff] %v1489
  %1506 = vst [vmem:[%s3 + $0x18] sm:$0xff] %v1490
  %1507 = vst [vmem:[%s3 + $0x20] sm:$0xff] %v1491
  %1508 = vst [vmem:[%s3 + $0x28] sm:$0xff] %v1492
  %1509 = vst [vmem:[%s3 + $0x30] sm:$0xff] %v1493
  %1510 = vst [vmem:[%s3 + $0x38] sm:$0xff] %v1494
  // Predicated region
  $region14: #{color_model_forward.5} parent=0 // pred_check
    _
  $region15: #{color_model_forward.5} parent=0 // pred_check_branch
    %1512 = sbr.rel (0) target = $region17
  $region16: #{color_model_forward.5} parent=0 // pred_region
    _
  $region17: #{color_model_forward.5} parent=0 // pred_fallthru
    _
  // Predicated region
  $region18: #{color_model_forward.5} parent=0 // pred_check
    _
  $region19: #{color_model_forward.5} parent=0 // pred_check_branch
    %1514 = sbr.rel (0) target = $region21
  $region20: #{color_model_forward.5} parent=0 // pred_region
    _
  $region21: #{color_model_forward.5} parent=0 // pred_fallthru
    _

// kernel: color_model_forward.6
$region0: #{color_model_forward.6}
  #allocation0 [shape = 'u32[]', space=smem, size = 0x4, offset = 0x4, fixed_abs, tag = 'smem constant byte address 0x4 - core index']
  #allocation1 [shape = 'u32[144,128]{1,0:T(1,128)}', space=vmem, size = 0x12000, scoped, tag = 'internal scratch']
  %s0 = inlined_call_operand.vmem [shape: bf16[4,288,128], index: 0, kind: input, shape index: {}]
  %s1 = inlined_call_operand.vmem [shape: bf16[32,288], index: 1, kind: input, shape index: {}]
  %s2 = inlined_call_operand.vmem [shape: f32[32,1], index: 2, kind: input, shape index: {}]
  %s3 = inlined_call_operand.vmem [shape: bf16[32,128], index: 3, kind: output, shape index: {}]
  %s4 = sld [smem:[#allocation0]]
  $region22: #{color_model_forward.6} parent=0
    _
  %s6 = ssub.s32 1, %s4
  %s7 = scalar_select 0, %s6, %s4
  // Predicated region
  $region2: #{color_model_forward.6} parent=0 // pred_check
    _
  $region3: #{color_model_forward.6} parent=0 // pred_check_branch
    %9 = sbr.rel (0) target = $region5
  $region4: #{color_model_forward.6} parent=0 // pred_region
    _
  $region5: #{color_model_forward.6} parent=0 // pred_fallthru
    _
  // Predicated region
  $region6: #{color_model_forward.6} parent=0 // pred_check
    _
  $region7: #{color_model_forward.6} parent=0 // pred_check_branch
    %11 = sbr.rel (0) target = $region9
  $region8: #{color_model_forward.6} parent=0 // pred_region
    _
  $region9: #{color_model_forward.6} parent=0 // pred_fallthru
    _
  // Predicated region
  $region10: #{color_model_forward.6} parent=0 // pred_check
    _
  $region11: #{color_model_forward.6} parent=0 // pred_check_branch
    %13 = sbr.rel (0) target = $region13
  $region12: #{color_model_forward.6} parent=0 // pred_region
    _
  $region13: #{color_model_forward.6} parent=0 // pred_fallthru
    _
  %v15 = vld [vmem:[%s1] sm:$0xff]
  %v16 = vld [vmem:[%s1 + $0x8] sm:$0xf]
  %v17 = vld [vmem:[%s1 + $0xc] sm:$0xff]
  %v18 = vld [vmem:[%s1 + $0x14] sm:$0xf]
  %v19 = vld [vmem:[%s1 + $0x18] sm:$0xff]
  %v20 = vld [vmem:[%s1 + $0x20] sm:$0xf]
  %v21 = vld [vmem:[%s1 + $0x24] sm:$0xff]
  %v22 = vld [vmem:[%s1 + $0x2c] sm:$0xf]
  %v23 = vld [vmem:[%s0] sm:$0xf]
  %v24 = vld [vmem:[%s0 + $0x4] sm:$0xf]
  %v25 = vld [vmem:[%s0 + $0x8] sm:$0xf]
  %v26 = vld [vmem:[%s0 + $0xc] sm:$0xf]
  %v27 = vld [vmem:[%s0 + $0x10] sm:$0xf]
  %v28 = vld [vmem:[%s0 + $0x14] sm:$0xf]
  %v29 = vld [vmem:[%s0 + $0x18] sm:$0xf]
  %v30 = vld [vmem:[%s0 + $0x1c] sm:$0xf]
  %v31 = vld [vmem:[%s0 + $0x20] sm:$0xf]
  %v32 = vld [vmem:[%s0 + $0x24] sm:$0xf]
  %v33 = vld [vmem:[%s0 + $0x28] sm:$0xf]
  %v34 = vld [vmem:[%s0 + $0x2c] sm:$0xf]
  %v35 = vld [vmem:[%s0 + $0x30] sm:$0xf]
  %v36 = vld [vmem:[%s0 + $0x34] sm:$0xf]
  %v37 = vld [vmem:[%s0 + $0x38] sm:$0xf]
  %v38 = vld [vmem:[%s0 + $0x3c] sm:$0xf]
  %v39 = vld [vmem:[%s0 + $0x40] sm:$0xf]
  %v40 = vld [vmem:[%s0 + $0x44] sm:$0xf]
  %v41 = vld [vmem:[%s0 + $0x48] sm:$0xf]
  %v42 = vld [vmem:[%s0 + $0x4c] sm:$0xf]
  %v43 = vld [vmem:[%s0 + $0x50] sm:$0xf]
  %v44 = vld [vmem:[%s0 + $0x54] sm:$0xf]
  %v45 = vld [vmem:[%s0 + $0x58] sm:$0xf]
  %v46 = vld [vmem:[%s0 + $0x5c] sm:$0xf]
  %v47 = vld [vmem:[%s0 + $0x60] sm:$0xf]
  %v48 = vld [vmem:[%s0 + $0x64] sm:$0xf]
  %v49 = vld [vmem:[%s0 + $0x68] sm:$0xf]
  %v50 = vld [vmem:[%s0 + $0x6c] sm:$0xf]
  %v51 = vld [vmem:[%s0 + $0x70] sm:$0xf]
  %v52 = vld [vmem:[%s0 + $0x74] sm:$0xf]
  %v53 = vld [vmem:[%s0 + $0x78] sm:$0xf]
  %v54 = vld [vmem:[%s0 + $0x7c] sm:$0xf]
  %v55 = vld [vmem:[%s0 + $0x80] sm:$0xf]
  %v56 = vld [vmem:[%s0 + $0x84] sm:$0xf]
  %v57 = vld [vmem:[%s0 + $0x88] sm:$0xf]
  %v58 = vld [vmem:[%s0 + $0x8c] sm:$0xf]
  %v67 = vunpack.c.l.b16 %v15
  %v68 = vunpack.c.h.b16 %v15
  %v69 = vunpack.c.l.b16 %v16
  %v70 = vunpack.c.l.b16 %v17
  %v71 = vunpack.c.h.b16 %v17
  %v72 = vunpack.c.l.b16 %v18
  %v73 = vunpack.c.l.b16 %v19
  %v74 = vunpack.c.h.b16 %v19
  %v75 = vunpack.c.l.b16 %v20
  %v76 = vunpack.c.l.b16 %v21
  %v77 = vunpack.c.h.b16 %v21
  %v78 = vunpack.c.l.b16 %v22
  %v79 = vpack.c.b16 %v70, %v67
  %v80 = vpack.c.b16 %v71, %v68
  %v81 = vpack.c.b16 %v72, %v69
  %v82 = vpack.c.b16 %v76, %v73
  %v83 = vpack.c.b16 %v77, %v74
  %v84 = vpack.c.b16 %v78, %v75
  %v125 = vunpack.c.l.b16 %v23
  %v126 = vunpack.c.l.b16 %v24
  %v127 = vunpack.c.l.b16 %v25
  %v128 = vunpack.c.l.b16 %v26
  %v129 = vunpack.c.l.b16 %v27
  %v130 = vunpack.c.l.b16 %v28
  %v131 = vunpack.c.l.b16 %v29
  %v132 = vunpack.c.l.b16 %v30
  %v133 = vunpack.c.l.b16 %v31
  %v134 = vunpack.c.l.b16 %v32
  %v135 = vunpack.c.l.b16 %v33
  %v136 = vunpack.c.l.b16 %v34
  %v137 = vunpack.c.l.b16 %v35
  %v138 = vunpack.c.l.b16 %v36
  %v139 = vunpack.c.l.b16 %v37
  %v140 = vunpack.c.l.b16 %v38
  %v141 = vunpack.c.l.b16 %v39
  %v142 = vunpack.c.l.b16 %v40
  %v143 = vunpack.c.l.b16 %v41
  %v144 = vunpack.c.l.b16 %v42
  %v145 = vunpack.c.l.b16 %v43
  %v146 = vunpack.c.l.b16 %v44
  %v147 = vunpack.c.l.b16 %v45
  %v148 = vunpack.c.l.b16 %v46
  %v149 = vunpack.c.l.b16 %v47
  %v150 = vunpack.c.l.b16 %v48
  %v151 = vunpack.c.l.b16 %v49
  %v152 = vunpack.c.l.b16 %v50
  %v153 = vunpack.c.l.b16 %v51
  %v154 = vunpack.c.l.b16 %v52
  %v155 = vunpack.c.l.b16 %v53
  %v156 = vunpack.c.l.b16 %v54
  %v157 = vunpack.c.l.b16 %v55
  %v158 = vunpack.c.l.b16 %v56
  %v159 = vunpack.c.l.b16 %v57
  %v160 = vunpack.c.l.b16 %v58
  %v161 = vpack.c.b16 %v126, %v125
  %v162 = vpack.c.b16 %v128, %v127
  %v163 = vpack.c.b16 %v130, %v129
  %v164 = vpack.c.b16 %v132, %v131
  %v165 = vpack.c.b16 %v134, %v133
  %v166 = vpack.c.b16 %v136, %v135
  %v167 = vpack.c.b16 %v138, %v137
  %v168 = vpack.c.b16 %v140, %v139
  %v169 = vpack.c.b16 %v142, %v141
  %v170 = vpack.c.b16 %v144, %v143
  %v171 = vpack.c.b16 %v146, %v145
  %v172 = vpack.c.b16 %v148, %v147
  %v173 = vpack.c.b16 %v150, %v149
  %v174 = vpack.c.b16 %v152, %v151
  %v175 = vpack.c.b16 %v154, %v153
  %v176 = vpack.c.b16 %v156, %v155
  %v177 = vpack.c.b16 %v158, %v157
  %v178 = vpack.c.b16 %v160, %v159
  %vm197 = vcmask 261120
  %v199 = vsel %vm197, %v81, 0
  %v202 = vsel %vm197, %v84, 0
  %204 = vmatprep.subr.bf16.mxu0 0
  %205 = vmatpush1.bf16.msra.mxu0 %v161
  %206 = vmatprep.subr.bf16.mxu0 0
  %207 = vmatpush1.bf16.msra.mxu0 %v162
  %208 = vmatprep.subr.bf16.mxu0 0
  %209 = vmatpush1.bf16.msra.mxu0 %v163
  %210 = vmatprep.subr.bf16.mxu0 0
  %211 = vmatpush1.bf16.msra.mxu0 %v164
  %212 = vmatprep.subr.bf16.mxu0 0
  %213 = vmatpush1.bf16.msra.mxu0 %v165
  %214 = vmatprep.subr.bf16.mxu0 0
  %215 = vmatpush1.bf16.msra.mxu0 %v166
  %216 = vmatprep.subr.bf16.mxu0 0
  %217 = vmatpush1.bf16.msra.mxu0 %v167
  %218 = vmatprep.subr.bf16.mxu0 0
  %219 = vmatpush1.bf16.msra.mxu0 %v168
  %220 = vmatprep.subr.bf16.mxu0 0
  %221 = vmatpush1.bf16.msra.mxu0 %v169
  %222 = vmatprep.subr.bf16.mxu0 0
  %223 = vmatpush1.bf16.msra.mxu0 %v170
  %224 = vmatprep.subr.bf16.mxu0 0
  %225 = vmatpush1.bf16.msra.mxu0 %v171
  %226 = vmatprep.subr.bf16.mxu0 0
  %227 = vmatpush1.bf16.msra.mxu0 %v172
  %228 = vmatprep.subr.bf16.mxu0 0
  %229 = vmatpush1.bf16.msra.mxu0 %v173
  %230 = vmatprep.subr.bf16.mxu0 0
  %231 = vmatpush1.bf16.msra.mxu0 %v174
  %232 = vmatprep.subr.bf16.mxu0 0
  %233 = vmatpush1.bf16.msra.mxu0 %v175
  %234 = vmatprep.subr.bf16.mxu0 0
  %235 = vmatpush1.bf16.msra.mxu0 %v176
  %236 = vmatprep.mubr.bf16.mxu0 %v80
  %237 = vmatmul.mubr.bf16.gmra.mrb[0].mxu0 %v79
  %v238 = vpop.f32.mrb[0].mxu0
  %v239 = vadd.f32 0.0, %v238
  %v240 = vpop.f32.mrb[0].mxu0
  %v241 = vpop.f32.mrb[0].mxu0
  %v242 = vadd.f32 0.0, %v241
  %v243 = vpop.f32.mrb[0].mxu0
  %244 = vmatprep.mubr.bf16.mxu0 %v83
  %245 = vmatmul.mubr.bf16.gmra.mrb[0].mxu0 %v82
  %v246 = vpop.f32.mrb[0].mxu0
  %v247 = vadd.f32 0.0, %v246
  %v248 = vpop.f32.mrb[0].mxu0
  %v249 = vpop.f32.mrb[0].mxu0
  %v250 = vadd.f32 0.0, %v249
  %v251 = vpop.f32.mrb[0].mxu0
  %252 = vdwg.mxu0
  %253 = vmatprep.subr.bf16.mxu0 0
  %254 = vmatpush1.bf16.msra.mxu0 %v177
  %255 = vmatprep.subr.bf16.mxu0 0
  %256 = vmatpush1.bf16.msra.mxu0 %v178
  %257 = vmatprep.subr.bf16.mxu0 0
  %258 = vmatpush1.bf16.msra.mxu0 0
  %259 = vmatprep.subr.bf16.mxu0 0
  %260 = vmatpush1.bf16.msra.mxu0 0
  %261 = vmatprep.subr.bf16.mxu0 0
  %262 = vmatpush1.bf16.msra.mxu0 0
  %263 = vmatprep.subr.bf16.mxu0 0
  %264 = vmatpush1.bf16.msra.mxu0 0
  %265 = vmatprep.subr.bf16.mxu0 0
  %266 = vmatpush1.bf16.msra.mxu0 0
  %267 = vmatprep.subr.bf16.mxu0 0
  %268 = vmatpush1.bf16.msra.mxu0 0
  %269 = vmatprep.subr.bf16.mxu0 0
  %270 = vmatpush1.bf16.msra.mxu0 0
  %271 = vmatprep.subr.bf16.mxu0 0
  %272 = vmatpush1.bf16.msra.mxu0 0
  %273 = vmatprep.subr.bf16.mxu0 0
  %274 = vmatpush1.bf16.msra.mxu0 0
  %275 = vmatprep.subr.bf16.mxu0 0
  %276 = vmatpush1.bf16.msra.mxu0 0
  %277 = vmatprep.subr.bf16.mxu0 0
  %278 = vmatpush1.bf16.msra.mxu0 0
  %279 = vmatprep.subr.bf16.mxu0 0
  %280 = vmatpush1.bf16.msra.mxu0 0
  %281 = vmatprep.subr.bf16.mxu0 0
  %282 = vmatpush1.bf16.msra.mxu0 0
  %283 = vmatprep.subr.bf16.mxu0 0
  %284 = vmatpush1.bf16.msra.mxu0 0
  %285 = vmatprep.mubr.bf16.mxu0 0
  %286 = vmatmul.mubr.bf16.gmra.mrb[0].mxu0 %v199
  %v287 = vpop.f32.mrb[0].mxu0
  %v288 = vadd.f32 %v239, %v287
  %v289 = vpop.f32.mrb[0].mxu0
  %v290 = vpop.f32.mrb[0].mxu0
  %v291 = vadd.f32 %v242, %v290
  %v292 = vpop.f32.mrb[0].mxu0
  %293 = vmatprep.mubr.bf16.mxu0 0
  %294 = vmatmul.mubr.bf16.gmra.mrb[0].mxu0 %v202
  %v295 = vpop.f32.mrb[0].mxu0
  %v296 = vadd.f32 %v247, %v295
  %v297 = vpop.f32.mrb[0].mxu0
  %v298 = vpop.f32.mrb[0].mxu0
  %v299 = vadd.f32 %v250, %v298
  %v300 = vpop.f32.mrb[0].mxu0
  %301 = vdwg.mxu0
  %s302 = scalar_lea.vmem %s0, 144
  %v303 = vld [vmem:[%s302] sm:$0xf]
  %v304 = vld [vmem:[%s302 + $0x4] sm:$0xf]
  %v305 = vld [vmem:[%s302 + $0x8] sm:$0xf]
  %v306 = vld [vmem:[%s302 + $0xc] sm:$0xf]
  %v307 = vld [vmem:[%s302 + $0x10] sm:$0xf]
  %v308 = vld [vmem:[%s302 + $0x14] sm:$0xf]
  %v309 = vld [vmem:[%s302 + $0x18] sm:$0xf]
  %v310 = vld [vmem:[%s302 + $0x1c] sm:$0xf]
  %v311 = vld [vmem:[%s302 + $0x20] sm:$0xf]
  %v312 = vld [vmem:[%s302 + $0x24] sm:$0xf]
  %v313 = vld [vmem:[%s302 + $0x28] sm:$0xf]
  %v314 = vld [vmem:[%s302 + $0x2c] sm:$0xf]
  %v315 = vld [vmem:[%s302 + $0x30] sm:$0xf]
  %v316 = vld [vmem:[%s302 + $0x34] sm:$0xf]
  %v317 = vld [vmem:[%s302 + $0x38] sm:$0xf]
  %v318 = vld [vmem:[%s302 + $0x3c] sm:$0xf]
  %v319 = vld [vmem:[%s302 + $0x40] sm:$0xf]
  %v320 = vld [vmem:[%s302 + $0x44] sm:$0xf]
  %v321 = vld [vmem:[%s302 + $0x48] sm:$0xf]
  %v322 = vld [vmem:[%s302 + $0x4c] sm:$0xf]
  %v323 = vld [vmem:[%s302 + $0x50] sm:$0xf]
  %v324 = vld [vmem:[%s302 + $0x54] sm:$0xf]
  %v325 = vld [vmem:[%s302 + $0x58] sm:$0xf]
  %v326 = vld [vmem:[%s302 + $0x5c] sm:$0xf]
  %v327 = vld [vmem:[%s302 + $0x60] sm:$0xf]
  %v328 = vld [vmem:[%s302 + $0x64] sm:$0xf]
  %v329 = vld [vmem:[%s302 + $0x68] sm:$0xf]
  %v330 = vld [vmem:[%s302 + $0x6c] sm:$0xf]
  %v331 = vld [vmem:[%s302 + $0x70] sm:$0xf]
  %v332 = vld [vmem:[%s302 + $0x74] sm:$0xf]
  %v333 = vld [vmem:[%s302 + $0x78] sm:$0xf]
  %v334 = vld [vmem:[%s302 + $0x7c] sm:$0xf]
  %v335 = vld [vmem:[%s302 + $0x80] sm:$0xf]
  %v336 = vld [vmem:[%s302 + $0x84] sm:$0xf]
  %v337 = vld [vmem:[%s302 + $0x88] sm:$0xf]
  %v338 = vld [vmem:[%s302 + $0x8c] sm:$0xf]
  %v375 = vunpack.c.l.b16 %v303
  %v376 = vunpack.c.l.b16 %v304
  %v377 = vunpack.c.l.b16 %v305
  %v378 = vunpack.c.l.b16 %v306
  %v379 = vunpack.c.l.b16 %v307
  %v380 = vunpack.c.l.b16 %v308
  %v381 = vunpack.c.l.b16 %v309
  %v382 = vunpack.c.l.b16 %v310
  %v383 = vunpack.c.l.b16 %v311
  %v384 = vunpack.c.l.b16 %v312
  %v385 = vunpack.c.l.b16 %v313
  %v386 = vunpack.c.l.b16 %v314
  %v387 = vunpack.c.l.b16 %v315
  %v388 = vunpack.c.l.b16 %v316
  %v389 = vunpack.c.l.b16 %v317
  %v390 = vunpack.c.l.b16 %v318
  %v391 = vunpack.c.l.b16 %v319
  %v392 = vunpack.c.l.b16 %v320
  %v393 = vunpack.c.l.b16 %v321
  %v394 = vunpack.c.l.b16 %v322
  %v395 = vunpack.c.l.b16 %v323
  %v396 = vunpack.c.l.b16 %v324
  %v397 = vunpack.c.l.b16 %v325
  %v398 = vunpack.c.l.b16 %v326
  %v399 = vunpack.c.l.b16 %v327
  %v400 = vunpack.c.l.b16 %v328
  %v401 = vunpack.c.l.b16 %v329
  %v402 = vunpack.c.l.b16 %v330
  %v403 = vunpack.c.l.b16 %v331
  %v404 = vunpack.c.l.b16 %v332
  %v405 = vunpack.c.l.b16 %v333
  %v406 = vunpack.c.l.b16 %v334
  %v407 = vunpack.c.l.b16 %v335
  %v408 = vunpack.c.l.b16 %v336
  %v409 = vunpack.c.l.b16 %v337
  %v410 = vunpack.c.l.b16 %v338
  %v411 = vpack.c.b16 %v376, %v375
  %v412 = vpack.c.b16 %v378, %v377
  %v413 = vpack.c.b16 %v380, %v379
  %v414 = vpack.c.b16 %v382, %v381
  %v415 = vpack.c.b16 %v384, %v383
  %v416 = vpack.c.b16 %v386, %v385
  %v417 = vpack.c.b16 %v388, %v387
  %v418 = vpack.c.b16 %v390, %v389
  %v419 = vpack.c.b16 %v392, %v391
  %v420 = vpack.c.b16 %v394, %v393
  %v421 = vpack.c.b16 %v396, %v395
  %v422 = vpack.c.b16 %v398, %v397
  %v423 = vpack.c.b16 %v400, %v399
  %v424 = vpack.c.b16 %v402, %v401
  %v425 = vpack.c.b16 %v404, %v403
  %v426 = vpack.c.b16 %v406, %v405
  %v427 = vpack.c.b16 %v408, %v407
  %v428 = vpack.c.b16 %v410, %v409
  %447 = vmatprep.subr.bf16.mxu0 0
  %448 = vmatpush1.bf16.msra.mxu0 %v411
  %449 = vmatprep.subr.bf16.mxu0 0
  %450 = vmatpush1.bf16.msra.mxu0 %v412
  %451 = vmatprep.subr.bf16.mxu0 0
  %452 = vmatpush1.bf16.msra.mxu0 %v413
  %453 = vmatprep.subr.bf16.mxu0 0
  %454 = vmatpush1.bf16.msra.mxu0 %v414
  %455 = vmatprep.subr.bf16.mxu0 0
  %456 = vmatpush1.bf16.msra.mxu0 %v415
  %457 = vmatprep.subr.bf16.mxu0 0
  %458 = vmatpush1.bf16.msra.mxu0 %v416
  %459 = vmatprep.subr.bf16.mxu0 0
  %460 = vmatpush1.bf16.msra.mxu0 %v417
  %461 = vmatprep.subr.bf16.mxu0 0
  %462 = vmatpush1.bf16.msra.mxu0 %v418
  %463 = vmatprep.subr.bf16.mxu0 0
  %464 = vmatpush1.bf16.msra.mxu0 %v419
  %465 = vmatprep.subr.bf16.mxu0 0
  %466 = vmatpush1.bf16.msra.mxu0 %v420
  %467 = vmatprep.subr.bf16.mxu0 0
  %468 = vmatpush1.bf16.msra.mxu0 %v421
  %469 = vmatprep.subr.bf16.mxu0 0
  %470 = vmatpush1.bf16.msra.mxu0 %v422
  %471 = vmatprep.subr.bf16.mxu0 0
  %472 = vmatpush1.bf16.msra.mxu0 %v423
  %473 = vmatprep.subr.bf16.mxu0 0
  %474 = vmatpush1.bf16.msra.mxu0 %v424
  %475 = vmatprep.subr.bf16.mxu0 0
  %476 = vmatpush1.bf16.msra.mxu0 %v425
  %477 = vmatprep.subr.bf16.mxu0 0
  %478 = vmatpush1.bf16.msra.mxu0 %v426
  %479 = vmatprep.mubr.bf16.mxu0 %v80
  %480 = vmatmul.mubr.bf16.gmra.mrb[0].mxu0 %v79
  %v481 = vpop.f32.mrb[0].mxu0
  %v482 = vadd.f32 0.0, %v481
  %v483 = vpop.f32.mrb[0].mxu0
  %v484 = vpop.f32.mrb[0].mxu0
  %v485 = vadd.f32 0.0, %v484
  %v486 = vpop.f32.mrb[0].mxu0
  %487 = vmatprep.mubr.bf16.mxu0 %v83
  %488 = vmatmul.mubr.bf16.gmra.mrb[0].mxu0 %v82
  %v489 = vpop.f32.mrb[0].mxu0
  %v490 = vadd.f32 0.0, %v489
  %v491 = vpop.f32.mrb[0].mxu0
  %v492 = vpop.f32.mrb[0].mxu0
  %v493 = vadd.f32 0.0, %v492
  %v494 = vpop.f32.mrb[0].mxu0
  %495 = vdwg.mxu0
  %496 = vmatprep.subr.bf16.mxu0 0
  %497 = vmatpush1.bf16.msra.mxu0 %v427
  %498 = vmatprep.subr.bf16.mxu0 0
  %499 = vmatpush1.bf16.msra.mxu0 %v428
  %500 = vmatprep.subr.bf16.mxu0 0
  %501 = vmatpush1.bf16.msra.mxu0 0
  %502 = vmatprep.subr.bf16.mxu0 0
  %503 = vmatpush1.bf16.msra.mxu0 0
  %504 = vmatprep.subr.bf16.mxu0 0
  %505 = vmatpush1.bf16.msra.mxu0 0
  %506 = vmatprep.subr.bf16.mxu0 0
  %507 = vmatpush1.bf16.msra.mxu0 0
  %508 = vmatprep.subr.bf16.mxu0 0
  %509 = vmatpush1.bf16.msra.mxu0 0
  %510 = vmatprep.subr.bf16.mxu0 0
  %511 = vmatpush1.bf16.msra.mxu0 0
  %512 = vmatprep.subr.bf16.mxu0 0
  %513 = vmatpush1.bf16.msra.mxu0 0
  %514 = vmatprep.subr.bf16.mxu0 0
  %515 = vmatpush1.bf16.msra.mxu0 0
  %516 = vmatprep.subr.bf16.mxu0 0
  %517 = vmatpush1.bf16.msra.mxu0 0
  %518 = vmatprep.subr.bf16.mxu0 0
  %519 = vmatpush1.bf16.msra.mxu0 0
  %520 = vmatprep.subr.bf16.mxu0 0
  %521 = vmatpush1.bf16.msra.mxu0 0
  %522 = vmatprep.subr.bf16.mxu0 0
  %523 = vmatpush1.bf16.msra.mxu0 0
  %524 = vmatprep.subr.bf16.mxu0 0
  %525 = vmatpush1.bf16.msra.mxu0 0
  %526 = vmatprep.subr.bf16.mxu0 0
  %527 = vmatpush1.bf16.msra.mxu0 0
  %528 = vmatprep.mubr.bf16.mxu0 0
  %529 = vmatmul.mubr.bf16.gmra.mrb[0].mxu0 %v199
  %v530 = vpop.f32.mrb[0].mxu0
  %v531 = vadd.f32 %v482, %v530
  %v532 = vpop.f32.mrb[0].mxu0
  %v533 = vpop.f32.mrb[0].mxu0
  %v534 = vadd.f32 %v485, %v533
  %v535 = vpop.f32.mrb[0].mxu0
  %536 = vmatprep.mubr.bf16.mxu0 0
  %537 = vmatmul.mubr.bf16.gmra.mrb[0].mxu0 %v202
  %v538 = vpop.f32.mrb[0].mxu0
  %v539 = vadd.f32 %v490, %v538
  %v540 = vpop.f32.mrb[0].mxu0
  %v541 = vpop.f32.mrb[0].mxu0
  %v542 = vadd.f32 %v493, %v541
  %v543 = vpop.f32.mrb[0].mxu0
  %544 = vdwg.mxu0
  %s545 = scalar_lea.vmem %s0, 288
  %v546 = vld [vmem:[%s545] sm:$0xf]
  %v547 = vld [vmem:[%s545 + $0x4] sm:$0xf]
  %v548 = vld [vmem:[%s545 + $0x8] sm:$0xf]
  %v549 = vld [vmem:[%s545 + $0xc] sm:$0xf]
  %v550 = vld [vmem:[%s545 + $0x10] sm:$0xf]
  %v551 = vld [vmem:[%s545 + $0x14] sm:$0xf]
  %v552 = vld [vmem:[%s545 + $0x18] sm:$0xf]
  %v553 = vld [vmem:[%s545 + $0x1c] sm:$0xf]
  %v554 = vld [vmem:[%s545 + $0x20] sm:$0xf]
  %v555 = vld [vmem:[%s545 + $0x24] sm:$0xf]
  %v556 = vld [vmem:[%s545 + $0x28] sm:$0xf]
  %v557 = vld [vmem:[%s545 + $0x2c] sm:$0xf]
  %v558 = vld [vmem:[%s545 + $0x30] sm:$0xf]
  %v559 = vld [vmem:[%s545 + $0x34] sm:$0xf]
  %v560 = vld [vmem:[%s545 + $0x38] sm:$0xf]
  %v561 = vld [vmem:[%s545 + $0x3c] sm:$0xf]
  %v562 = vld [vmem:[%s545 + $0x40] sm:$0xf]
  %v563 = vld [vmem:[%s545 + $0x44] sm:$0xf]
  %v564 = vld [vmem:[%s545 + $0x48] sm:$0xf]
  %v565 = vld [vmem:[%s545 + $0x4c] sm:$0xf]
  %v566 = vld [vmem:[%s545 + $0x50] sm:$0xf]
  %v567 = vld [vmem:[%s545 + $0x54] sm:$0xf]
  %v568 = vld [vmem:[%s545 + $0x58] sm:$0xf]
  %v569 = vld [vmem:[%s545 + $0x5c] sm:$0xf]
  %v570 = vld [vmem:[%s545 + $0x60] sm:$0xf]
  %v571 = vld [vmem:[%s545 + $0x64] sm:$0xf]
  %v572 = vld [vmem:[%s545 + $0x68] sm:$0xf]
  %v573 = vld [vmem:[%s545 + $0x6c] sm:$0xf]
  %v574 = vld [vmem:[%s545 + $0x70] sm:$0xf]
  %v575 = vld [vmem:[%s545 + $0x74] sm:$0xf]
  %v576 = vld [vmem:[%s545 + $0x78] sm:$0xf]
  %v577 = vld [vmem:[%s545 + $0x7c] sm:$0xf]
  %v578 = vld [vmem:[%s545 + $0x80] sm:$0xf]
  %v579 = vld [vmem:[%s545 + $0x84] sm:$0xf]
  %v580 = vld [vmem:[%s545 + $0x88] sm:$0xf]
  %v581 = vld [vmem:[%s545 + $0x8c] sm:$0xf]
  %v618 = vunpack.c.l.b16 %v546
  %v619 = vunpack.c.l.b16 %v547
  %v620 = vunpack.c.l.b16 %v548
  %v621 = vunpack.c.l.b16 %v549
  %v622 = vunpack.c.l.b16 %v550
  %v623 = vunpack.c.l.b16 %v551
  %v624 = vunpack.c.l.b16 %v552
  %v625 = vunpack.c.l.b16 %v553
  %v626 = vunpack.c.l.b16 %v554
  %v627 = vunpack.c.l.b16 %v555
  %v628 = vunpack.c.l.b16 %v556
  %v629 = vunpack.c.l.b16 %v557
  %v630 = vunpack.c.l.b16 %v558
  %v631 = vunpack.c.l.b16 %v559
  %v632 = vunpack.c.l.b16 %v560
  %v633 = vunpack.c.l.b16 %v561
  %v634 = vunpack.c.l.b16 %v562
  %v635 = vunpack.c.l.b16 %v563
  %v636 = vunpack.c.l.b16 %v564
  %v637 = vunpack.c.l.b16 %v565
  %v638 = vunpack.c.l.b16 %v566
  %v639 = vunpack.c.l.b16 %v567
  %v640 = vunpack.c.l.b16 %v568
  %v641 = vunpack.c.l.b16 %v569
  %v642 = vunpack.c.l.b16 %v570
  %v643 = vunpack.c.l.b16 %v571
  %v644 = vunpack.c.l.b16 %v572
  %v645 = vunpack.c.l.b16 %v573
  %v646 = vunpack.c.l.b16 %v574
  %v647 = vunpack.c.l.b16 %v575
  %v648 = vunpack.c.l.b16 %v576
  %v649 = vunpack.c.l.b16 %v577
  %v650 = vunpack.c.l.b16 %v578
  %v651 = vunpack.c.l.b16 %v579
  %v652 = vunpack.c.l.b16 %v580
  %v653 = vunpack.c.l.b16 %v581
  %v654 = vpack.c.b16 %v619, %v618
  %v655 = vpack.c.b16 %v621, %v620
  %v656 = vpack.c.b16 %v623, %v622
  %v657 = vpack.c.b16 %v625, %v624
  %v658 = vpack.c.b16 %v627, %v626
  %v659 = vpack.c.b16 %v629, %v628
  %v660 = vpack.c.b16 %v631, %v630
  %v661 = vpack.c.b16 %v633, %v632
  %v662 = vpack.c.b16 %v635, %v634
  %v663 = vpack.c.b16 %v637, %v636
  %v664 = vpack.c.b16 %v639, %v638
  %v665 = vpack.c.b16 %v641, %v640
  %v666 = vpack.c.b16 %v643, %v642
  %v667 = vpack.c.b16 %v645, %v644
  %v668 = vpack.c.b16 %v647, %v646
  %v669 = vpack.c.b16 %v649, %v648
  %v670 = vpack.c.b16 %v651, %v650
  %v671 = vpack.c.b16 %v653, %v652
  %690 = vmatprep.subr.bf16.mxu0 0
  %691 = vmatpush1.bf16.msra.mxu0 %v654
  %692 = vmatprep.subr.bf16.mxu0 0
  %693 = vmatpush1.bf16.msra.mxu0 %v655
  %694 = vmatprep.subr.bf16.mxu0 0
  %695 = vmatpush1.bf16.msra.mxu0 %v656
  %696 = vmatprep.subr.bf16.mxu0 0
  %697 = vmatpush1.bf16.msra.mxu0 %v657
  %698 = vmatprep.subr.bf16.mxu0 0
  %699 = vmatpush1.bf16.msra.mxu0 %v658
  %700 = vmatprep.subr.bf16.mxu0 0
  %701 = vmatpush1.bf16.msra.mxu0 %v659
  %702 = vmatprep.subr.bf16.mxu0 0
  %703 = vmatpush1.bf16.msra.mxu0 %v660
  %704 = vmatprep.subr.bf16.mxu0 0
  %705 = vmatpush1.bf16.msra.mxu0 %v661
  %706 = vmatprep.subr.bf16.mxu0 0
  %707 = vmatpush1.bf16.msra.mxu0 %v662
  %708 = vmatprep.subr.bf16.mxu0 0
  %709 = vmatpush1.bf16.msra.mxu0 %v663
  %710 = vmatprep.subr.bf16.mxu0 0
  %711 = vmatpush1.bf16.msra.mxu0 %v664
  %712 = vmatprep.subr.bf16.mxu0 0
  %713 = vmatpush1.bf16.msra.mxu0 %v665
  %714 = vmatprep.subr.bf16.mxu0 0
  %715 = vmatpush1.bf16.msra.mxu0 %v666
  %716 = vmatprep.subr.bf16.mxu0 0
  %717 = vmatpush1.bf16.msra.mxu0 %v667
  %718 = vmatprep.subr.bf16.mxu0 0
  %719 = vmatpush1.bf16.msra.mxu0 %v668
  %720 = vmatprep.subr.bf16.mxu0 0
  %721 = vmatpush1.bf16.msra.mxu0 %v669
  %722 = vmatprep.mubr.bf16.mxu0 %v80
  %723 = vmatmul.mubr.bf16.gmra.mrb[0].mxu0 %v79
  %v724 = vpop.f32.mrb[0].mxu0
  %v725 = vadd.f32 0.0, %v724
  %v726 = vpop.f32.mrb[0].mxu0
  %v727 = vpop.f32.mrb[0].mxu0
  %v728 = vadd.f32 0.0, %v727
  %v729 = vpop.f32.mrb[0].mxu0
  %730 = vmatprep.mubr.bf16.mxu0 %v83
  %731 = vmatmul.mubr.bf16.gmra.mrb[0].mxu0 %v82
  %v732 = vpop.f32.mrb[0].mxu0
  %v733 = vadd.f32 0.0, %v732
  %v734 = vpop.f32.mrb[0].mxu0
  %v735 = vpop.f32.mrb[0].mxu0
  %v736 = vadd.f32 0.0, %v735
  %v737 = vpop.f32.mrb[0].mxu0
  %738 = vdwg.mxu0
  %739 = vmatprep.subr.bf16.mxu0 0
  %740 = vmatpush1.bf16.msra.mxu0 %v670
  %741 = vmatprep.subr.bf16.mxu0 0
  %742 = vmatpush1.bf16.msra.mxu0 %v671
  %743 = vmatprep.subr.bf16.mxu0 0
  %744 = vmatpush1.bf16.msra.mxu0 0
  %745 = vmatprep.subr.bf16.mxu0 0
  %746 = vmatpush1.bf16.msra.mxu0 0
  %747 = vmatprep.subr.bf16.mxu0 0
  %748 = vmatpush1.bf16.msra.mxu0 0
  %749 = vmatprep.subr.bf16.mxu0 0
  %750 = vmatpush1.bf16.msra.mxu0 0
  %751 = vmatprep.subr.bf16.mxu0 0
  %752 = vmatpush1.bf16.msra.mxu0 0
  %753 = vmatprep.subr.bf16.mxu0 0
  %754 = vmatpush1.bf16.msra.mxu0 0
  %755 = vmatprep.subr.bf16.mxu0 0
  %756 = vmatpush1.bf16.msra.mxu0 0
  %757 = vmatprep.subr.bf16.mxu0 0
  %758 = vmatpush1.bf16.msra.mxu0 0
  %759 = vmatprep.subr.bf16.mxu0 0
  %760 = vmatpush1.bf16.msra.mxu0 0
  %761 = vmatprep.subr.bf16.mxu0 0
  %762 = vmatpush1.bf16.msra.mxu0 0
  %763 = vmatprep.subr.bf16.mxu0 0
  %764 = vmatpush1.bf16.msra.mxu0 0
  %765 = vmatprep.subr.bf16.mxu0 0
  %766 = vmatpush1.bf16.msra.mxu0 0
  %767 = vmatprep.subr.bf16.mxu0 0
  %768 = vmatpush1.bf16.msra.mxu0 0
  %769 = vmatprep.subr.bf16.mxu0 0
  %770 = vmatpush1.bf16.msra.mxu0 0
  %771 = vmatprep.mubr.bf16.mxu0 0
  %772 = vmatmul.mubr.bf16.gmra.mrb[0].mxu0 %v199
  %v773 = vpop.f32.mrb[0].mxu0
  %v774 = vadd.f32 %v725, %v773
  %v775 = vpop.f32.mrb[0].mxu0
  %v776 = vpop.f32.mrb[0].mxu0
  %v777 = vadd.f32 %v728, %v776
  %v778 = vpop.f32.mrb[0].mxu0
  %779 = vmatprep.mubr.bf16.mxu0 0
  %780 = vmatmul.mubr.bf16.gmra.mrb[0].mxu0 %v202
  %v781 = vpop.f32.mrb[0].mxu0
  %v782 = vadd.f32 %v733, %v781
  %v783 = vpop.f32.mrb[0].mxu0
  %v784 = vpop.f32.mrb[0].mxu0
  %v785 = vadd.f32 %v736, %v784
  %v786 = vpop.f32.mrb[0].mxu0
  %787 = vdwg.mxu0
  %s788 = scalar_lea.vmem %s0, 432
  %v789 = vld [vmem:[%s788] sm:$0xf]
  %v790 = vld [vmem:[%s788 + $0x4] sm:$0xf]
  %v791 = vld [vmem:[%s788 + $0x8] sm:$0xf]
  %v792 = vld [vmem:[%s788 + $0xc] sm:$0xf]
  %v793 = vld [vmem:[%s788 + $0x10] sm:$0xf]
  %v794 = vld [vmem:[%s788 + $0x14] sm:$0xf]
  %v795 = vld [vmem:[%s788 + $0x18] sm:$0xf]
  %v796 = vld [vmem:[%s788 + $0x1c] sm:$0xf]
  %v797 = vld [vmem:[%s788 + $0x20] sm:$0xf]
  %v798 = vld [vmem:[%s788 + $0x24] sm:$0xf]
  %v799 = vld [vmem:[%s788 + $0x28] sm:$0xf]
  %v800 = vld [vmem:[%s788 + $0x2c] sm:$0xf]
  %v801 = vld [vmem:[%s788 + $0x30] sm:$0xf]
  %v802 = vld [vmem:[%s788 + $0x34] sm:$0xf]
  %v803 = vld [vmem:[%s788 + $0x38] sm:$0xf]
  %v804 = vld [vmem:[%s788 + $0x3c] sm:$0xf]
  %v805 = vld [vmem:[%s788 + $0x40] sm:$0xf]
  %v806 = vld [vmem:[%s788 + $0x44] sm:$0xf]
  %v807 = vld [vmem:[%s788 + $0x48] sm:$0xf]
  %v808 = vld [vmem:[%s788 + $0x4c] sm:$0xf]
  %v809 = vld [vmem:[%s788 + $0x50] sm:$0xf]
  %v810 = vld [vmem:[%s788 + $0x54] sm:$0xf]
  %v811 = vld [vmem:[%s788 + $0x58] sm:$0xf]
  %v812 = vld [vmem:[%s788 + $0x5c] sm:$0xf]
  %v813 = vld [vmem:[%s788 + $0x60] sm:$0xf]
  %v814 = vld [vmem:[%s788 + $0x64] sm:$0xf]
  %v815 = vld [vmem:[%s788 + $0x68] sm:$0xf]
  %v816 = vld [vmem:[%s788 + $0x6c] sm:$0xf]
  %v817 = vld [vmem:[%s788 + $0x70] sm:$0xf]
  %v818 = vld [vmem:[%s788 + $0x74] sm:$0xf]
  %v819 = vld [vmem:[%s788 + $0x78] sm:$0xf]
  %v820 = vld [vmem:[%s788 + $0x7c] sm:$0xf]
  %v821 = vld [vmem:[%s788 + $0x80] sm:$0xf]
  %v822 = vld [vmem:[%s788 + $0x84] sm:$0xf]
  %v823 = vld [vmem:[%s788 + $0x88] sm:$0xf]
  %v824 = vld [vmem:[%s788 + $0x8c] sm:$0xf]
  %v861 = vunpack.c.l.b16 %v789
  %v862 = vunpack.c.l.b16 %v790
  %v863 = vunpack.c.l.b16 %v791
  %v864 = vunpack.c.l.b16 %v792
  %v865 = vunpack.c.l.b16 %v793
  %v866 = vunpack.c.l.b16 %v794
  %v867 = vunpack.c.l.b16 %v795
  %v868 = vunpack.c.l.b16 %v796
  %v869 = vunpack.c.l.b16 %v797
  %v870 = vunpack.c.l.b16 %v798
  %v871 = vunpack.c.l.b16 %v799
  %v872 = vunpack.c.l.b16 %v800
  %v873 = vunpack.c.l.b16 %v801
  %v874 = vunpack.c.l.b16 %v802
  %v875 = vunpack.c.l.b16 %v803
  %v876 = vunpack.c.l.b16 %v804
  %v877 = vunpack.c.l.b16 %v805
  %v878 = vunpack.c.l.b16 %v806
  %v879 = vunpack.c.l.b16 %v807
  %v880 = vunpack.c.l.b16 %v808
  %v881 = vunpack.c.l.b16 %v809
  %v882 = vunpack.c.l.b16 %v810
  %v883 = vunpack.c.l.b16 %v811
  %v884 = vunpack.c.l.b16 %v812
  %v885 = vunpack.c.l.b16 %v813
  %v886 = vunpack.c.l.b16 %v814
  %v887 = vunpack.c.l.b16 %v815
  %v888 = vunpack.c.l.b16 %v816
  %v889 = vunpack.c.l.b16 %v817
  %v890 = vunpack.c.l.b16 %v818
  %v891 = vunpack.c.l.b16 %v819
  %v892 = vunpack.c.l.b16 %v820
  %v893 = vunpack.c.l.b16 %v821
  %v894 = vunpack.c.l.b16 %v822
  %v895 = vunpack.c.l.b16 %v823
  %v896 = vunpack.c.l.b16 %v824
  %v897 = vpack.c.b16 %v862, %v861
  %v898 = vpack.c.b16 %v864, %v863
  %v899 = vpack.c.b16 %v866, %v865
  %v900 = vpack.c.b16 %v868, %v867
  %v901 = vpack.c.b16 %v870, %v869
  %v902 = vpack.c.b16 %v872, %v871
  %v903 = vpack.c.b16 %v874, %v873
  %v904 = vpack.c.b16 %v876, %v875
  %v905 = vpack.c.b16 %v878, %v877
  %v906 = vpack.c.b16 %v880, %v879
  %v907 = vpack.c.b16 %v882, %v881
  %v908 = vpack.c.b16 %v884, %v883
  %v909 = vpack.c.b16 %v886, %v885
  %v910 = vpack.c.b16 %v888, %v887
  %v911 = vpack.c.b16 %v890, %v889
  %v912 = vpack.c.b16 %v892, %v891
  %v913 = vpack.c.b16 %v894, %v893
  %v914 = vpack.c.b16 %v896, %v895
  %933 = vmatprep.subr.bf16.mxu0 0
  %934 = vmatpush1.bf16.msra.mxu0 %v897
  %935 = vmatprep.subr.bf16.mxu0 0
  %936 = vmatpush1.bf16.msra.mxu0 %v898
  %937 = vmatprep.subr.bf16.mxu0 0
  %938 = vmatpush1.bf16.msra.mxu0 %v899
  %939 = vmatprep.subr.bf16.mxu0 0
  %940 = vmatpush1.bf16.msra.mxu0 %v900
  %941 = vmatprep.subr.bf16.mxu0 0
  %942 = vmatpush1.bf16.msra.mxu0 %v901
  %943 = vmatprep.subr.bf16.mxu0 0
  %944 = vmatpush1.bf16.msra.mxu0 %v902
  %945 = vmatprep.subr.bf16.mxu0 0
  %946 = vmatpush1.bf16.msra.mxu0 %v903
  %947 = vmatprep.subr.bf16.mxu0 0
  %948 = vmatpush1.bf16.msra.mxu0 %v904
  %949 = vmatprep.subr.bf16.mxu0 0
  %950 = vmatpush1.bf16.msra.mxu0 %v905
  %951 = vmatprep.subr.bf16.mxu0 0
  %952 = vmatpush1.bf16.msra.mxu0 %v906
  %953 = vmatprep.subr.bf16.mxu0 0
  %954 = vmatpush1.bf16.msra.mxu0 %v907
  %955 = vmatprep.subr.bf16.mxu0 0
  %956 = vmatpush1.bf16.msra.mxu0 %v908
  %957 = vmatprep.subr.bf16.mxu0 0
  %958 = vmatpush1.bf16.msra.mxu0 %v909
  %959 = vmatprep.subr.bf16.mxu0 0
  %960 = vmatpush1.bf16.msra.mxu0 %v910
  %961 = vmatprep.subr.bf16.mxu0 0
  %962 = vmatpush1.bf16.msra.mxu0 %v911
  %963 = vmatprep.subr.bf16.mxu0 0
  %964 = vmatpush1.bf16.msra.mxu0 %v912
  %965 = vmatprep.mubr.bf16.mxu0 %v80
  %966 = vmatmul.mubr.bf16.gmra.mrb[0].mxu0 %v79
  %v967 = vpop.f32.mrb[0].mxu0
  %v968 = vadd.f32 0.0, %v967
  %v969 = vpop.f32.mrb[0].mxu0
  %v970 = vpop.f32.mrb[0].mxu0
  %v971 = vadd.f32 0.0, %v970
  %v972 = vpop.f32.mrb[0].mxu0
  %973 = vmatprep.mubr.bf16.mxu0 %v83
  %974 = vmatmul.mubr.bf16.gmra.mrb[0].mxu0 %v82
  %v975 = vpop.f32.mrb[0].mxu0
  %v976 = vadd.f32 0.0, %v975
  %v977 = vpop.f32.mrb[0].mxu0
  %v978 = vpop.f32.mrb[0].mxu0
  %v979 = vadd.f32 0.0, %v978
  %v980 = vpop.f32.mrb[0].mxu0
  %981 = vdwg.mxu0
  %982 = vmatprep.subr.bf16.mxu0 0
  %983 = vmatpush1.bf16.msra.mxu0 %v913
  %984 = vmatprep.subr.bf16.mxu0 0
  %985 = vmatpush1.bf16.msra.mxu0 %v914
  %986 = vmatprep.subr.bf16.mxu0 0
  %987 = vmatpush1.bf16.msra.mxu0 0
  %988 = vmatprep.subr.bf16.mxu0 0
  %989 = vmatpush1.bf16.msra.mxu0 0
  %990 = vmatprep.subr.bf16.mxu0 0
  %991 = vmatpush1.bf16.msra.mxu0 0
  %992 = vmatprep.subr.bf16.mxu0 0
  %993 = vmatpush1.bf16.msra.mxu0 0
  %994 = vmatprep.subr.bf16.mxu0 0
  %995 = vmatpush1.bf16.msra.mxu0 0
  %996 = vmatprep.subr.bf16.mxu0 0
  %997 = vmatpush1.bf16.msra.mxu0 0
  %998 = vmatprep.subr.bf16.mxu0 0
  %999 = vmatpush1.bf16.msra.mxu0 0
  %1000 = vmatprep.subr.bf16.mxu0 0
  %1001 = vmatpush1.bf16.msra.mxu0 0
  %1002 = vmatprep.subr.bf16.mxu0 0
  %1003 = vmatpush1.bf16.msra.mxu0 0
  %1004 = vmatprep.subr.bf16.mxu0 0
  %1005 = vmatpush1.bf16.msra.mxu0 0
  %1006 = vmatprep.subr.bf16.mxu0 0
  %1007 = vmatpush1.bf16.msra.mxu0 0
  %1008 = vmatprep.subr.bf16.mxu0 0
  %1009 = vmatpush1.bf16.msra.mxu0 0
  %1010 = vmatprep.subr.bf16.mxu0 0
  %1011 = vmatpush1.bf16.msra.mxu0 0
  %1012 = vmatprep.subr.bf16.mxu0 0
  %1013 = vmatpush1.bf16.msra.mxu0 0
  %1014 = vmatprep.mubr.bf16.mxu0 0
  %1015 = vmatmul.mubr.bf16.gmra.mrb[0].mxu0 %v199
  %v1016 = vpop.f32.mrb[0].mxu0
  %v1017 = vadd.f32 %v968, %v1016
  %v1018 = vpop.f32.mrb[0].mxu0
  %v1019 = vpop.f32.mrb[0].mxu0
  %v1020 = vadd.f32 %v971, %v1019
  %v1021 = vpop.f32.mrb[0].mxu0
  %1022 = vmatprep.mubr.bf16.mxu0 0
  %1023 = vmatmul.mubr.bf16.gmra.mrb[0].mxu0 %v202
  %v1024 = vpop.f32.mrb[0].mxu0
  %v1025 = vadd.f32 %v976, %v1024
  %v1026 = vpop.f32.mrb[0].mxu0
  %v1027 = vpop.f32.mrb[0].mxu0
  %v1028 = vadd.f32 %v979, %v1027
  %v1029 = vpop.f32.mrb[0].mxu0
  %1030 = vdwg.mxu0
  %v1031 = vmax.f32 %v288, %v531
  %v1032 = vmax.f32 %v291, %v534
  %v1033 = vmax.f32 %v296, %v539
  %v1034 = vmax.f32 %v299, %v542
  %v1035 = vmax.f32 %v774, %v1017
  %v1036 = vmax.f32 %v777, %v1020
  %v1037 = vmax.f32 %v782, %v1025
  %v1038 = vmax.f32 %v785, %v1028
  %v1039 = vmax.f32 %v1031, %v1035
  %v1040 = vmax.f32 %v1032, %v1036
  %v1041 = vmax.f32 %v1033, %v1037
  %v1042 = vmax.f32 %v1034, %v1038
  %v1043 = vld [vmem:[%s2] sm:$0xff]
  %v1044 = vld [vmem:[%s2 + $0x8] sm:$0xff]
  %v1045 = vld [vmem:[%s2 + $0x10] sm:$0xff]
  %v1046 = vld [vmem:[%s2 + $0x18] sm:$0xff]
  %1048 = vset.pattern.permute.xlu0 0
  %1049 = vperm.xlu0 %1048, %v1043
  %v1050 = vpop.permute.xlu0 %1049
  %1053 = vset.pattern.permute.xlu0 0
  %1054 = vperm.xlu0 %1053, %v1044
  %v1055 = vpop.permute.xlu0 %1054
  %1058 = vset.pattern.permute.xlu0 0
  %1059 = vperm.xlu0 %1058, %v1045
  %v1060 = vpop.permute.xlu0 %1059
  %1063 = vset.pattern.permute.xlu0 0
  %1064 = vperm.xlu0 %1063, %v1046
  %v1065 = vpop.permute.xlu0 %1064
  %v1067 = vadd.f32 %v1039, %v1050
  %v1068 = vadd.f32 %v1040, %v1055
  %v1069 = vadd.f32 %v1041, %v1060
  %v1070 = vadd.f32 %v1042, %v1065
  %v1071 = vmax.f32 %v1067, 0.0
  %v1072 = vmax.f32 %v1068, 0.0
  %v1073 = vmax.f32 %v1069, 0.0
  %v1074 = vmax.f32 %v1070, 0.0
  %v1075 = vmin.f32 %v1071, 6.0
  %v1076 = vmin.f32 %v1072, 6.0
  %v1077 = vmin.f32 %v1073, 6.0
  %v1078 = vmin.f32 %v1074, 6.0
  %v1079 = vpack.c.bf16 %v1076, %v1075
  %v1080 = vpack.c.bf16 %v1078, %v1077
  %v1083 = vunpack.c.l.b16 %v1079
  %v1084 = vunpack.c.h.b16 %v1079
  %v1085 = vunpack.c.l.b16 %v1080
  %v1086 = vunpack.c.h.b16 %v1080
  %v1087 = vpack.c.b16 %v1083, %v1083
  %v1088 = vpack.c.b16 %v1084, %v1084
  %v1089 = vpack.c.b16 %v1085, %v1085
  %v1090 = vpack.c.b16 %v1086, %v1086
  %1095 = vst [vmem:[%s3] sm:$0xf] %v1087
  %1096 = vst [vmem:[%s3 + $0x4] sm:$0xf] %v1088
  %1097 = vst [vmem:[%s3 + $0x8] sm:$0xf] %v1089
  %1098 = vst [vmem:[%s3 + $0xc] sm:$0xf] %v1090
  // Predicated region
  $region14: #{color_model_forward.6} parent=0 // pred_check
    _
  $region15: #{color_model_forward.6} parent=0 // pred_check_branch
    %1100 = sbr.rel (0) target = $region17
  $region16: #{color_model_forward.6} parent=0 // pred_region
    _
  $region17: #{color_model_forward.6} parent=0 // pred_fallthru
    _
  // Predicated region
  $region18: #{color_model_forward.6} parent=0 // pred_check
    _
  $region19: #{color_model_forward.6} parent=0 // pred_check_branch
    %1102 = sbr.rel (0) target = $region21
  $region20: #{color_model_forward.6} parent=0 // pred_region
    _
  $region21: #{color_model_forward.6} parent=0 // pred_fallthru
    _

// kernel: color_model_forward.7
$region0: #{color_model_forward.7}
  #allocation0 [shape = 'u32[]', space=smem, size = 0x4, offset = 0x4, fixed_abs, tag = 'smem constant byte address 0x4 - core index']
  #allocation1 [shape = 'u32[144,128]{1,0:T(1,128)}', space=vmem, size = 0x12000, scoped, tag = 'internal scratch']
  %s0 = inlined_call_operand.vmem [shape: bf16[32,128], index: 0, kind: input, shape index: {}]
  %s1 = inlined_call_operand.vmem [shape: bf16[16,32], index: 1, kind: input, shape index: {}]
  %s2 = inlined_call_operand.vmem [shape: f32[16,1], index: 2, kind: input, shape index: {}]
  %s3 = inlined_call_operand.vmem [shape: f32[2,128], index: 3, kind: input, shape index: {}]
  %s4 = inlined_call_operand.vmem [shape: f32[16,32], index: 4, kind: input, shape index: {}]
  %s5 = inlined_call_operand.vmem [shape: f32[1,32], index: 5, kind: input, shape index: {}]
  %s6 = inlined_call_operand.vmem [shape: f32[32,5], index: 6, kind: input, shape index: {}]
  %s7 = inlined_call_operand.vmem [shape: f32[1,5], index: 7, kind: input, shape index: {}]
  %s8 = inlined_call_operand.hbm [shape: f32[2,5], index: 8, kind: output, shape index: {}]
  %s9 = sld [smem:[#allocation0]]
  $region42: #{color_model_forward.7} parent=0
    _
  %s11 = ssub.s32 1, %s9
  %s12 = scalar_select 0, %s11, %s9
  $region1: #{color_model_forward.7} parent=0
    #allocation2 [shape = 'u8[1024]{0}', space=vmem, size = 0x400, scoped, tag = 'output window, operand 0, single buffered']
    #allocation3 [shape = 's32[1]{0}', space=sflag, size = 0x4, scoped, tag = 'scoped memory for color_model_forward.7']
    %13 = vsyncpa [#allocation3], 0
    // Predicated region
    $region2: #{color_model_forward.7} parent=1 // pred_check
      _
    $region3: #{color_model_forward.7} parent=1 // pred_check_branch
      %15 = sbr.rel (0) target = $region5
    $region4: #{color_model_forward.7} parent=1 // pred_region
      _
    $region5: #{color_model_forward.7} parent=1 // pred_fallthru
      _
    // Predicated region
    $region6: #{color_model_forward.7} parent=1 // pred_check
      _
    $region7: #{color_model_forward.7} parent=1 // pred_check_branch
      %17 = sbr.rel (0) target = $region9
    $region8: #{color_model_forward.7} parent=1 // pred_region
      _
    $region9: #{color_model_forward.7} parent=1 // pred_fallthru
      _
    // Predicated region
    $region10: #{color_model_forward.7} parent=1 // pred_check
      _
    $region11: #{color_model_forward.7} parent=1 // pred_check_branch
      %19 = sbr.rel (0) target = $region13
    $region12: #{color_model_forward.7} parent=1 // pred_region
      _
    $region13: #{color_model_forward.7} parent=1 // pred_fallthru
      _
    // Predicated region
    $region14: #{color_model_forward.7} parent=1 // pred_check
      _
    $region15: #{color_model_forward.7} parent=1 // pred_check_branch
      %21 = sbr.rel (0) target = $region17
    $region16: #{color_model_forward.7} parent=1 // pred_region
      _
    $region17: #{color_model_forward.7} parent=1 // pred_fallthru
      _
    // Predicated region
    $region18: #{color_model_forward.7} parent=1 // pred_check
      _
    $region19: #{color_model_forward.7} parent=1 // pred_check_branch
      %23 = sbr.rel (0) target = $region21
    $region20: #{color_model_forward.7} parent=1 // pred_region
      _
    $region21: #{color_model_forward.7} parent=1 // pred_fallthru
      _
    // Predicated region
    $region22: #{color_model_forward.7} parent=1 // pred_check
      _
    $region23: #{color_model_forward.7} parent=1 // pred_check_branch
      %25 = sbr.rel (0) target = $region25
    $region24: #{color_model_forward.7} parent=1 // pred_region
      _
    $region25: #{color_model_forward.7} parent=1 // pred_fallthru
      _
    // Predicated region
    $region26: #{color_model_forward.7} parent=1 // pred_check
      _
    $region27: #{color_model_forward.7} parent=1 // pred_check_branch
      %27 = sbr.rel (0) target = $region29
    $region28: #{color_model_forward.7} parent=1 // pred_region
      _
    $region29: #{color_model_forward.7} parent=1 // pred_fallthru
      _
    // Predicated region
    $region30: #{color_model_forward.7} parent=1 // pred_check
      _
    $region31: #{color_model_forward.7} parent=1 // pred_check_branch
      %29 = sbr.rel (0) target = $region33
    $region32: #{color_model_forward.7} parent=1 // pred_region
      _
    $region33: #{color_model_forward.7} parent=1 // pred_fallthru
      _
    %v31 = vld [vmem:[%s1] sm:$0xf]
    %v32 = vld [vmem:[%s1 + $0x4] sm:$0xf]
    %v33 = vld [vmem:[%s0] sm:$0xf]
    %v34 = vld [vmem:[%s0 + $0x4] sm:$0xf]
    %v35 = vld [vmem:[%s0 + $0x8] sm:$0xf]
    %v36 = vld [vmem:[%s0 + $0xc] sm:$0xf]
    %v37 = vld [vmem:[%s2] sm:$0xff]
    %v38 = vld [vmem:[%s2 + $0x8] sm:$0xff]
    %40 = vset.pattern.permute.xlu0 0
    %41 = vperm.xlu0 %40, %v37
    %v42 = vpop.permute.xlu0 %41
    %45 = vset.pattern.permute.xlu0 0
    %46 = vperm.xlu0 %45, %v38
    %v47 = vpop.permute.xlu0 %46
    %v51 = vunpack.c.l.b16 %v31
    %v52 = vunpack.c.l.b16 %v32
    %v53 = vpack.c.b16 %v52, %v51
    %v58 = vunpack.c.l.b16 %v33
    %v59 = vunpack.c.l.b16 %v34
    %v60 = vunpack.c.l.b16 %v35
    %v61 = vunpack.c.l.b16 %v36
    %v62 = vpack.c.b16 %v59, %v58
    %v63 = vpack.c.b16 %v61, %v60
    %vm66 = vcmask 261120
    %v68 = vsel %vm66, %v53, 0
    %70 = vmatprep.subr.bf16.mxu0 0
    %71 = vmatpush1.bf16.msra.mxu0 %v62
    %72 = vmatprep.subr.bf16.mxu0 0
    %73 = vmatpush1.bf16.msra.mxu0 %v63
    %74 = vmatprep.subr.bf16.mxu0 0
    %75 = vmatpush1.bf16.msra.mxu0 0
    %76 = vmatprep.subr.bf16.mxu0 0
    %77 = vmatpush1.bf16.msra.mxu0 0
    %78 = vmatprep.subr.bf16.mxu0 0
    %79 = vmatpush1.bf16.msra.mxu0 0
    %80 = vmatprep.subr.bf16.mxu0 0
    %81 = vmatpush1.bf16.msra.mxu0 0
    %82 = vmatprep.subr.bf16.mxu0 0
    %83 = vmatpush1.bf16.msra.mxu0 0
    %84 = vmatprep.subr.bf16.mxu0 0
    %85 = vmatpush1.bf16.msra.mxu0 0
    %86 = vmatprep.subr.bf16.mxu0 0
    %87 = vmatpush1.bf16.msra.mxu0 0
    %88 = vmatprep.subr.bf16.mxu0 0
    %89 = vmatpush1.bf16.msra.mxu0 0
    %90 = vmatprep.subr.bf16.mxu0 0
    %91 = vmatpush1.bf16.msra.mxu0 0
    %92 = vmatprep.subr.bf16.mxu0 0
    %93 = vmatpush1.bf16.msra.mxu0 0
    %94 = vmatprep.subr.bf16.mxu0 0
    %95 = vmatpush1.bf16.msra.mxu0 0
    %96 = vmatprep.subr.bf16.mxu0 0
    %97 = vmatpush1.bf16.msra.mxu0 0
    %98 = vmatprep.subr.bf16.mxu0 0
    %99 = vmatpush1.bf16.msra.mxu0 0
    %100 = vmatprep.subr.bf16.mxu0 0
    %101 = vmatpush1.bf16.msra.mxu0 0
    %102 = vmatprep.mubr.bf16.mxu0 0
    %103 = vmatmul.mubr.bf16.gmra.mrb[0].mxu0 %v68
    %v104 = vpop.f32.mrb[0].mxu0
    %v105 = vadd.f32 %v42, %v104
    %v106 = vpop.f32.mrb[0].mxu0
    %v107 = vpop.f32.mrb[0].mxu0
    %v108 = vadd.f32 %v47, %v107
    %v109 = vpop.f32.mrb[0].mxu0
    %110 = vdwg.mxu0
    %v111 = vmax.f32 %v105, 0.0
    %v112 = vmax.f32 %v108, 0.0
    %v113 = vmin.f32 %v111, 6.0
    %v114 = vmin.f32 %v112, 6.0
    %v115 = vld [vmem:[%s3] sm:$0x3]
    %116 = vmatprep.subr.mxu0 0.0
    %117 = vmatpush1.xpose.msra.mxu0 %v113
    %118 = vmatprep.subr.mxu0 0.0
    %119 = vmatpush1.xpose.msra.mxu0 %v114
    %120 = vmatprep.subr.mxu0 0.0
    %121 = vmatpush1.xpose.msra.mxu0 0.0
    %122 = vmatprep.subr.mxu0 0.0
    %123 = vmatpush1.xpose.msra.mxu0 0.0
    %124 = vmatprep.subr.mxu0 0.0
    %125 = vmatpush1.xpose.msra.mxu0 0.0
    %126 = vmatprep.subr.mxu0 0.0
    %127 = vmatpush1.xpose.msra.mxu0 0.0
    %128 = vmatprep.subr.mxu0 0.0
    %129 = vmatpush1.xpose.msra.mxu0 0.0
    %130 = vmatprep.subr.mxu0 0.0
    %131 = vmatpush1.xpose.msra.mxu0 0.0
    %132 = vmatprep.subr.mxu0 0.0
    %133 = vmatpush1.xpose.msra.mxu0 0.0
    %134 = vmatprep.subr.mxu0 0.0
    %135 = vmatpush1.xpose.msra.mxu0 0.0
    %136 = vmatprep.subr.mxu0 0.0
    %137 = vmatpush1.xpose.msra.mxu0 0.0
    %138 = vmatprep.subr.mxu0 0.0
    %139 = vmatpush1.xpose.msra.mxu0 0.0
    %140 = vmatprep.subr.mxu0 0.0
    %141 = vmatpush1.xpose.msra.mxu0 0.0
    %142 = vmatprep.subr.mxu0 0.0
    %143 = vmatpush1.xpose.msra.mxu0 0.0
    %144 = vmatprep.subr.mxu0 0.0
    %145 = vmatpush1.xpose.msra.mxu0 0.0
    %146 = vmatprep.subr.mxu0 0.0
    %147 = vmatpush1.xpose.msra.mxu0 0.0
    %148 = vmatprep.subr.mxu0 0.0
    %149 = vmatpush1.xpose.msra.mxu0 0.0
    %150 = vmatprep.subr.mxu0 0.0
    %151 = vmatpush1.xpose.msra.mxu0 0.0
    %152 = vmatprep.subr.mxu0 0.0
    %153 = vmatpush1.xpose.msra.mxu0 0.0
    %154 = vmatprep.subr.mxu0 0.0
    %155 = vmatpush1.xpose.msra.mxu0 0.0
    %156 = vmatprep.subr.mxu0 0.0
    %157 = vmatpush1.xpose.msra.mxu0 0.0
    %158 = vmatprep.subr.mxu0 0.0
    %159 = vmatpush1.xpose.msra.mxu0 0.0
    %160 = vmatprep.subr.mxu0 0.0
    %161 = vmatpush1.xpose.msra.mxu0 0.0
    %162 = vmatprep.subr.mxu0 0.0
    %163 = vmatpush1.xpose.msra.mxu0 0.0
    %164 = vmatprep.subr.mxu0 0.0
    %165 = vmatpush1.xpose.msra.mxu0 0.0
    %166 = vmatprep.subr.mxu0 0.0
    %167 = vmatpush1.xpose.msra.mxu0 0.0
    %168 = vmatprep.subr.mxu0 0.0
    %169 = vmatpush1.xpose.msra.mxu0 0.0
    %170 = vmatprep.subr.mxu0 0.0
    %171 = vmatpush1.xpose.msra.mxu0 0.0
    %172 = vmatprep.subr.mxu0 0.0
    %173 = vmatpush1.xpose.msra.mxu0 0.0
    %174 = vmatprep.subr.mxu0 0.0
    %175 = vmatpush1.xpose.msra.mxu0 0.0
    %176 = vmatprep.subr.mxu0 0.0
    %177 = vmatpush1.xpose.msra.mxu0 0.0
    %178 = vmatprep.subr.mxu0 0.0
    %179 = vmatpush1.xpose.msra.mxu0 0.0
    %180 = vmatprep.mubr.f32.mxu0 0.0
    %181 = vmatmul.mubr.f32.gmra.mrb[0].mxu0 %v115
    %v182 = vpop.f32.mrb[0].mxu0
    %v183 = vadd.f32 0.0, %v182
    %v184 = vpop.f32.mrb[0].mxu0
    %185 = vdwg.mxu0
    %v186 = vld [vmem:[%s4] sm:$0xff]
    %v187 = vld [vmem:[%s4 + $0x8] sm:$0xff]
    %v188 = vld [vmem:[%s5] sm:$0x1]
    %v190 = vlaneseq
    %v191 = vshrl.u32 %v190, 7
    %v192 = vsub.s32 0, %v191
    %v193 = vrot.slane %v188, %v192
    %vm195 = vcmask 130048
    %v197 = vsel %vm195, %v183, 0
    %199 = vmatprep.subr.mxu0 0.0
    %200 = vmatpush1.msra.mxu0 %v186
    %201 = vmatprep.subr.mxu0 0.0
    %202 = vmatpush1.msra.mxu0 %v187
    %203 = vmatprep.subr.mxu0 0.0
    %204 = vmatpush1.msra.mxu0 0.0
    %205 = vmatprep.subr.mxu0 0.0
    %206 = vmatpush1.msra.mxu0 0.0
    %207 = vmatprep.subr.mxu0 0.0
    %208 = vmatpush1.msra.mxu0 0.0
    %209 = vmatprep.subr.mxu0 0.0
    %210 = vmatpush1.msra.mxu0 0.0
    %211 = vmatprep.subr.mxu0 0.0
    %212 = vmatpush1.msra.mxu0 0.0
    %213 = vmatprep.subr.mxu0 0.0
    %214 = vmatpush1.msra.mxu0 0.0
    %215 = vmatprep.subr.mxu0 0.0
    %216 = vmatpush1.msra.mxu0 0.0
    %217 = vmatprep.subr.mxu0 0.0
    %218 = vmatpush1.msra.mxu0 0.0
    %219 = vmatprep.subr.mxu0 0.0
    %220 = vmatpush1.msra.mxu0 0.0
    %221 = vmatprep.subr.mxu0 0.0
    %222 = vmatpush1.msra.mxu0 0.0
    %223 = vmatprep.subr.mxu0 0.0
    %224 = vmatpush1.msra.mxu0 0.0
    %225 = vmatprep.subr.mxu0 0.0
    %226 = vmatpush1.msra.mxu0 0.0
    %227 = vmatprep.subr.mxu0 0.0
    %228 = vmatpush1.msra.mxu0 0.0
    %229 = vmatprep.subr.mxu0 0.0
    %230 = vmatpush1.msra.mxu0 0.0
    %231 = vmatprep.subr.mxu0 0.0
    %232 = vmatpush1.msra.mxu0 0.0
    %233 = vmatprep.subr.mxu0 0.0
    %234 = vmatpush1.msra.mxu0 0.0
    %235 = vmatprep.subr.mxu0 0.0
    %236 = vmatpush1.msra.mxu0 0.0
    %237 = vmatprep.subr.mxu0 0.0
    %238 = vmatpush1.msra.mxu0 0.0
    %239 = vmatprep.subr.mxu0 0.0
    %240 = vmatpush1.msra.mxu0 0.0
    %241 = vmatprep.subr.mxu0 0.0
    %242 = vmatpush1.msra.mxu0 0.0
    %243 = vmatprep.subr.mxu0 0.0
    %244 = vmatpush1.msra.mxu0 0.0
    %245 = vmatprep.subr.mxu0 0.0
    %246 = vmatpush1.msra.mxu0 0.0
    %247 = vmatprep.subr.mxu0 0.0
    %248 = vmatpush1.msra.mxu0 0.0
    %249 = vmatprep.subr.mxu0 0.0
    %250 = vmatpush1.msra.mxu0 0.0
    %251 = vmatprep.subr.mxu0 0.0
    %252 = vmatpush1.msra.mxu0 0.0
    %253 = vmatprep.subr.mxu0 0.0
    %254 = vmatpush1.msra.mxu0 0.0
    %255 = vmatprep.subr.mxu0 0.0
    %256 = vmatpush1.msra.mxu0 0.0
    %257 = vmatprep.subr.mxu0 0.0
    %258 = vmatpush1.msra.mxu0 0.0
    %259 = vmatprep.subr.mxu0 0.0
    %260 = vmatpush1.msra.mxu0 0.0
    %261 = vmatprep.subr.mxu0 0.0
    %262 = vmatpush1.msra.mxu0 0.0
    %263 = vmatprep.mubr.f32.mxu0 0.0
    %264 = vmatmul.mubr.f32.gmra.mrb[0].mxu0 %v197
    %v265 = vpop.f32.mrb[0].mxu0
    %v266 = vadd.f32 %v193, %v265
    %v267 = vpop.f32.mrb[0].mxu0
    %268 = vdwg.mxu0
    %v269 = vld [vmem:[%s6] sm:$0xff]
    %v270 = vld [vmem:[%s6 + $0x8] sm:$0xff]
    %v271 = vld [vmem:[%s6 + $0x10] sm:$0xff]
    %v272 = vld [vmem:[%s6 + $0x18] sm:$0xff]
    %v273 = vld [vmem:[%s7] sm:$0x1]
    %v275 = vlaneseq
    %v276 = vshrl.u32 %v275, 7
    %v277 = vsub.s32 0, %v276
    %v278 = vrot.slane %v273, %v277
    %v281 = vsel %vm66, %v266, 0
    %283 = vmatprep.subr.mxu0 0.0
    %284 = vmatpush1.msra.mxu0 %v269
    %285 = vmatprep.subr.mxu0 0.0
    %286 = vmatpush1.msra.mxu0 %v270
    %287 = vmatprep.subr.mxu0 0.0
    %288 = vmatpush1.msra.mxu0 %v271
    %289 = vmatprep.subr.mxu0 0.0
    %290 = vmatpush1.msra.mxu0 %v272
    %291 = vmatprep.subr.mxu0 0.0
    %292 = vmatpush1.msra.mxu0 0.0
    %293 = vmatprep.subr.mxu0 0.0
    %294 = vmatpush1.msra.mxu0 0.0
    %295 = vmatprep.subr.mxu0 0.0
    %296 = vmatpush1.msra.mxu0 0.0
    %297 = vmatprep.subr.mxu0 0.0
    %298 = vmatpush1.msra.mxu0 0.0
    %299 = vmatprep.subr.mxu0 0.0
    %300 = vmatpush1.msra.mxu0 0.0
    %301 = vmatprep.subr.mxu0 0.0
    %302 = vmatpush1.msra.mxu0 0.0
    %303 = vmatprep.subr.mxu0 0.0
    %304 = vmatpush1.msra.mxu0 0.0
    %305 = vmatprep.subr.mxu0 0.0
    %306 = vmatpush1.msra.mxu0 0.0
    %307 = vmatprep.subr.mxu0 0.0
    %308 = vmatpush1.msra.mxu0 0.0
    %309 = vmatprep.subr.mxu0 0.0
    %310 = vmatpush1.msra.mxu0 0.0
    %311 = vmatprep.subr.mxu0 0.0
    %312 = vmatpush1.msra.mxu0 0.0
    %313 = vmatprep.subr.mxu0 0.0
    %314 = vmatpush1.msra.mxu0 0.0
    %315 = vmatprep.subr.mxu0 0.0
    %316 = vmatpush1.msra.mxu0 0.0
    %317 = vmatprep.subr.mxu0 0.0
    %318 = vmatpush1.msra.mxu0 0.0
    %319 = vmatprep.subr.mxu0 0.0
    %320 = vmatpush1.msra.mxu0 0.0
    %321 = vmatprep.subr.mxu0 0.0
    %322 = vmatpush1.msra.mxu0 0.0
    %323 = vmatprep.subr.mxu0 0.0
    %324 = vmatpush1.msra.mxu0 0.0
    %325 = vmatprep.subr.mxu0 0.0
    %326 = vmatpush1.msra.mxu0 0.0
    %327 = vmatprep.subr.mxu0 0.0
    %328 = vmatpush1.msra.mxu0 0.0
    %329 = vmatprep.subr.mxu0 0.0
    %330 = vmatpush1.msra.mxu0 0.0
    %331 = vmatprep.subr.mxu0 0.0
    %332 = vmatpush1.msra.mxu0 0.0
    %333 = vmatprep.subr.mxu0 0.0
    %334 = vmatpush1.msra.mxu0 0.0
    %335 = vmatprep.subr.mxu0 0.0
    %336 = vmatpush1.msra.mxu0 0.0
    %337 = vmatprep.subr.mxu0 0.0
    %338 = vmatpush1.msra.mxu0 0.0
    %339 = vmatprep.subr.mxu0 0.0
    %340 = vmatpush1.msra.mxu0 0.0
    %341 = vmatprep.subr.mxu0 0.0
    %342 = vmatpush1.msra.mxu0 0.0
    %343 = vmatprep.subr.mxu0 0.0
    %344 = vmatpush1.msra.mxu0 0.0
    %345 = vmatprep.subr.mxu0 0.0
    %346 = vmatpush1.msra.mxu0 0.0
    %347 = vmatprep.mubr.f32.mxu0 0.0
    %348 = vmatmul.mubr.f32.gmra.mrb[0].mxu0 %v281
    %v349 = vpop.f32.mrb[0].mxu0
    %v350 = vadd.f32 %v278, %v349
    %v351 = vpop.f32.mrb[0].mxu0
    %352 = vdwg.mxu0
    %vm353 = vcmask 33792
    %v354 = vsel %vm353, %v350, -inf
    %355 = vmax.xlane.f32.xlu0 %v354
    %v356 = vpop.xlane.xlu0 %355
    %v357 = vsub.f32 %v350, %v356
    %v358 = vmul.f32 %v357, 1.442695
    %v359 = vpow.pop %v358
    %v360 = vsel %vm353, %v359, 0.0
    %361 = vadd.xlane.f32.xlu0 %v360
    %v362 = vpop.xlane.xlu0 %361
    %v363 = vlog2.pop %v362
    %v364 = vmul.f32 %v363, 0.6931472
    %v365 = vsub.f32 %v357, %v364
    %366 = vst.msk [vmem:[#allocation2] sm:$0x3] %vm353, %v365
    // Predicated region
    $region34: #{color_model_forward.7} parent=1 // pred_check
      _
    $region35: #{color_model_forward.7} parent=1 // pred_check_branch
      %368 = sbr.rel (0) target = $region37
    $region36: #{color_model_forward.7} parent=1 // pred_region
      %s370 = ssub.s32 32, 32
      %371 = vsyncadd [#allocation3], %s370
      %s373 = sshll.u32 [#allocation2], 4
      %s374 = int_to_ptr.vmem [resolvable:$true] %s373
      %376 = dma.vmem_to_hbm [thread:$0]  %s374, 32, %s8, [#allocation3]
    $region37: #{color_model_forward.7} parent=1 // pred_fallthru
      _
    // Predicated region
    $region38: #{color_model_forward.7} parent=1 // pred_check
      _
    $region39: #{color_model_forward.7} parent=1 // pred_check_branch
      %378 = sbr.rel (0) target = $region41
    $region40: #{color_model_forward.7} parent=1 // pred_region
      %379 = dma.done [#allocation3], 32
    $region41: #{color_model_forward.7} parent=1 // pred_fallthru
      _
    %380 = vsyncpa [#allocation3], 1

</llo_original>
